<compile_context>
chip_gen: v5e
topology: v5e:2x2
jax: 0.10.0
libtpu: 0.0.40
codegen_flags: <defaults>
</compile_context>

<pallas_src>
import functools

import jax
import jax.numpy as jnp
from jax.experimental import pallas as pl
from jax.experimental.pallas import tpu as pltpu


def _relu(x):
    return jnp.maximum(x, 0.0)


def _pack_rows(entries):
    """Pack (name, 2-D array) pairs into one f32 slab [R_total, lanes].

    Every entry is zero-padded to the slab lane width and to a multiple of 8
    rows so all in-kernel slices start at sublane-aligned offsets.  Returns the
    slab and {name: (row_offset, rows, cols)} for static in-kernel slicing.
    """
    mats = [(n, jnp.asarray(m, jnp.float32)) for n, m in entries]
    lanes = max(int(m.shape[1]) for _, m in mats)
    blocks, offs, r = [], {}, 0
    for name, m in mats:
        R, C = int(m.shape[0]), int(m.shape[1])
        Rp = R + (-R) % 8
        offs[name] = (r, R, C)
        blocks.append(jnp.pad(m, ((0, Rp - R), (0, lanes - C))))
        r += Rp
    return jnp.concatenate(blocks, axis=0), offs


# ---------------------------------------------------------------------------
# Fused kernel:
#   per-(t,b) row:  GCNConv(1,F1)+ReLU -> GCNConv(F1,F2)+ReLU
#                   -> graph_fc_user+ReLU
#                   infect MLP 25->128->128->64->I (ReLU each)
#                   temp  MLP 13->64->I (ReLU each)
#                   concat_fc(3I -> I)+ReLU
#   then:           LSTM (1 layer, PyTorch i,f,g,o order) over T steps
#                   + ReLU (lstm_act1) + lstm_fc + ReLU (lstm_act2)
# ---------------------------------------------------------------------------
def fused_kernel(dims, woff, boff, coff,
                 graph_ref, vec_ref, hc0_ref, w_ref, b_ref, c_ref,
                 out_ref, zbuf_ref):
    B, T, N, _F1, F2, I, H = dims
    f32 = jnp.float32

    def W(name):                       # weight-slab lookup (static ref slice)
        r, R, C = woff[name]
        return w_ref[r:r + R, :C]

    def Bias(name):                    # bias-slab lookup -> [1, C]
        r, _R, C = boff[name]
        return b_ref[r:r + 1, :C]

    def Cst(name):                     # structured-constant slab lookup
        r, R, C = coff[name]
        return c_ref[r:r + R, :C]

    # packed graph inputs: row r = (t*B + b)*N + n  (time-major tb, node-minor)
    adj_rows = graph_ref[:, :N]        # [TB*N, N]  row of A_hat for (tb, n)
    gx_rep = graph_ref[:, N:2 * N]     # [TB*N, N]  node signal of owning tb

    # --- GCNConv(1, F1) + ReLU : relu((A_hat x) * W1 + b1), x has 1 feature --
    # A_hat x done on the VPU/XLU (row-wise dot) -> no 1-lane MXU pushes.
    ax = jnp.sum(adj_rows * gx_rep, axis=-1, keepdims=True)          # [TB*N, 1]
    h1 = _relu(ax * Bias('gw1') + Bias('gb1'))                       # [TB*N, F1]

    # --- GCNConv(F1, F2) + ReLU : one block-diagonal aggregation matmul -----
    hw = jnp.dot(h1, W('gw2'), preferred_element_type=f32)           # [TB*N, F2]
    h2 = _relu(jnp.dot(Cst('A_bd'), hw, preferred_element_type=f32)
               + Bias('gb2'))                                        # [TB*N, F2]

    # --- graph_fc_user: single dense [TB, N*F2] x [N*F2, I] contraction -----
    # In-kernel [TB*N, F2] -> [TB, N*F2] flatten built from safe primitives:
    #   Etile replicates the F2 features into every node block,
    #   Mnode keeps only the owning node's block,
    #   S_sum reduces the N rows of each (t,b) block.
    h2_rep = jnp.dot(h2, Cst('Etile'), preferred_element_type=f32)   # [TB*N, N*F2]
    h2_flat = jnp.dot(Cst('S_sum'), h2_rep * Cst('Mnode'),
                      preferred_element_type=f32)                    # [TB, N*F2]
    gfeat = _relu(jnp.dot(h2_flat, W('gfcw'), preferred_element_type=f32)
                  + Bias('gfcb'))                                    # [TB, I]

    # --- infect MLP: 25 -> 128 -> 128 -> 64 -> I (ReLU each) ----------------
    inf = vec_ref[:, :25]
    inf = _relu(jnp.dot(inf, W('iw1'), preferred_element_type=f32) + Bias('ib1'))
    inf = _relu(jnp.dot(inf, W('iw2'), preferred_element_type=f32) + Bias('ib2'))
    inf = _relu(jnp.dot(inf, W('iw3'), preferred_element_type=f32) + Bias('ib3'))
    inf = _relu(jnp.dot(inf, W('iw4'), preferred_element_type=f32) + Bias('ib4'))

    # --- temp MLP: 13 -> 64 -> I (ReLU each) --------------------------------
    tmp = vec_ref[:, 25:38]
    tmp = _relu(jnp.dot(tmp, W('tw1'), preferred_element_type=f32) + Bias('tb1'))
    tmp = _relu(jnp.dot(tmp, W('tw2'), preferred_element_type=f32) + Bias('tb2'))

    # --- concat_fc: cat([g, i, t]) @ W == g@Wg + i@Wi + t@Wt (no lane concat)
    feat = _relu(jnp.dot(gfeat, W('cwg'), preferred_element_type=f32)
                 + jnp.dot(inf, W('cwi'), preferred_element_type=f32)
                 + jnp.dot(tmp, W('cwt'), preferred_element_type=f32)
                 + Bias('cb'))                          # [TB, I], time-major rows

    # --- LSTM: hoisted fused [I,4H] input projection + one fused [H,4H] -----
    # recurrent matmul per step (PyTorch i,f,g,o gate order, bias = b_ih+b_hh).
    xg = jnp.dot(feat, W('wih'), preferred_element_type=f32) + Bias('b_lstm')
    whh = W('whh')                                      # [H, 4H]
    h = hc0_ref[0]                                      # [B, H]
    c = hc0_ref[1]                                      # [B, H]
    for t in range(T):                                  # static unrolled recurrence
        z = xg[t * B:(t + 1) * B, :] + jnp.dot(h, whh,
                                               preferred_element_type=f32)
        zbuf_ref[0:B, :] = z                            # VMEM bounce: gate
        i_g = jax.nn.sigmoid(zbuf_ref[0:B, 0:H])        # extraction via plain
        f_g = jax.nn.sigmoid(zbuf_ref[0:B, H:2 * H])    # offset loads (safe on
        g_g = jnp.tanh(zbuf_ref[0:B, 2 * H:3 * H])      # any lane offset)
        o_g = jax.nn.sigmoid(zbuf_ref[0:B, 3 * H:4 * H])
        c = f_g * c + i_g * g_g
        h = o_g * jnp.tanh(c)

    h = _relu(h)                                        # lstm_act1
    out_ref[...] = _relu(jnp.dot(h, W('fcw'), preferred_element_type=f32)
                         + Bias('fcb'))                 # lstm_fc + lstm_act2


# ---------------------------------------------------------------------------
# Wrapper
# ---------------------------------------------------------------------------
def gcn_lstm_flu_forward(params, adj, gx, infect, temp, h0, c0, *,
                         B, T, N, F1, F2, I, H,
                         data_normalize=False, min_max_values=None):
    """adj/gx/infect/temp have their leading dim flattened TIME-MAJOR:
    row r = t*B + b  (t = timestep, b = batch element)."""
    f32 = jnp.float32
    TB, TBN, NF2 = T * B, T * B * N, N * F2

    # ---- data re-layouts (plain XLA glue, cheap) ---------------------------
    adj = adj.astype(f32)
    adj_rows = adj.reshape(TBN, N)                       # row (tb,n) -> A[tb,n,:]
    gx_rep = jnp.repeat(gx.astype(f32), N, axis=0)       # row (tb,n) -> x[tb,:]
    graph_in = jnp.concatenate([adj_rows, gx_rep], axis=1)           # [TBN, 2N]
    vec_in = jnp.concatenate([infect.astype(f32), temp.astype(f32)], axis=1)
    hc0 = jnp.stack([h0.astype(f32), c0.astype(f32)])                # [2, B, H]

    # ---- structured constants for the graph pipeline -----------------------
    eye_tb = jnp.eye(TB, dtype=f32)
    eye_n = jnp.eye(N, dtype=f32)
    eye_f2 = jnp.eye(F2, dtype=f32)
    a_bd = (eye_tb[:, None, :, None] * adj[:, :, None, :]).reshape(TBN, TBN)
    mnode = jnp.tile(jnp.repeat(eye_n, F2, axis=1), (TB, 1))         # [TBN, N*F2]
    s_sum = jnp.repeat(eye_tb, N, axis=1)                            # [TB, TBN]
    etile = jnp.tile(eye_f2, (1, N))                                 # [F2, N*F2]
    c_slab, coff = _pack_rows(
        [('A_bd', a_bd), ('Mnode', mnode), ('S_sum', s_sum), ('Etile', etile)])

    # ---- pack the many small weights / biases into two slabs ---------------
    cw = params['cw']
    w_slab, woff = _pack_rows(
        [('gw2', params['gw2']),
         ('gfcw', params['gfcw'].reshape(NF2, I)),
         ('iw1', params['iw1']), ('iw2', params['iw2']),
         ('iw3', params['iw3']), ('iw4', params['iw4']),
         ('tw1', params['tw1']), ('tw2', params['tw2']),
         ('cwg', cw[:I]), ('cwi', cw[I:2 * I]), ('cwt', cw[2 * I:]),
         ('wih', params['wih']), ('whh', params['whh']),
         ('fcw', params['fcw'])])
    b_slab, boff = _pack_rows(
        [('gw1', params['gw1']), ('gb1', params['gb1']), ('gb2', params['gb2']),
         ('gfcb', params['gfcb']),
         ('ib1', params['ib1']), ('ib2', params['ib2']),
         ('ib3', params['ib3']), ('ib4', params['ib4']),
         ('tb1', params['tb1']), ('tb2', params['tb2']),
         ('cb', params['cb']), ('b_lstm', params['b_lstm']),
         ('fcb', params['fcb'])])

    vmem = pl.BlockSpec(memory_space=pltpu.MemorySpace.VMEM)
    dims = (B, T, N, F1, F2, I, H)
    output = pl.pallas_call(
        functools.partial(fused_kernel, dims, woff, boff, coff),
        out_shape=jax.ShapeDtypeStruct((B, 2 * N), f32),
        in_specs=[vmem] * 6,
        out_specs=vmem,
        scratch_shapes=[pltpu.VMEM((8, 4 * H), f32)],
    )(graph_in, vec_in, hc0, w_slab, b_slab, c_slab)

    # TODO(synk): temp_all_concat / all_concat branches are not exercised
    # (flags False in the default flu config); only the main path is built.

    # final split exactly as in the PyTorch forward (flatten, then slice)
    flat = output.reshape(-1)
    user_pred = flat[:N * B].reshape(B, -1)
    infect_pred = flat[N * B:].reshape(B, -1)
    if data_normalize:
        lo = min_max_values[0] + min_max_values[2]
        hi = min_max_values[1] + min_max_values[3]
        user_pred = user_pred * (hi - lo) + lo          # denormalize
    return user_pred, infect_pred


def init_params(key, N, F1, F2, I, H):
    ks = jax.random.split(key, 25)

    def w(k, shape):
        return jax.random.normal(k, shape, jnp.float32) * 0.1

    return {
        # GCNConv(1, F1), GCNConv(F1, F2)
        'gw1': w(ks[0], (1, F1)), 'gb1': w(ks[1], (1, F1)),
        'gw2': w(ks[2], (F1, F2)), 'gb2': w(ks[3], (1, F2)),
        # graph_fc_user: Linear(N*F2 -> I), stored as [N, F2, I]
        'gfcw': w(ks[4], (N, F2, I)), 'gfcb': w(ks[5], (1, I)),
        # infect MLP
        'iw1': w(ks[6], (25, 128)), 'ib1': w(ks[7], (1, 128)),
        'iw2': w(ks[8], (128, 128)), 'ib2': w(ks[9], (1, 128)),
        'iw3': w(ks[10], (128, 64)), 'ib3': w(ks[11], (1, 64)),
        'iw4': w(ks[12], (64, I)), 'ib4': w(ks[13], (1, I)),
        # temp MLP
        'tw1': w(ks[14], (13, 64)), 'tb1': w(ks[15], (1, 64)),
        'tw2': w(ks[16], (64, I)), 'tb2': w(ks[17], (1, I)),
        # concat_fc
        'cw': w(ks[18], (3 * I, I)), 'cb': w(ks[19], (1, I)),
        # LSTM (num_layers=1): W_ih [I,4H], W_hh [H,4H], bias = b_ih + b_hh
        'wih': w(ks[20], (I, 4 * H)), 'whh': w(ks[21], (H, 4 * H)),
        'b_lstm': w(ks[22], (1, 4 * H)),
        # lstm_fc: Linear(H -> 2N)
        'fcw': w(ks[23], (H, 2 * N)), 'fcb': w(ks[24], (1, 2 * N)),
    }


# ---------------------------------------------------------------------------
# Pure-JAX reference (same math, plain XLA) for a sanity check.
# ---------------------------------------------------------------------------
def reference_forward(params, adj, gx, infect, temp, h0, c0, *,
                      B, T, N, F1, F2, I, H):
    relu = jax.nn.relu
    ax = jnp.einsum('bnm,bm->bn', adj, gx)[..., None]                # [TB,N,1]
    h1 = relu(ax * params['gw1'][None] + params['gb1'][None])
    hw = jnp.einsum('bnf,fg->bng', h1, params['gw2'])
    h2 = relu(jnp.einsum('bnm,bmf->bnf', adj, hw) + params['gb2'][None])
    gfeat = relu(h2.reshape(T * B, N * F2) @ params['gfcw'].reshape(N * F2, I)
                 + params['gfcb'])
    inf = relu(infect @ params['iw1'] + params['ib1'])
    inf = relu(inf @ params['iw2'] + params['ib2'])
    inf = relu(inf @ params['iw3'] + params['ib3'])
    inf = relu(inf @ params['iw4'] + params['ib4'])
    tmp = relu(temp @ params['tw1'] + params['tb1'])
    tmp = relu(tmp @ params['tw2'] + params['tb2'])
    feat = relu(jnp.concatenate([gfeat, inf, tmp], axis=1) @ params['cw']
                + params['cb'])                                      # [TB, I]
    wih, whh, b = params['wih'], params['whh'], params['b_lstm']
    h, c = h0, c0
    for t in range(T):
        z = feat[t * B:(t + 1) * B] @ wih + h @ whh + b
        i_g = jax.nn.sigmoid(z[:, 0:H])
        f_g = jax.nn.sigmoid(z[:, H:2 * H])
        g_g = jnp.tanh(z[:, 2 * H:3 * H])
        o_g = jax.nn.sigmoid(z[:, 3 * H:4 * H])
        c = f_g * c + i_g * g_g
        h = o_g * jnp.tanh(c)
    out = relu(relu(h) @ params['fcw'] + params['fcb'])              # [B, 2N]
    flat = out.reshape(-1)
    return flat[:N * B].reshape(B, -1), flat[N * B:].reshape(B, -1)


if __name__ == "__main__":
    # small config consistent with the module's args
    B, T, N = 2, 8, 16          # batch_size, lstm_sequence_length, num_dong
    F1, F2 = 10, 10             # GCN feature dims (graph_conv_feature_dim_user=10)
    I, H = 32, 32               # lstm_input_size, lstm_hidden_size

    key = jax.random.PRNGKey(0)
    kp, ka, kx, ki, kt, kh, kc = jax.random.split(key, 7)
    params = init_params(kp, N, F1, F2, I, H)

    TB = T * B                  # time-major flattening: row r = t*B + b
    # dense symmetric-normalized adjacency with self loops (GCNConv normalization)
    a = jax.random.uniform(ka, (TB, N, N), jnp.float32)
    a = 0.5 * (a + jnp.transpose(a, (0, 2, 1)))
    a_hat = a + jnp.eye(N, dtype=jnp.float32)[None]
    deg = jnp.sum(a_hat, axis=-1)
    dinv = 1.0 / jnp.sqrt(deg)
    adj = dinv[:, :, None] * a_hat * dinv[:, None, :]

    gx = jax.random.normal(kx, (TB, N), jnp.float32)        # user-graph node signal
    infect = jax.random.normal(ki, (TB, 25), jnp.float32)   # infect_list[i]
    temp = jax.random.normal(kt, (TB, 13), jnp.float32)     # temp_sig_list[i]
    # deterministic stand-in for the torch.randn h_0 / c_0 of the last batch iter
    h0 = jax.random.normal(kh, (B, H), jnp.float32)
    c0 = jax.random.normal(kc, (B, H), jnp.float32)

    user_pred, infect_pred = gcn_lstm_flu_forward(
        params, adj, gx, infect, temp, h0, c0,
        B=B, T=T, N=N, F1=F1, F2=F2, I=I, H=H, data_normalize=False)
    jax.block_until_ready((user_pred, infect_pred))
    assert user_pred.shape == (B, N) and infect_pred.shape == (B, N)

    # sanity check against the plain-JAX reference
    with jax.default_matmul_precision("float32"):
        ref_u, ref_i = reference_forward(
            params, adj, gx, infect, temp, h0, c0,
            B=B, T=T, N=N, F1=F1, F2=F2, I=I, H=H)
    err = max(float(jnp.max(jnp.abs(user_pred - ref_u))),
              float(jnp.max(jnp.abs(infect_pred - ref_i))))
    assert err < 5e-2, f"kernel/reference mismatch: {err}"
    print("KERNEL_OK")
</pallas_src>

<mosaic_0001>
module attributes {stable_mosaic.version = 11 : i64} {
  func.func @fused_kernel(%arg0: memref<256x32xf32, #tpu.memory_space<vmem>>, %arg1: memref<16x38xf32, #tpu.memory_space<vmem>>, %arg2: memref<2x2x32xf32, #tpu.memory_space<vmem>>, %arg3: memref<800x128xf32, #tpu.memory_space<vmem>>, %arg4: memref<104x128xf32, #tpu.memory_space<vmem>>, %arg5: memref<544x256xf32, #tpu.memory_space<vmem>>, %arg6: memref<2x32xf32, #tpu.memory_space<vmem>>, %arg7: memref<8x128xf32, #tpu.memory_space<vmem>>) attributes {dimension_semantics = [], scalar_prefetch = 0 : i64, scratch_operands = 1 : i64, tpu.core_type = #tpu.core_type<tc>} {
    %c0 = arith.constant 0 : index
    %c0_0 = arith.constant 0 : index
    %0 = vector.load %arg0[%c0, %c0_0] : memref<256x32xf32, #tpu.memory_space<vmem>>, vector<256x16xf32>
    %c0_1 = arith.constant 0 : index
    %c16 = arith.constant 16 : index
    %1 = vector.load %arg0[%c0_1, %c16] : memref<256x32xf32, #tpu.memory_space<vmem>>, vector<256x16xf32>
    %2 = arith.mulf %0, %1 : vector<256x16xf32>
    %cst = arith.constant dense<0.000000e+00> : vector<256xf32>
    %3 = vector.multi_reduction <add>, %2, %cst [1] : vector<256x16xf32> to vector<256xf32>
    %4 = vector.shape_cast %3 : vector<256xf32> to vector<256x1xf32>
    %c0_2 = arith.constant 0 : index
    %c0_3 = arith.constant 0 : index
    %5 = vector.load %arg4[%c0_2, %c0_3] : memref<104x128xf32, #tpu.memory_space<vmem>>, vector<1x10xf32>
    %6 = vector.broadcast %4 : vector<256x1xf32> to vector<256x10xf32>
    %7 = vector.broadcast %5 : vector<1x10xf32> to vector<256x10xf32>
    %8 = arith.mulf %6, %7 : vector<256x10xf32>
    %c8 = arith.constant 8 : index
    %c0_4 = arith.constant 0 : index
    %9 = vector.load %arg4[%c8, %c0_4] : memref<104x128xf32, #tpu.memory_space<vmem>>, vector<1x10xf32>
    %10 = vector.broadcast %9 : vector<1x10xf32> to vector<256x10xf32>
    %11 = arith.addf %8, %10 : vector<256x10xf32>
    %cst_5 = arith.constant 0.000000e+00 : f32
    %12 = vector.broadcast %cst_5 : f32 to vector<256x10xf32>
    %13 = arith.maximumf %11, %12 : vector<256x10xf32>
    %c0_6 = arith.constant 0 : index
    %c0_7 = arith.constant 0 : index
    %14 = vector.load %arg3[%c0_6, %c0_7] : memref<800x128xf32, #tpu.memory_space<vmem>>, vector<10x10xf32>
    %cst_8 = arith.constant dense<0.000000e+00> : vector<256x10xf32>
    %15 = tpu.matmul %13, %14, %cst_8 {dimension_numbers = #tpu.dot_dimension_numbers<[1], [0], [0], [1], [0, 0, 1, 1], [], []>} : vector<256x10xf32>, vector<10x10xf32>, vector<256x10xf32> -> vector<256x10xf32>
    %c0_9 = arith.constant 0 : index
    %c0_10 = arith.constant 0 : index
    %16 = vector.load %arg5[%c0_9, %c0_10] : memref<544x256xf32, #tpu.memory_space<vmem>>, vector<256x256xf32>
    %cst_11 = arith.constant dense<0.000000e+00> : vector<256x10xf32>
    %17 = tpu.matmul %16, %15, %cst_11 {dimension_numbers = #tpu.dot_dimension_numbers<[1], [0], [0], [1], [0, 0, 1, 1], [], []>} : vector<256x256xf32>, vector<256x10xf32>, vector<256x10xf32> -> vector<256x10xf32>
    %c16_12 = arith.constant 16 : index
    %c0_13 = arith.constant 0 : index
    %18 = vector.load %arg4[%c16_12, %c0_13] : memref<104x128xf32, #tpu.memory_space<vmem>>, vector<1x10xf32>
    %19 = vector.broadcast %18 : vector<1x10xf32> to vector<256x10xf32>
    %20 = arith.addf %17, %19 : vector<256x10xf32>
    %cst_14 = arith.constant 0.000000e+00 : f32
    %21 = vector.broadcast %cst_14 : f32 to vector<256x10xf32>
    %22 = arith.maximumf %20, %21 : vector<256x10xf32>
    %c528 = arith.constant 528 : index
    %c0_15 = arith.constant 0 : index
    %23 = vector.load %arg5[%c528, %c0_15] : memref<544x256xf32, #tpu.memory_space<vmem>>, vector<10x160xf32>
    %cst_16 = arith.constant dense<0.000000e+00> : vector<256x160xf32>
    %24 = tpu.matmul %22, %23, %cst_16 {dimension_numbers = #tpu.dot_dimension_numbers<[1], [0], [0], [1], [0, 0, 1, 1], [], []>} : vector<256x10xf32>, vector<10x160xf32>, vector<256x160xf32> -> vector<256x160xf32>
    %c512 = arith.constant 512 : index
    %c0_17 = arith.constant 0 : index
    %25 = vector.load %arg5[%c512, %c0_17] : memref<544x256xf32, #tpu.memory_space<vmem>>, vector<16x256xf32>
    %c256 = arith.constant 256 : index
    %c0_18 = arith.constant 0 : index
    %26 = vector.load %arg5[%c256, %c0_18] : memref<544x256xf32, #tpu.memory_space<vmem>>, vector<256x160xf32>
    %27 = arith.mulf %24, %26 : vector<256x160xf32>
    %cst_19 = arith.constant dense<0.000000e+00> : vector<16x160xf32>
    %28 = tpu.matmul %25, %27, %cst_19 {dimension_numbers = #tpu.dot_dimension_numbers<[1], [0], [0], [1], [0, 0, 1, 1], [], []>} : vector<16x256xf32>, vector<256x160xf32>, vector<16x160xf32> -> vector<16x160xf32>
    %c16_20 = arith.constant 16 : index
    %c0_21 = arith.constant 0 : index
    %29 = vector.load %arg3[%c16_20, %c0_21] : memref<800x128xf32, #tpu.memory_space<vmem>>, vector<160x32xf32>
    %cst_22 = arith.constant dense<0.000000e+00> : vector<16x32xf32>
    %30 = tpu.matmul %28, %29, %cst_22 {dimension_numbers = #tpu.dot_dimension_numbers<[1], [0], [0], [1], [0, 0, 1, 1], [], []>} : vector<16x160xf32>, vector<160x32xf32>, vector<16x32xf32> -> vector<16x32xf32>
    %c24 = arith.constant 24 : index
    %c0_23 = arith.constant 0 : index
    %31 = vector.load %arg4[%c24, %c0_23] : memref<104x128xf32, #tpu.memory_space<vmem>>, vector<1x32xf32>
    %32 = vector.broadcast %31 : vector<1x32xf32> to vector<16x32xf32>
    %33 = arith.addf %30, %32 : vector<16x32xf32>
    %cst_24 = arith.constant 0.000000e+00 : f32
    %34 = vector.broadcast %cst_24 : f32 to vector<16x32xf32>
    %35 = arith.maximumf %33, %34 : vector<16x32xf32>
    %c0_25 = arith.constant 0 : index
    %c0_26 = arith.constant 0 : index
    %36 = vector.load %arg1[%c0_25, %c0_26] : memref<16x38xf32, #tpu.memory_space<vmem>>, vector<16x25xf32>
    %c176 = arith.constant 176 : index
    %c0_27 = arith.constant 0 : index
    %37 = vector.load %arg3[%c176, %c0_27] : memref<800x128xf32, #tpu.memory_space<vmem>>, vector<25x128xf32>
    %cst_28 = arith.constant dense<0.000000e+00> : vector<16x128xf32>
    %38 = tpu.matmul %36, %37, %cst_28 {dimension_numbers = #tpu.dot_dimension_numbers<[1], [0], [0], [1], [0, 0, 1, 1], [], []>} : vector<16x25xf32>, vector<25x128xf32>, vector<16x128xf32> -> vector<16x128xf32>
    %c32 = arith.constant 32 : index
    %c0_29 = arith.constant 0 : index
    %39 = vector.load %arg4[%c32, %c0_29] : memref<104x128xf32, #tpu.memory_space<vmem>>, vector<1x128xf32>
    %40 = vector.broadcast %39 : vector<1x128xf32> to vector<16x128xf32>
    %41 = arith.addf %38, %40 : vector<16x128xf32>
    %cst_30 = arith.constant 0.000000e+00 : f32
    %42 = vector.broadcast %cst_30 : f32 to vector<16x128xf32>
    %43 = arith.maximumf %41, %42 : vector<16x128xf32>
    %c208 = arith.constant 208 : index
    %c0_31 = arith.constant 0 : index
    %44 = vector.load %arg3[%c208, %c0_31] : memref<800x128xf32, #tpu.memory_space<vmem>>, vector<128x128xf32>
    %cst_32 = arith.constant dense<0.000000e+00> : vector<16x128xf32>
    %45 = tpu.matmul %43, %44, %cst_32 {dimension_numbers = #tpu.dot_dimension_numbers<[1], [0], [0], [1], [0, 0, 1, 1], [], []>} : vector<16x128xf32>, vector<128x128xf32>, vector<16x128xf32> -> vector<16x128xf32>
    %c40 = arith.constant 40 : index
    %c0_33 = arith.constant 0 : index
    %46 = vector.load %arg4[%c40, %c0_33] : memref<104x128xf32, #tpu.memory_space<vmem>>, vector<1x128xf32>
    %47 = vector.broadcast %46 : vector<1x128xf32> to vector<16x128xf32>
    %48 = arith.addf %45, %47 : vector<16x128xf32>
    %cst_34 = arith.constant 0.000000e+00 : f32
    %49 = vector.broadcast %cst_34 : f32 to vector<16x128xf32>
    %50 = arith.maximumf %48, %49 : vector<16x128xf32>
    %c336 = arith.constant 336 : index
    %c0_35 = arith.constant 0 : index
    %51 = vector.load %arg3[%c336, %c0_35] : memref<800x128xf32, #tpu.memory_space<vmem>>, vector<128x64xf32>
    %cst_36 = arith.constant dense<0.000000e+00> : vector<16x64xf32>
    %52 = tpu.matmul %50, %51, %cst_36 {dimension_numbers = #tpu.dot_dimension_numbers<[1], [0], [0], [1], [0, 0, 1, 1], [], []>} : vector<16x128xf32>, vector<128x64xf32>, vector<16x64xf32> -> vector<16x64xf32>
    %c48 = arith.constant 48 : index
    %c0_37 = arith.constant 0 : index
    %53 = vector.load %arg4[%c48, %c0_37] : memref<104x128xf32, #tpu.memory_space<vmem>>, vector<1x64xf32>
    %54 = vector.broadcast %53 : vector<1x64xf32> to vector<16x64xf32>
    %55 = arith.addf %52, %54 : vector<16x64xf32>
    %cst_38 = arith.constant 0.000000e+00 : f32
    %56 = vector.broadcast %cst_38 : f32 to vector<16x64xf32>
    %57 = arith.maximumf %55, %56 : vector<16x64xf32>
    %c464 = arith.constant 464 : index
    %c0_39 = arith.constant 0 : index
    %58 = vector.load %arg3[%c464, %c0_39] : memref<800x128xf32, #tpu.memory_space<vmem>>, vector<64x32xf32>
    %cst_40 = arith.constant dense<0.000000e+00> : vector<16x32xf32>
    %59 = tpu.matmul %57, %58, %cst_40 {dimension_numbers = #tpu.dot_dimension_numbers<[1], [0], [0], [1], [0, 0, 1, 1], [], []>} : vector<16x64xf32>, vector<64x32xf32>, vector<16x32xf32> -> vector<16x32xf32>
    %c56 = arith.constant 56 : index
    %c0_41 = arith.constant 0 : index
    %60 = vector.load %arg4[%c56, %c0_41] : memref<104x128xf32, #tpu.memory_space<vmem>>, vector<1x32xf32>
    %61 = vector.broadcast %60 : vector<1x32xf32> to vector<16x32xf32>
    %62 = arith.addf %59, %61 : vector<16x32xf32>
    %cst_42 = arith.constant 0.000000e+00 : f32
    %63 = vector.broadcast %cst_42 : f32 to vector<16x32xf32>
    %64 = arith.maximumf %62, %63 : vector<16x32xf32>
    %c0_43 = arith.constant 0 : index
    %c25 = arith.constant 25 : index
    %65 = vector.load %arg1[%c0_43, %c25] : memref<16x38xf32, #tpu.memory_space<vmem>>, vector<16x13xf32>
    %c528_44 = arith.constant 528 : index
    %c0_45 = arith.constant 0 : index
    %66 = vector.load %arg3[%c528_44, %c0_45] : memref<800x128xf32, #tpu.memory_space<vmem>>, vector<13x64xf32>
    %cst_46 = arith.constant dense<0.000000e+00> : vector<16x64xf32>
    %67 = tpu.matmul %65, %66, %cst_46 {dimension_numbers = #tpu.dot_dimension_numbers<[1], [0], [0], [1], [0, 0, 1, 1], [], []>} : vector<16x13xf32>, vector<13x64xf32>, vector<16x64xf32> -> vector<16x64xf32>
    %c64 = arith.constant 64 : index
    %c0_47 = arith.constant 0 : index
    %68 = vector.load %arg4[%c64, %c0_47] : memref<104x128xf32, #tpu.memory_space<vmem>>, vector<1x64xf32>
    %69 = vector.broadcast %68 : vector<1x64xf32> to vector<16x64xf32>
    %70 = arith.addf %67, %69 : vector<16x64xf32>
    %cst_48 = arith.constant 0.000000e+00 : f32
    %71 = vector.broadcast %cst_48 : f32 to vector<16x64xf32>
    %72 = arith.maximumf %70, %71 : vector<16x64xf32>
    %c544 = arith.constant 544 : index
    %c0_49 = arith.constant 0 : index
    %73 = vector.load %arg3[%c544, %c0_49] : memref<800x128xf32, #tpu.memory_space<vmem>>, vector<64x32xf32>
    %cst_50 = arith.constant dense<0.000000e+00> : vector<16x32xf32>
    %74 = tpu.matmul %72, %73, %cst_50 {dimension_numbers = #tpu.dot_dimension_numbers<[1], [0], [0], [1], [0, 0, 1, 1], [], []>} : vector<16x64xf32>, vector<64x32xf32>, vector<16x32xf32> -> vector<16x32xf32>
    %c72 = arith.constant 72 : index
    %c0_51 = arith.constant 0 : index
    %75 = vector.load %arg4[%c72, %c0_51] : memref<104x128xf32, #tpu.memory_space<vmem>>, vector<1x32xf32>
    %76 = vector.broadcast %75 : vector<1x32xf32> to vector<16x32xf32>
    %77 = arith.addf %74, %76 : vector<16x32xf32>
    %cst_52 = arith.constant 0.000000e+00 : f32
    %78 = vector.broadcast %cst_52 : f32 to vector<16x32xf32>
    %79 = arith.maximumf %77, %78 : vector<16x32xf32>
    %c608 = arith.constant 608 : index
    %c0_53 = arith.constant 0 : index
    %80 = vector.load %arg3[%c608, %c0_53] : memref<800x128xf32, #tpu.memory_space<vmem>>, vector<32x32xf32>
    %cst_54 = arith.constant dense<0.000000e+00> : vector<16x32xf32>
    %81 = tpu.matmul %35, %80, %cst_54 {dimension_numbers = #tpu.dot_dimension_numbers<[1], [0], [0], [1], [0, 0, 1, 1], [], []>} : vector<16x32xf32>, vector<32x32xf32>, vector<16x32xf32> -> vector<16x32xf32>
    %c640 = arith.constant 640 : index
    %c0_55 = arith.constant 0 : index
    %82 = vector.load %arg3[%c640, %c0_55] : memref<800x128xf32, #tpu.memory_space<vmem>>, vector<32x32xf32>
    %cst_56 = arith.constant dense<0.000000e+00> : vector<16x32xf32>
    %83 = tpu.matmul %64, %82, %cst_56 {dimension_numbers = #tpu.dot_dimension_numbers<[1], [0], [0], [1], [0, 0, 1, 1], [], []>} : vector<16x32xf32>, vector<32x32xf32>, vector<16x32xf32> -> vector<16x32xf32>
    %84 = arith.addf %81, %83 : vector<16x32xf32>
    %c672 = arith.constant 672 : index
    %c0_57 = arith.constant 0 : index
    %85 = vector.load %arg3[%c672, %c0_57] : memref<800x128xf32, #tpu.memory_space<vmem>>, vector<32x32xf32>
    %cst_58 = arith.constant dense<0.000000e+00> : vector<16x32xf32>
    %86 = tpu.matmul %79, %85, %cst_58 {dimension_numbers = #tpu.dot_dimension_numbers<[1], [0], [0], [1], [0, 0, 1, 1], [], []>} : vector<16x32xf32>, vector<32x32xf32>, vector<16x32xf32> -> vector<16x32xf32>
    %87 = arith.addf %84, %86 : vector<16x32xf32>
    %c80 = arith.constant 80 : index
    %c0_59 = arith.constant 0 : index
    %88 = vector.load %arg4[%c80, %c0_59] : memref<104x128xf32, #tpu.memory_space<vmem>>, vector<1x32xf32>
    %89 = vector.broadcast %88 : vector<1x32xf32> to vector<16x32xf32>
    %90 = arith.addf %87, %89 : vector<16x32xf32>
    %cst_60 = arith.constant 0.000000e+00 : f32
    %91 = vector.broadcast %cst_60 : f32 to vector<16x32xf32>
    %92 = arith.maximumf %90, %91 : vector<16x32xf32>
    %c704 = arith.constant 704 : index
    %c0_61 = arith.constant 0 : index
    %93 = vector.load %arg3[%c704, %c0_61] : memref<800x128xf32, #tpu.memory_space<vmem>>, vector<32x128xf32>
    %cst_62 = arith.constant dense<0.000000e+00> : vector<16x128xf32>
    %94 = tpu.matmul %92, %93, %cst_62 {dimension_numbers = #tpu.dot_dimension_numbers<[1], [0], [0], [1], [0, 0, 1, 1], [], []>} : vector<16x32xf32>, vector<32x128xf32>, vector<16x128xf32> -> vector<16x128xf32>
    %c88 = arith.constant 88 : index
    %c0_63 = arith.constant 0 : index
    %95 = vector.load %arg4[%c88, %c0_63] : memref<104x128xf32, #tpu.memory_space<vmem>>, vector<1x128xf32>
    %96 = vector.broadcast %95 : vector<1x128xf32> to vector<16x128xf32>
    %97 = arith.addf %94, %96 : vector<16x128xf32>
    %c736 = arith.constant 736 : index
    %c0_64 = arith.constant 0 : index
    %98 = vector.load %arg3[%c736, %c0_64] : memref<800x128xf32, #tpu.memory_space<vmem>>, vector<32x128xf32>
    %c0_65 = arith.constant 0 : index
    %c0_66 = arith.constant 0 : index
    %c0_67 = arith.constant 0 : index
    %99 = vector.load %arg2[%c0_65, %c0_66, %c0_67] : memref<2x2x32xf32, #tpu.memory_space<vmem>>, vector<1x2x32xf32>
    %100 = vector.shape_cast %99 : vector<1x2x32xf32> to vector<2x32xf32>
    %c1 = arith.constant 1 : index
    %c0_68 = arith.constant 0 : index
    %c0_69 = arith.constant 0 : index
    %101 = vector.load %arg2[%c1, %c0_68, %c0_69] : memref<2x2x32xf32, #tpu.memory_space<vmem>>, vector<1x2x32xf32>
    %102 = vector.shape_cast %101 : vector<1x2x32xf32> to vector<2x32xf32>
    %103 = vector.extract_strided_slice %97 {offsets = [0, 0], sizes = [2, 128], strides = [1, 1]} : vector<16x128xf32> to vector<2x128xf32>
    %cst_70 = arith.constant dense<0.000000e+00> : vector<2x128xf32>
    %104 = tpu.matmul %100, %98, %cst_70 {dimension_numbers = #tpu.dot_dimension_numbers<[1], [0], [0], [1], [0, 0, 1, 1], [], []>} : vector<2x32xf32>, vector<32x128xf32>, vector<2x128xf32> -> vector<2x128xf32>
    %105 = arith.addf %103, %104 : vector<2x128xf32>
    %c0_71 = arith.constant 0 : index
    %c0_72 = arith.constant 0 : index
    %106 = vector.load %arg7[%c0_71, %c0_72] : memref<8x128xf32, #tpu.memory_space<vmem>>, vector<2x128xf32>
    tpu.vector_store %arg7[%c0_71, %c0_72], %105 {strides = array<i32>} : memref<8x128xf32, #tpu.memory_space<vmem>>, vector<2x128xf32>,
    %c0_73 = arith.constant 0 : index
    %c0_74 = arith.constant 0 : index
    %107 = vector.load %arg7[%c0_73, %c0_74] : memref<8x128xf32, #tpu.memory_space<vmem>>, vector<2x32xf32>
    %108 = arith.negf %107 : vector<2x32xf32>
    %109 = math.exp %108 : vector<2x32xf32>
    %cst_75 = arith.constant 1.000000e+00 : f32
    %110 = vector.broadcast %cst_75 : f32 to vector<2x32xf32>
    %111 = arith.addf %110, %109 : vector<2x32xf32>
    %112 = arith.divf %110, %111 : vector<2x32xf32>
    %c0_76 = arith.constant 0 : index
    %c32_77 = arith.constant 32 : index
    %113 = vector.load %arg7[%c0_76, %c32_77] : memref<8x128xf32, #tpu.memory_space<vmem>>, vector<2x32xf32>
    %114 = arith.negf %113 : vector<2x32xf32>
    %115 = math.exp %114 : vector<2x32xf32>
    %cst_78 = arith.constant 1.000000e+00 : f32
    %116 = vector.broadcast %cst_78 : f32 to vector<2x32xf32>
    %117 = arith.addf %116, %115 : vector<2x32xf32>
    %118 = arith.divf %116, %117 : vector<2x32xf32>
    %c0_79 = arith.constant 0 : index
    %c64_80 = arith.constant 64 : index
    %119 = vector.load %arg7[%c0_79, %c64_80] : memref<8x128xf32, #tpu.memory_space<vmem>>, vector<2x32xf32>
    %120 = math.tanh %119 : vector<2x32xf32>
    %c0_81 = arith.constant 0 : index
    %c96 = arith.constant 96 : index
    %121 = vector.load %arg7[%c0_81, %c96] : memref<8x128xf32, #tpu.memory_space<vmem>>, vector<2x32xf32>
    %122 = arith.negf %121 : vector<2x32xf32>
    %123 = math.exp %122 : vector<2x32xf32>
    %cst_82 = arith.constant 1.000000e+00 : f32
    %124 = vector.broadcast %cst_82 : f32 to vector<2x32xf32>
    %125 = arith.addf %124, %123 : vector<2x32xf32>
    %126 = arith.divf %124, %125 : vector<2x32xf32>
    %127 = arith.mulf %118, %102 : vector<2x32xf32>
    %128 = arith.mulf %112, %120 : vector<2x32xf32>
    %129 = arith.addf %127, %128 : vector<2x32xf32>
    %130 = math.tanh %129 : vector<2x32xf32>
    %131 = arith.mulf %126, %130 : vector<2x32xf32>
    %132 = vector.extract_strided_slice %97 {offsets = [2, 0], sizes = [2, 128], strides = [1, 1]} : vector<16x128xf32> to vector<2x128xf32>
    %cst_83 = arith.constant dense<0.000000e+00> : vector<2x128xf32>
    %133 = tpu.matmul %131, %98, %cst_83 {dimension_numbers = #tpu.dot_dimension_numbers<[1], [0], [0], [1], [0, 0, 1, 1], [], []>} : vector<2x32xf32>, vector<32x128xf32>, vector<2x128xf32> -> vector<2x128xf32>
    %134 = arith.addf %132, %133 : vector<2x128xf32>
    %c0_84 = arith.constant 0 : index
    %c0_85 = arith.constant 0 : index
    %135 = vector.load %arg7[%c0_84, %c0_85] : memref<8x128xf32, #tpu.memory_space<vmem>>, vector<2x128xf32>
    tpu.vector_store %arg7[%c0_84, %c0_85], %134 {strides = array<i32>} : memref<8x128xf32, #tpu.memory_space<vmem>>, vector<2x128xf32>,
    %c0_86 = arith.constant 0 : index
    %c0_87 = arith.constant 0 : index
    %136 = vector.load %arg7[%c0_86, %c0_87] : memref<8x128xf32, #tpu.memory_space<vmem>>, vector<2x32xf32>
    %137 = arith.negf %136 : vector<2x32xf32>
    %138 = math.exp %137 : vector<2x32xf32>
    %cst_88 = arith.constant 1.000000e+00 : f32
    %139 = vector.broadcast %cst_88 : f32 to vector<2x32xf32>
    %140 = arith.addf %139, %138 : vector<2x32xf32>
    %141 = arith.divf %139, %140 : vector<2x32xf32>
    %c0_89 = arith.constant 0 : index
    %c32_90 = arith.constant 32 : index
    %142 = vector.load %arg7[%c0_89, %c32_90] : memref<8x128xf32, #tpu.memory_space<vmem>>, vector<2x32xf32>
    %143 = arith.negf %142 : vector<2x32xf32>
    %144 = math.exp %143 : vector<2x32xf32>
    %cst_91 = arith.constant 1.000000e+00 : f32
    %145 = vector.broadcast %cst_91 : f32 to vector<2x32xf32>
    %146 = arith.addf %145, %144 : vector<2x32xf32>
    %147 = arith.divf %145, %146 : vector<2x32xf32>
    %c0_92 = arith.constant 0 : index
    %c64_93 = arith.constant 64 : index
    %148 = vector.load %arg7[%c0_92, %c64_93] : memref<8x128xf32, #tpu.memory_space<vmem>>, vector<2x32xf32>
    %149 = math.tanh %148 : vector<2x32xf32>
    %c0_94 = arith.constant 0 : index
    %c96_95 = arith.constant 96 : index
    %150 = vector.load %arg7[%c0_94, %c96_95] : memref<8x128xf32, #tpu.memory_space<vmem>>, vector<2x32xf32>
    %151 = arith.negf %150 : vector<2x32xf32>
    %152 = math.exp %151 : vector<2x32xf32>
    %cst_96 = arith.constant 1.000000e+00 : f32
    %153 = vector.broadcast %cst_96 : f32 to vector<2x32xf32>
    %154 = arith.addf %153, %152 : vector<2x32xf32>
    %155 = arith.divf %153, %154 : vector<2x32xf32>
    %156 = arith.mulf %147, %129 : vector<2x32xf32>
    %157 = arith.mulf %141, %149 : vector<2x32xf32>
    %158 = arith.addf %156, %157 : vector<2x32xf32>
    %159 = math.tanh %158 : vector<2x32xf32>
    %160 = arith.mulf %155, %159 : vector<2x32xf32>
    %161 = vector.extract_strided_slice %97 {offsets = [4, 0], sizes = [2, 128], strides = [1, 1]} : vector<16x128xf32> to vector<2x128xf32>
    %cst_97 = arith.constant dense<0.000000e+00> : vector<2x128xf32>
    %162 = tpu.matmul %160, %98, %cst_97 {dimension_numbers = #tpu.dot_dimension_numbers<[1], [0], [0], [1], [0, 0, 1, 1], [], []>} : vector<2x32xf32>, vector<32x128xf32>, vector<2x128xf32> -> vector<2x128xf32>
    %163 = arith.addf %161, %162 : vector<2x128xf32>
    %c0_98 = arith.constant 0 : index
    %c0_99 = arith.constant 0 : index
    %164 = vector.load %arg7[%c0_98, %c0_99] : memref<8x128xf32, #tpu.memory_space<vmem>>, vector<2x128xf32>
    tpu.vector_store %arg7[%c0_98, %c0_99], %163 {strides = array<i32>} : memref<8x128xf32, #tpu.memory_space<vmem>>, vector<2x128xf32>,
    %c0_100 = arith.constant 0 : index
    %c0_101 = arith.constant 0 : index
    %165 = vector.load %arg7[%c0_100, %c0_101] : memref<8x128xf32, #tpu.memory_space<vmem>>, vector<2x32xf32>
    %166 = arith.negf %165 : vector<2x32xf32>
    %167 = math.exp %166 : vector<2x32xf32>
    %cst_102 = arith.constant 1.000000e+00 : f32
    %168 = vector.broadcast %cst_102 : f32 to vector<2x32xf32>
    %169 = arith.addf %168, %167 : vector<2x32xf32>
    %170 = arith.divf %168, %169 : vector<2x32xf32>
    %c0_103 = arith.constant 0 : index
    %c32_104 = arith.constant 32 : index
    %171 = vector.load %arg7[%c0_103, %c32_104] : memref<8x128xf32, #tpu.memory_space<vmem>>, vector<2x32xf32>
    %172 = arith.negf %171 : vector<2x32xf32>
    %173 = math.exp %172 : vector<2x32xf32>
    %cst_105 = arith.constant 1.000000e+00 : f32
    %174 = vector.broadcast %cst_105 : f32 to vector<2x32xf32>
    %175 = arith.addf %174, %173 : vector<2x32xf32>
    %176 = arith.divf %174, %175 : vector<2x32xf32>
    %c0_106 = arith.constant 0 : index
    %c64_107 = arith.constant 64 : index
    %177 = vector.load %arg7[%c0_106, %c64_107] : memref<8x128xf32, #tpu.memory_space<vmem>>, vector<2x32xf32>
    %178 = math.tanh %177 : vector<2x32xf32>
    %c0_108 = arith.constant 0 : index
    %c96_109 = arith.constant 96 : index
    %179 = vector.load %arg7[%c0_108, %c96_109] : memref<8x128xf32, #tpu.memory_space<vmem>>, vector<2x32xf32>
    %180 = arith.negf %179 : vector<2x32xf32>
    %181 = math.exp %180 : vector<2x32xf32>
    %cst_110 = arith.constant 1.000000e+00 : f32
    %182 = vector.broadcast %cst_110 : f32 to vector<2x32xf32>
    %183 = arith.addf %182, %181 : vector<2x32xf32>
    %184 = arith.divf %182, %183 : vector<2x32xf32>
    %185 = arith.mulf %176, %158 : vector<2x32xf32>
    %186 = arith.mulf %170, %178 : vector<2x32xf32>
    %187 = arith.addf %185, %186 : vector<2x32xf32>
    %188 = math.tanh %187 : vector<2x32xf32>
    %189 = arith.mulf %184, %188 : vector<2x32xf32>
    %190 = vector.extract_strided_slice %97 {offsets = [6, 0], sizes = [2, 128], strides = [1, 1]} : vector<16x128xf32> to vector<2x128xf32>
    %cst_111 = arith.constant dense<0.000000e+00> : vector<2x128xf32>
    %191 = tpu.matmul %189, %98, %cst_111 {dimension_numbers = #tpu.dot_dimension_numbers<[1], [0], [0], [1], [0, 0, 1, 1], [], []>} : vector<2x32xf32>, vector<32x128xf32>, vector<2x128xf32> -> vector<2x128xf32>
    %192 = arith.addf %190, %191 : vector<2x128xf32>
    %c0_112 = arith.constant 0 : index
    %c0_113 = arith.constant 0 : index
    %193 = vector.load %arg7[%c0_112, %c0_113] : memref<8x128xf32, #tpu.memory_space<vmem>>, vector<2x128xf32>
    tpu.vector_store %arg7[%c0_112, %c0_113], %192 {strides = array<i32>} : memref<8x128xf32, #tpu.memory_space<vmem>>, vector<2x128xf32>,
    %c0_114 = arith.constant 0 : index
    %c0_115 = arith.constant 0 : index
    %194 = vector.load %arg7[%c0_114, %c0_115] : memref<8x128xf32, #tpu.memory_space<vmem>>, vector<2x32xf32>
    %195 = arith.negf %194 : vector<2x32xf32>
    %196 = math.exp %195 : vector<2x32xf32>
    %cst_116 = arith.constant 1.000000e+00 : f32
    %197 = vector.broadcast %cst_116 : f32 to vector<2x32xf32>
    %198 = arith.addf %197, %196 : vector<2x32xf32>
    %199 = arith.divf %197, %198 : vector<2x32xf32>
    %c0_117 = arith.constant 0 : index
    %c32_118 = arith.constant 32 : index
    %200 = vector.load %arg7[%c0_117, %c32_118] : memref<8x128xf32, #tpu.memory_space<vmem>>, vector<2x32xf32>
    %201 = arith.negf %200 : vector<2x32xf32>
    %202 = math.exp %201 : vector<2x32xf32>
    %cst_119 = arith.constant 1.000000e+00 : f32
    %203 = vector.broadcast %cst_119 : f32 to vector<2x32xf32>
    %204 = arith.addf %203, %202 : vector<2x32xf32>
    %205 = arith.divf %203, %204 : vector<2x32xf32>
    %c0_120 = arith.constant 0 : index
    %c64_121 = arith.constant 64 : index
    %206 = vector.load %arg7[%c0_120, %c64_121] : memref<8x128xf32, #tpu.memory_space<vmem>>, vector<2x32xf32>
    %207 = math.tanh %206 : vector<2x32xf32>
    %c0_122 = arith.constant 0 : index
    %c96_123 = arith.constant 96 : index
    %208 = vector.load %arg7[%c0_122, %c96_123] : memref<8x128xf32, #tpu.memory_space<vmem>>, vector<2x32xf32>
    %209 = arith.negf %208 : vector<2x32xf32>
    %210 = math.exp %209 : vector<2x32xf32>
    %cst_124 = arith.constant 1.000000e+00 : f32
    %211 = vector.broadcast %cst_124 : f32 to vector<2x32xf32>
    %212 = arith.addf %211, %210 : vector<2x32xf32>
    %213 = arith.divf %211, %212 : vector<2x32xf32>
    %214 = arith.mulf %205, %187 : vector<2x32xf32>
    %215 = arith.mulf %199, %207 : vector<2x32xf32>
    %216 = arith.addf %214, %215 : vector<2x32xf32>
    %217 = math.tanh %216 : vector<2x32xf32>
    %218 = arith.mulf %213, %217 : vector<2x32xf32>
    %219 = vector.extract_strided_slice %97 {offsets = [8, 0], sizes = [2, 128], strides = [1, 1]} : vector<16x128xf32> to vector<2x128xf32>
    %cst_125 = arith.constant dense<0.000000e+00> : vector<2x128xf32>
    %220 = tpu.matmul %218, %98, %cst_125 {dimension_numbers = #tpu.dot_dimension_numbers<[1], [0], [0], [1], [0, 0, 1, 1], [], []>} : vector<2x32xf32>, vector<32x128xf32>, vector<2x128xf32> -> vector<2x128xf32>
    %221 = arith.addf %219, %220 : vector<2x128xf32>
    %c0_126 = arith.constant 0 : index
    %c0_127 = arith.constant 0 : index
    %222 = vector.load %arg7[%c0_126, %c0_127] : memref<8x128xf32, #tpu.memory_space<vmem>>, vector<2x128xf32>
    tpu.vector_store %arg7[%c0_126, %c0_127], %221 {strides = array<i32>} : memref<8x128xf32, #tpu.memory_space<vmem>>, vector<2x128xf32>,
    %c0_128 = arith.constant 0 : index
    %c0_129 = arith.constant 0 : index
    %223 = vector.load %arg7[%c0_128, %c0_129] : memref<8x128xf32, #tpu.memory_space<vmem>>, vector<2x32xf32>
    %224 = arith.negf %223 : vector<2x32xf32>
    %225 = math.exp %224 : vector<2x32xf32>
    %cst_130 = arith.constant 1.000000e+00 : f32
    %226 = vector.broadcast %cst_130 : f32 to vector<2x32xf32>
    %227 = arith.addf %226, %225 : vector<2x32xf32>
    %228 = arith.divf %226, %227 : vector<2x32xf32>
    %c0_131 = arith.constant 0 : index
    %c32_132 = arith.constant 32 : index
    %229 = vector.load %arg7[%c0_131, %c32_132] : memref<8x128xf32, #tpu.memory_space<vmem>>, vector<2x32xf32>
    %230 = arith.negf %229 : vector<2x32xf32>
    %231 = math.exp %230 : vector<2x32xf32>
    %cst_133 = arith.constant 1.000000e+00 : f32
    %232 = vector.broadcast %cst_133 : f32 to vector<2x32xf32>
    %233 = arith.addf %232, %231 : vector<2x32xf32>
    %234 = arith.divf %232, %233 : vector<2x32xf32>
    %c0_134 = arith.constant 0 : index
    %c64_135 = arith.constant 64 : index
    %235 = vector.load %arg7[%c0_134, %c64_135] : memref<8x128xf32, #tpu.memory_space<vmem>>, vector<2x32xf32>
    %236 = math.tanh %235 : vector<2x32xf32>
    %c0_136 = arith.constant 0 : index
    %c96_137 = arith.constant 96 : index
    %237 = vector.load %arg7[%c0_136, %c96_137] : memref<8x128xf32, #tpu.memory_space<vmem>>, vector<2x32xf32>
    %238 = arith.negf %237 : vector<2x32xf32>
    %239 = math.exp %238 : vector<2x32xf32>
    %cst_138 = arith.constant 1.000000e+00 : f32
    %240 = vector.broadcast %cst_138 : f32 to vector<2x32xf32>
    %241 = arith.addf %240, %239 : vector<2x32xf32>
    %242 = arith.divf %240, %241 : vector<2x32xf32>
    %243 = arith.mulf %234, %216 : vector<2x32xf32>
    %244 = arith.mulf %228, %236 : vector<2x32xf32>
    %245 = arith.addf %243, %244 : vector<2x32xf32>
    %246 = math.tanh %245 : vector<2x32xf32>
    %247 = arith.mulf %242, %246 : vector<2x32xf32>
    %248 = vector.extract_strided_slice %97 {offsets = [10, 0], sizes = [2, 128], strides = [1, 1]} : vector<16x128xf32> to vector<2x128xf32>
    %cst_139 = arith.constant dense<0.000000e+00> : vector<2x128xf32>
    %249 = tpu.matmul %247, %98, %cst_139 {dimension_numbers = #tpu.dot_dimension_numbers<[1], [0], [0], [1], [0, 0, 1, 1], [], []>} : vector<2x32xf32>, vector<32x128xf32>, vector<2x128xf32> -> vector<2x128xf32>
    %250 = arith.addf %248, %249 : vector<2x128xf32>
    %c0_140 = arith.constant 0 : index
    %c0_141 = arith.constant 0 : index
    %251 = vector.load %arg7[%c0_140, %c0_141] : memref<8x128xf32, #tpu.memory_space<vmem>>, vector<2x128xf32>
    tpu.vector_store %arg7[%c0_140, %c0_141], %250 {strides = array<i32>} : memref<8x128xf32, #tpu.memory_space<vmem>>, vector<2x128xf32>,
    %c0_142 = arith.constant 0 : index
    %c0_143 = arith.constant 0 : index
    %252 = vector.load %arg7[%c0_142, %c0_143] : memref<8x128xf32, #tpu.memory_space<vmem>>, vector<2x32xf32>
    %253 = arith.negf %252 : vector<2x32xf32>
    %254 = math.exp %253 : vector<2x32xf32>
    %cst_144 = arith.constant 1.000000e+00 : f32
    %255 = vector.broadcast %cst_144 : f32 to vector<2x32xf32>
    %256 = arith.addf %255, %254 : vector<2x32xf32>
    %257 = arith.divf %255, %256 : vector<2x32xf32>
    %c0_145 = arith.constant 0 : index
    %c32_146 = arith.constant 32 : index
    %258 = vector.load %arg7[%c0_145, %c32_146] : memref<8x128xf32, #tpu.memory_space<vmem>>, vector<2x32xf32>
    %259 = arith.negf %258 : vector<2x32xf32>
    %260 = math.exp %259 : vector<2x32xf32>
    %cst_147 = arith.constant 1.000000e+00 : f32
    %261 = vector.broadcast %cst_147 : f32 to vector<2x32xf32>
    %262 = arith.addf %261, %260 : vector<2x32xf32>
    %263 = arith.divf %261, %262 : vector<2x32xf32>
    %c0_148 = arith.constant 0 : index
    %c64_149 = arith.constant 64 : index
    %264 = vector.load %arg7[%c0_148, %c64_149] : memref<8x128xf32, #tpu.memory_space<vmem>>, vector<2x32xf32>
    %265 = math.tanh %264 : vector<2x32xf32>
    %c0_150 = arith.constant 0 : index
    %c96_151 = arith.constant 96 : index
    %266 = vector.load %arg7[%c0_150, %c96_151] : memref<8x128xf32, #tpu.memory_space<vmem>>, vector<2x32xf32>
    %267 = arith.negf %266 : vector<2x32xf32>
    %268 = math.exp %267 : vector<2x32xf32>
    %cst_152 = arith.constant 1.000000e+00 : f32
    %269 = vector.broadcast %cst_152 : f32 to vector<2x32xf32>
    %270 = arith.addf %269, %268 : vector<2x32xf32>
    %271 = arith.divf %269, %270 : vector<2x32xf32>
    %272 = arith.mulf %263, %245 : vector<2x32xf32>
    %273 = arith.mulf %257, %265 : vector<2x32xf32>
    %274 = arith.addf %272, %273 : vector<2x32xf32>
    %275 = math.tanh %274 : vector<2x32xf32>
    %276 = arith.mulf %271, %275 : vector<2x32xf32>
    %277 = vector.extract_strided_slice %97 {offsets = [12, 0], sizes = [2, 128], strides = [1, 1]} : vector<16x128xf32> to vector<2x128xf32>
    %cst_153 = arith.constant dense<0.000000e+00> : vector<2x128xf32>
    %278 = tpu.matmul %276, %98, %cst_153 {dimension_numbers = #tpu.dot_dimension_numbers<[1], [0], [0], [1], [0, 0, 1, 1], [], []>} : vector<2x32xf32>, vector<32x128xf32>, vector<2x128xf32> -> vector<2x128xf32>
    %279 = arith.addf %277, %278 : vector<2x128xf32>
    %c0_154 = arith.constant 0 : index
    %c0_155 = arith.constant 0 : index
    %280 = vector.load %arg7[%c0_154, %c0_155] : memref<8x128xf32, #tpu.memory_space<vmem>>, vector<2x128xf32>
    tpu.vector_store %arg7[%c0_154, %c0_155], %279 {strides = array<i32>} : memref<8x128xf32, #tpu.memory_space<vmem>>, vector<2x128xf32>,
    %c0_156 = arith.constant 0 : index
    %c0_157 = arith.constant 0 : index
    %281 = vector.load %arg7[%c0_156, %c0_157] : memref<8x128xf32, #tpu.memory_space<vmem>>, vector<2x32xf32>
    %282 = arith.negf %281 : vector<2x32xf32>
    %283 = math.exp %282 : vector<2x32xf32>
    %cst_158 = arith.constant 1.000000e+00 : f32
    %284 = vector.broadcast %cst_158 : f32 to vector<2x32xf32>
    %285 = arith.addf %284, %283 : vector<2x32xf32>
    %286 = arith.divf %284, %285 : vector<2x32xf32>
    %c0_159 = arith.constant 0 : index
    %c32_160 = arith.constant 32 : index
    %287 = vector.load %arg7[%c0_159, %c32_160] : memref<8x128xf32, #tpu.memory_space<vmem>>, vector<2x32xf32>
    %288 = arith.negf %287 : vector<2x32xf32>
    %289 = math.exp %288 : vector<2x32xf32>
    %cst_161 = arith.constant 1.000000e+00 : f32
    %290 = vector.broadcast %cst_161 : f32 to vector<2x32xf32>
    %291 = arith.addf %290, %289 : vector<2x32xf32>
    %292 = arith.divf %290, %291 : vector<2x32xf32>
    %c0_162 = arith.constant 0 : index
    %c64_163 = arith.constant 64 : index
    %293 = vector.load %arg7[%c0_162, %c64_163] : memref<8x128xf32, #tpu.memory_space<vmem>>, vector<2x32xf32>
    %294 = math.tanh %293 : vector<2x32xf32>
    %c0_164 = arith.constant 0 : index
    %c96_165 = arith.constant 96 : index
    %295 = vector.load %arg7[%c0_164, %c96_165] : memref<8x128xf32, #tpu.memory_space<vmem>>, vector<2x32xf32>
    %296 = arith.negf %295 : vector<2x32xf32>
    %297 = math.exp %296 : vector<2x32xf32>
    %cst_166 = arith.constant 1.000000e+00 : f32
    %298 = vector.broadcast %cst_166 : f32 to vector<2x32xf32>
    %299 = arith.addf %298, %297 : vector<2x32xf32>
    %300 = arith.divf %298, %299 : vector<2x32xf32>
    %301 = arith.mulf %292, %274 : vector<2x32xf32>
    %302 = arith.mulf %286, %294 : vector<2x32xf32>
    %303 = arith.addf %301, %302 : vector<2x32xf32>
    %304 = math.tanh %303 : vector<2x32xf32>
    %305 = arith.mulf %300, %304 : vector<2x32xf32>
    %306 = vector.extract_strided_slice %97 {offsets = [14, 0], sizes = [2, 128], strides = [1, 1]} : vector<16x128xf32> to vector<2x128xf32>
    %cst_167 = arith.constant dense<0.000000e+00> : vector<2x128xf32>
    %307 = tpu.matmul %305, %98, %cst_167 {dimension_numbers = #tpu.dot_dimension_numbers<[1], [0], [0], [1], [0, 0, 1, 1], [], []>} : vector<2x32xf32>, vector<32x128xf32>, vector<2x128xf32> -> vector<2x128xf32>
    %308 = arith.addf %306, %307 : vector<2x128xf32>
    %c0_168 = arith.constant 0 : index
    %c0_169 = arith.constant 0 : index
    %309 = vector.load %arg7[%c0_168, %c0_169] : memref<8x128xf32, #tpu.memory_space<vmem>>, vector<2x128xf32>
    tpu.vector_store %arg7[%c0_168, %c0_169], %308 {strides = array<i32>} : memref<8x128xf32, #tpu.memory_space<vmem>>, vector<2x128xf32>,
    %c0_170 = arith.constant 0 : index
    %c0_171 = arith.constant 0 : index
    %310 = vector.load %arg7[%c0_170, %c0_171] : memref<8x128xf32, #tpu.memory_space<vmem>>, vector<2x32xf32>
    %311 = arith.negf %310 : vector<2x32xf32>
    %312 = math.exp %311 : vector<2x32xf32>
    %cst_172 = arith.constant 1.000000e+00 : f32
    %313 = vector.broadcast %cst_172 : f32 to vector<2x32xf32>
    %314 = arith.addf %313, %312 : vector<2x32xf32>
    %315 = arith.divf %313, %314 : vector<2x32xf32>
    %c0_173 = arith.constant 0 : index
    %c32_174 = arith.constant 32 : index
    %316 = vector.load %arg7[%c0_173, %c32_174] : memref<8x128xf32, #tpu.memory_space<vmem>>, vector<2x32xf32>
    %317 = arith.negf %316 : vector<2x32xf32>
    %318 = math.exp %317 : vector<2x32xf32>
    %cst_175 = arith.constant 1.000000e+00 : f32
    %319 = vector.broadcast %cst_175 : f32 to vector<2x32xf32>
    %320 = arith.addf %319, %318 : vector<2x32xf32>
    %321 = arith.divf %319, %320 : vector<2x32xf32>
    %c0_176 = arith.constant 0 : index
    %c64_177 = arith.constant 64 : index
    %322 = vector.load %arg7[%c0_176, %c64_177] : memref<8x128xf32, #tpu.memory_space<vmem>>, vector<2x32xf32>
    %323 = math.tanh %322 : vector<2x32xf32>
    %c0_178 = arith.constant 0 : index
    %c96_179 = arith.constant 96 : index
    %324 = vector.load %arg7[%c0_178, %c96_179] : memref<8x128xf32, #tpu.memory_space<vmem>>, vector<2x32xf32>
    %325 = arith.negf %324 : vector<2x32xf32>
    %326 = math.exp %325 : vector<2x32xf32>
    %cst_180 = arith.constant 1.000000e+00 : f32
    %327 = vector.broadcast %cst_180 : f32 to vector<2x32xf32>
    %328 = arith.addf %327, %326 : vector<2x32xf32>
    %329 = arith.divf %327, %328 : vector<2x32xf32>
    %330 = arith.mulf %321, %303 : vector<2x32xf32>
    %331 = arith.mulf %315, %323 : vector<2x32xf32>
    %332 = arith.addf %330, %331 : vector<2x32xf32>
    %333 = math.tanh %332 : vector<2x32xf32>
    %334 = arith.mulf %329, %333 : vector<2x32xf32>
    %cst_181 = arith.constant 0.000000e+00 : f32
    %335 = vector.broadcast %cst_181 : f32 to vector<2x32xf32>
    %336 = arith.maximumf %334, %335 : vector<2x32xf32>
    %c768 = arith.constant 768 : index
    %c0_182 = arith.constant 0 : index
    %337 = vector.load %arg3[%c768, %c0_182] : memref<800x128xf32, #tpu.memory_space<vmem>>, vector<32x32xf32>
    %cst_183 = arith.constant dense<0.000000e+00> : vector<2x32xf32>
    %338 = tpu.matmul %336, %337, %cst_183 {dimension_numbers = #tpu.dot_dimension_numbers<[1], [0], [0], [1], [0, 0, 1, 1], [], []>} : vector<2x32xf32>, vector<32x32xf32>, vector<2x32xf32> -> vector<2x32xf32>
    %c96_184 = arith.constant 96 : index
    %c0_185 = arith.constant 0 : index
    %339 = vector.load %arg4[%c96_184, %c0_185] : memref<104x128xf32, #tpu.memory_space<vmem>>, vector<1x32xf32>
    %340 = vector.broadcast %339 : vector<1x32xf32> to vector<2x32xf32>
    %341 = arith.addf %338, %340 : vector<2x32xf32>
    %cst_186 = arith.constant 0.000000e+00 : f32
    %342 = vector.broadcast %cst_186 : f32 to vector<2x32xf32>
    %343 = arith.maximumf %341, %342 : vector<2x32xf32>
    %c0_187 = arith.constant 0 : index
    %c0_188 = arith.constant 0 : index
    %344 = vector.load %arg6[%c0_187, %c0_188] : memref<2x32xf32, #tpu.memory_space<vmem>>, vector<2x32xf32>
    tpu.vector_store %arg6[%c0_187, %c0_188], %343 {strides = array<i32>} : memref<2x32xf32, #tpu.memory_space<vmem>>, vector<2x32xf32>,
    return
  }
}

</mosaic_0001>

<llo_original>
// kernel: tpu_custom_call.1
$region0: #{tpu_custom_call.1}
  #allocation0 [shape = 'u32[]', space=smem, size = 0x4, offset = 0x4, fixed_abs, tag = 'smem constant byte address 0x4 - core index']
  #allocation1 [shape = 'u32[72,128]{1,0:T(1,128)}', space=vmem, size = 0x9000, scoped, tag = 'internal scratch']
  #allocation2 [shape = 'f32[8,128]{1,0:T(8,128)}', space=vmem, size = 0x1000, scoped, tag = 'scratch operand']
  %s0 = inlined_call_operand.vmem [shape: f32[256,32], index: 0, kind: input, shape index: {}]
  %s1 = inlined_call_operand.vmem [shape: f32[16,38], index: 1, kind: input, shape index: {}]
  %s2 = inlined_call_operand.vmem [shape: f32[2,2,32], index: 2, kind: input, shape index: {}]
  %s3 = inlined_call_operand.hbm [shape: f32[800,128], index: 3, kind: input, shape index: {}]
  %s4 = inlined_call_operand.vmem [shape: f32[104,128], index: 4, kind: input, shape index: {}]
  %s5 = inlined_call_operand.hbm [shape: f32[544,256], index: 5, kind: input, shape index: {}]
  %s6 = inlined_call_operand.hbm [shape: f32[2,32], index: 6, kind: output, shape index: {}]
  %s7 = sld [smem:[#allocation0]]
  $region42: #{tpu_custom_call.1} parent=0
    _
  %s9 = ssub.s32 1, %s7
  %s10 = scalar_select 0, %s9, %s7
  $region1: #{tpu_custom_call.1} parent=0
    #allocation3 [shape = 'u8[409600]{0}', space=vmem, size = 0x64000, scoped, tag = 'input window, operand 3, single buffered']
    #allocation4 [shape = 's32[1]{0}', space=sflag, size = 0x4, scoped, tag = 'scoped memory for tpu_custom_call.1']
    #allocation5 [shape = 's32[1]{0}', space=sflag, size = 0x4, scoped, tag = 'scoped memory for tpu_custom_call.1']
    #allocation6 [shape = 'u8[557056]{0}', space=vmem, size = 0x88000, scoped, tag = 'input window, operand 5, single buffered']
    #allocation7 [shape = 's32[1]{0}', space=sflag, size = 0x4, scoped, tag = 'scoped memory for tpu_custom_call.1']
    #allocation8 [shape = 'u8[1024]{0}', space=vmem, size = 0x400, scoped, tag = 'output window, operand 0, single buffered']
    %11 = vsyncpa [#allocation4], 0
    %12 = vsyncpa [#allocation7], 0
    %13 = vsyncpa [#allocation5], 0
    // Predicated region
    $region2: #{tpu_custom_call.1} parent=1 // pred_check
      _
    $region3: #{tpu_custom_call.1} parent=1 // pred_check_branch
      %15 = sbr.rel (0) target = $region5
    $region4: #{tpu_custom_call.1} parent=1 // pred_region
      _
    $region5: #{tpu_custom_call.1} parent=1 // pred_fallthru
      _
    // Predicated region
    $region6: #{tpu_custom_call.1} parent=1 // pred_check
      _
    $region7: #{tpu_custom_call.1} parent=1 // pred_check_branch
      %17 = sbr.rel (0) target = $region9
    $region8: #{tpu_custom_call.1} parent=1 // pred_region
      _
    $region9: #{tpu_custom_call.1} parent=1 // pred_fallthru
      _
    // Predicated region
    $region10: #{tpu_custom_call.1} parent=1 // pred_check
      _
    $region11: #{tpu_custom_call.1} parent=1 // pred_check_branch
      %19 = sbr.rel (0) target = $region13
    $region12: #{tpu_custom_call.1} parent=1 // pred_region
      _
    $region13: #{tpu_custom_call.1} parent=1 // pred_fallthru
      _
    // Predicated region
    $region14: #{tpu_custom_call.1} parent=1 // pred_check
      _
    $region15: #{tpu_custom_call.1} parent=1 // pred_check_branch
      %21 = sbr.rel (0) target = $region17
    $region16: #{tpu_custom_call.1} parent=1 // pred_region
      %23 = vsyncadd [#allocation4], 0
      %s24 = sshll.u32 %s3, 4
      %s25 = int_to_ptr.hbm [resolvable:$true] %s24
      %s26 = sshll.u32 [#allocation3], 4
      %s27 = int_to_ptr.vmem [resolvable:$true] %s26
      %32 = dma.hbm_to_vmem [thread:$0]  %s25, 12800, %s27, [#allocation4], 128, 128, 8
    $region17: #{tpu_custom_call.1} parent=1 // pred_fallthru
      _
    // Predicated region
    $region18: #{tpu_custom_call.1} parent=1 // pred_check
      _
    $region19: #{tpu_custom_call.1} parent=1 // pred_check_branch
      %34 = sbr.rel (0) target = $region21
    $region20: #{tpu_custom_call.1} parent=1 // pred_region
      _
    $region21: #{tpu_custom_call.1} parent=1 // pred_fallthru
      _
    // Predicated region
    $region22: #{tpu_custom_call.1} parent=1 // pred_check
      _
    $region23: #{tpu_custom_call.1} parent=1 // pred_check_branch
      %36 = sbr.rel (0) target = $region25
    $region24: #{tpu_custom_call.1} parent=1 // pred_region
      %38 = vsyncadd [#allocation7], 0
      %s39 = sshll.u32 %s5, 4
      %s40 = int_to_ptr.hbm [resolvable:$true] %s39
      %s41 = sshll.u32 [#allocation6], 4
      %s42 = int_to_ptr.vmem [resolvable:$true] %s41
      %47 = dma.hbm_to_vmem [thread:$0]  %s40, 17408, %s42, [#allocation7], 256, 256, 16
    $region25: #{tpu_custom_call.1} parent=1 // pred_fallthru
      _
    // Predicated region
    $region26: #{tpu_custom_call.1} parent=1 // pred_check
      _
    $region27: #{tpu_custom_call.1} parent=1 // pred_check_branch
      %49 = sbr.rel (0) target = $region29
    $region28: #{tpu_custom_call.1} parent=1 // pred_region
      %51 = dma.done [#allocation4], 12800
    $region29: #{tpu_custom_call.1} parent=1 // pred_fallthru
      _
    // Predicated region
    $region30: #{tpu_custom_call.1} parent=1 // pred_check
      _
    $region31: #{tpu_custom_call.1} parent=1 // pred_check_branch
      %53 = sbr.rel (0) target = $region33
    $region32: #{tpu_custom_call.1} parent=1 // pred_region
      %55 = dma.done [#allocation7], 17408
    $region33: #{tpu_custom_call.1} parent=1 // pred_fallthru
      _
    %v56 = vld [vmem:[%s0] sm:$0xff]
    %v57 = vld [vmem:[%s0 + $0x8] sm:$0xff]
    %v58 = vld [vmem:[%s0 + $0x10] sm:$0xff]
    %v59 = vld [vmem:[%s0 + $0x18] sm:$0xff]
    %v60 = vld [vmem:[%s0 + $0x20] sm:$0xff]
    %v61 = vld [vmem:[%s0 + $0x28] sm:$0xff]
    %v62 = vld [vmem:[%s0 + $0x30] sm:$0xff]
    %v63 = vld [vmem:[%s0 + $0x38] sm:$0xff]
    %v64 = vld [vmem:[%s0 + $0x40] sm:$0xff]
    %v65 = vld [vmem:[%s0 + $0x48] sm:$0xff]
    %v66 = vld [vmem:[%s0 + $0x50] sm:$0xff]
    %v67 = vld [vmem:[%s0 + $0x58] sm:$0xff]
    %v68 = vld [vmem:[%s0 + $0x60] sm:$0xff]
    %v69 = vld [vmem:[%s0 + $0x68] sm:$0xff]
    %v70 = vld [vmem:[%s0 + $0x70] sm:$0xff]
    %v71 = vld [vmem:[%s0 + $0x78] sm:$0xff]
    %v72 = vld [vmem:[%s0 + $0x80] sm:$0xff]
    %v73 = vld [vmem:[%s0 + $0x88] sm:$0xff]
    %v74 = vld [vmem:[%s0 + $0x90] sm:$0xff]
    %v75 = vld [vmem:[%s0 + $0x98] sm:$0xff]
    %v76 = vld [vmem:[%s0 + $0xa0] sm:$0xff]
    %v77 = vld [vmem:[%s0 + $0xa8] sm:$0xff]
    %v78 = vld [vmem:[%s0 + $0xb0] sm:$0xff]
    %v79 = vld [vmem:[%s0 + $0xb8] sm:$0xff]
    %v80 = vld [vmem:[%s0 + $0xc0] sm:$0xff]
    %v81 = vld [vmem:[%s0 + $0xc8] sm:$0xff]
    %v82 = vld [vmem:[%s0 + $0xd0] sm:$0xff]
    %v83 = vld [vmem:[%s0 + $0xd8] sm:$0xff]
    %v84 = vld [vmem:[%s0 + $0xe0] sm:$0xff]
    %v85 = vld [vmem:[%s0 + $0xe8] sm:$0xff]
    %v86 = vld [vmem:[%s0 + $0xf0] sm:$0xff]
    %v87 = vld [vmem:[%s0 + $0xf8] sm:$0xff]
    %120 = vrot.lane.b32.xlu0 %v56, 112
    %v121 = vpop.permute.xlu0 %120
    %122 = vrot.lane.b32.xlu0 %v57, 112
    %v123 = vpop.permute.xlu0 %122
    %124 = vrot.lane.b32.xlu0 %v58, 112
    %v125 = vpop.permute.xlu0 %124
    %126 = vrot.lane.b32.xlu0 %v59, 112
    %v127 = vpop.permute.xlu0 %126
    %128 = vrot.lane.b32.xlu0 %v60, 112
    %v129 = vpop.permute.xlu0 %128
    %130 = vrot.lane.b32.xlu0 %v61, 112
    %v131 = vpop.permute.xlu0 %130
    %132 = vrot.lane.b32.xlu0 %v62, 112
    %v133 = vpop.permute.xlu0 %132
    %134 = vrot.lane.b32.xlu0 %v63, 112
    %v135 = vpop.permute.xlu0 %134
    %136 = vrot.lane.b32.xlu0 %v64, 112
    %v137 = vpop.permute.xlu0 %136
    %138 = vrot.lane.b32.xlu0 %v65, 112
    %v139 = vpop.permute.xlu0 %138
    %140 = vrot.lane.b32.xlu0 %v66, 112
    %v141 = vpop.permute.xlu0 %140
    %142 = vrot.lane.b32.xlu0 %v67, 112
    %v143 = vpop.permute.xlu0 %142
    %144 = vrot.lane.b32.xlu0 %v68, 112
    %v145 = vpop.permute.xlu0 %144
    %146 = vrot.lane.b32.xlu0 %v69, 112
    %v147 = vpop.permute.xlu0 %146
    %148 = vrot.lane.b32.xlu0 %v70, 112
    %v149 = vpop.permute.xlu0 %148
    %150 = vrot.lane.b32.xlu0 %v71, 112
    %v151 = vpop.permute.xlu0 %150
    %152 = vrot.lane.b32.xlu0 %v72, 112
    %v153 = vpop.permute.xlu0 %152
    %154 = vrot.lane.b32.xlu0 %v73, 112
    %v155 = vpop.permute.xlu0 %154
    %156 = vrot.lane.b32.xlu0 %v74, 112
    %v157 = vpop.permute.xlu0 %156
    %158 = vrot.lane.b32.xlu0 %v75, 112
    %v159 = vpop.permute.xlu0 %158
    %160 = vrot.lane.b32.xlu0 %v76, 112
    %v161 = vpop.permute.xlu0 %160
    %162 = vrot.lane.b32.xlu0 %v77, 112
    %v163 = vpop.permute.xlu0 %162
    %164 = vrot.lane.b32.xlu0 %v78, 112
    %v165 = vpop.permute.xlu0 %164
    %166 = vrot.lane.b32.xlu0 %v79, 112
    %v167 = vpop.permute.xlu0 %166
    %168 = vrot.lane.b32.xlu0 %v80, 112
    %v169 = vpop.permute.xlu0 %168
    %170 = vrot.lane.b32.xlu0 %v81, 112
    %v171 = vpop.permute.xlu0 %170
    %172 = vrot.lane.b32.xlu0 %v82, 112
    %v173 = vpop.permute.xlu0 %172
    %174 = vrot.lane.b32.xlu0 %v83, 112
    %v175 = vpop.permute.xlu0 %174
    %176 = vrot.lane.b32.xlu0 %v84, 112
    %v177 = vpop.permute.xlu0 %176
    %178 = vrot.lane.b32.xlu0 %v85, 112
    %v179 = vpop.permute.xlu0 %178
    %180 = vrot.lane.b32.xlu0 %v86, 112
    %v181 = vpop.permute.xlu0 %180
    %182 = vrot.lane.b32.xlu0 %v87, 112
    %v183 = vpop.permute.xlu0 %182
    %v216 = vmul.f32 %v56, %v121
    %v217 = vmul.f32 %v57, %v123
    %v218 = vmul.f32 %v58, %v125
    %v219 = vmul.f32 %v59, %v127
    %v220 = vmul.f32 %v60, %v129
    %v221 = vmul.f32 %v61, %v131
    %v222 = vmul.f32 %v62, %v133
    %v223 = vmul.f32 %v63, %v135
    %v224 = vmul.f32 %v64, %v137
    %v225 = vmul.f32 %v65, %v139
    %v226 = vmul.f32 %v66, %v141
    %v227 = vmul.f32 %v67, %v143
    %v228 = vmul.f32 %v68, %v145
    %v229 = vmul.f32 %v69, %v147
    %v230 = vmul.f32 %v70, %v149
    %v231 = vmul.f32 %v71, %v151
    %v232 = vmul.f32 %v72, %v153
    %v233 = vmul.f32 %v73, %v155
    %v234 = vmul.f32 %v74, %v157
    %v235 = vmul.f32 %v75, %v159
    %v236 = vmul.f32 %v76, %v161
    %v237 = vmul.f32 %v77, %v163
    %v238 = vmul.f32 %v78, %v165
    %v239 = vmul.f32 %v79, %v167
    %v240 = vmul.f32 %v80, %v169
    %v241 = vmul.f32 %v81, %v171
    %v242 = vmul.f32 %v82, %v173
    %v243 = vmul.f32 %v83, %v175
    %v244 = vmul.f32 %v84, %v177
    %v245 = vmul.f32 %v85, %v179
    %v246 = vmul.f32 %v86, %v181
    %v247 = vmul.f32 %v87, %v183
    %vm248 = vcmask 130048
    %v249 = vsel %vm248, %v216, 0.0
    %250 = vadd.xlane.f32.xlu0 %v249
    %v251 = vpop.xlane.xlu0 %250
    %v252 = vsel %vm248, %v217, 0.0
    %253 = vadd.xlane.f32.xlu0 %v252
    %v254 = vpop.xlane.xlu0 %253
    %v255 = vsel %vm248, %v218, 0.0
    %256 = vadd.xlane.f32.xlu0 %v255
    %v257 = vpop.xlane.xlu0 %256
    %v258 = vsel %vm248, %v219, 0.0
    %259 = vadd.xlane.f32.xlu0 %v258
    %v260 = vpop.xlane.xlu0 %259
    %v261 = vsel %vm248, %v220, 0.0
    %262 = vadd.xlane.f32.xlu0 %v261
    %v263 = vpop.xlane.xlu0 %262
    %v264 = vsel %vm248, %v221, 0.0
    %265 = vadd.xlane.f32.xlu0 %v264
    %v266 = vpop.xlane.xlu0 %265
    %v267 = vsel %vm248, %v222, 0.0
    %268 = vadd.xlane.f32.xlu0 %v267
    %v269 = vpop.xlane.xlu0 %268
    %v270 = vsel %vm248, %v223, 0.0
    %271 = vadd.xlane.f32.xlu0 %v270
    %v272 = vpop.xlane.xlu0 %271
    %v273 = vsel %vm248, %v224, 0.0
    %274 = vadd.xlane.f32.xlu0 %v273
    %v275 = vpop.xlane.xlu0 %274
    %v276 = vsel %vm248, %v225, 0.0
    %277 = vadd.xlane.f32.xlu0 %v276
    %v278 = vpop.xlane.xlu0 %277
    %v279 = vsel %vm248, %v226, 0.0
    %280 = vadd.xlane.f32.xlu0 %v279
    %v281 = vpop.xlane.xlu0 %280
    %v282 = vsel %vm248, %v227, 0.0
    %283 = vadd.xlane.f32.xlu0 %v282
    %v284 = vpop.xlane.xlu0 %283
    %v285 = vsel %vm248, %v228, 0.0
    %286 = vadd.xlane.f32.xlu0 %v285
    %v287 = vpop.xlane.xlu0 %286
    %v288 = vsel %vm248, %v229, 0.0
    %289 = vadd.xlane.f32.xlu0 %v288
    %v290 = vpop.xlane.xlu0 %289
    %v291 = vsel %vm248, %v230, 0.0
    %292 = vadd.xlane.f32.xlu0 %v291
    %v293 = vpop.xlane.xlu0 %292
    %v294 = vsel %vm248, %v231, 0.0
    %295 = vadd.xlane.f32.xlu0 %v294
    %v296 = vpop.xlane.xlu0 %295
    %v297 = vsel %vm248, %v232, 0.0
    %298 = vadd.xlane.f32.xlu0 %v297
    %v299 = vpop.xlane.xlu0 %298
    %v300 = vsel %vm248, %v233, 0.0
    %301 = vadd.xlane.f32.xlu0 %v300
    %v302 = vpop.xlane.xlu0 %301
    %v303 = vsel %vm248, %v234, 0.0
    %304 = vadd.xlane.f32.xlu0 %v303
    %v305 = vpop.xlane.xlu0 %304
    %v306 = vsel %vm248, %v235, 0.0
    %307 = vadd.xlane.f32.xlu0 %v306
    %v308 = vpop.xlane.xlu0 %307
    %v309 = vsel %vm248, %v236, 0.0
    %310 = vadd.xlane.f32.xlu0 %v309
    %v311 = vpop.xlane.xlu0 %310
    %v312 = vsel %vm248, %v237, 0.0
    %313 = vadd.xlane.f32.xlu0 %v312
    %v314 = vpop.xlane.xlu0 %313
    %v315 = vsel %vm248, %v238, 0.0
    %316 = vadd.xlane.f32.xlu0 %v315
    %v317 = vpop.xlane.xlu0 %316
    %v318 = vsel %vm248, %v239, 0.0
    %319 = vadd.xlane.f32.xlu0 %v318
    %v320 = vpop.xlane.xlu0 %319
    %v321 = vsel %vm248, %v240, 0.0
    %322 = vadd.xlane.f32.xlu0 %v321
    %v323 = vpop.xlane.xlu0 %322
    %v324 = vsel %vm248, %v241, 0.0
    %325 = vadd.xlane.f32.xlu0 %v324
    %v326 = vpop.xlane.xlu0 %325
    %v327 = vsel %vm248, %v242, 0.0
    %328 = vadd.xlane.f32.xlu0 %v327
    %v329 = vpop.xlane.xlu0 %328
    %v330 = vsel %vm248, %v243, 0.0
    %331 = vadd.xlane.f32.xlu0 %v330
    %v332 = vpop.xlane.xlu0 %331
    %v333 = vsel %vm248, %v244, 0.0
    %334 = vadd.xlane.f32.xlu0 %v333
    %v335 = vpop.xlane.xlu0 %334
    %v336 = vsel %vm248, %v245, 0.0
    %337 = vadd.xlane.f32.xlu0 %v336
    %v338 = vpop.xlane.xlu0 %337
    %v339 = vsel %vm248, %v246, 0.0
    %340 = vadd.xlane.f32.xlu0 %v339
    %v341 = vpop.xlane.xlu0 %340
    %v342 = vsel %vm248, %v247, 0.0
    %343 = vadd.xlane.f32.xlu0 %v342
    %v344 = vpop.xlane.xlu0 %343
    %v345 = vld [vmem:[%s4] sm:$0x1]
    %v346 = vperm.slane %v345, 0
    %v347 = vmul.f32 %v251, %v346
    %v348 = vmul.f32 %v254, %v346
    %v349 = vmul.f32 %v257, %v346
    %v350 = vmul.f32 %v260, %v346
    %v351 = vmul.f32 %v263, %v346
    %v352 = vmul.f32 %v266, %v346
    %v353 = vmul.f32 %v269, %v346
    %v354 = vmul.f32 %v272, %v346
    %v355 = vmul.f32 %v275, %v346
    %v356 = vmul.f32 %v278, %v346
    %v357 = vmul.f32 %v281, %v346
    %v358 = vmul.f32 %v284, %v346
    %v359 = vmul.f32 %v287, %v346
    %v360 = vmul.f32 %v290, %v346
    %v361 = vmul.f32 %v293, %v346
    %v362 = vmul.f32 %v296, %v346
    %v363 = vmul.f32 %v299, %v346
    %v364 = vmul.f32 %v302, %v346
    %v365 = vmul.f32 %v305, %v346
    %v366 = vmul.f32 %v308, %v346
    %v367 = vmul.f32 %v311, %v346
    %v368 = vmul.f32 %v314, %v346
    %v369 = vmul.f32 %v317, %v346
    %v370 = vmul.f32 %v320, %v346
    %v371 = vmul.f32 %v323, %v346
    %v372 = vmul.f32 %v326, %v346
    %v373 = vmul.f32 %v329, %v346
    %v374 = vmul.f32 %v332, %v346
    %v375 = vmul.f32 %v335, %v346
    %v376 = vmul.f32 %v338, %v346
    %v377 = vmul.f32 %v341, %v346
    %v378 = vmul.f32 %v344, %v346
    %v379 = vld [vmem:[%s4 + $0x8] sm:$0x1]
    %v380 = vperm.slane %v379, 0
    %v381 = vadd.f32 %v347, %v380
    %v382 = vadd.f32 %v348, %v380
    %v383 = vadd.f32 %v349, %v380
    %v384 = vadd.f32 %v350, %v380
    %v385 = vadd.f32 %v351, %v380
    %v386 = vadd.f32 %v352, %v380
    %v387 = vadd.f32 %v353, %v380
    %v388 = vadd.f32 %v354, %v380
    %v389 = vadd.f32 %v355, %v380
    %v390 = vadd.f32 %v356, %v380
    %v391 = vadd.f32 %v357, %v380
    %v392 = vadd.f32 %v358, %v380
    %v393 = vadd.f32 %v359, %v380
    %v394 = vadd.f32 %v360, %v380
    %v395 = vadd.f32 %v361, %v380
    %v396 = vadd.f32 %v362, %v380
    %v397 = vadd.f32 %v363, %v380
    %v398 = vadd.f32 %v364, %v380
    %v399 = vadd.f32 %v365, %v380
    %v400 = vadd.f32 %v366, %v380
    %v401 = vadd.f32 %v367, %v380
    %v402 = vadd.f32 %v368, %v380
    %v403 = vadd.f32 %v369, %v380
    %v404 = vadd.f32 %v370, %v380
    %v405 = vadd.f32 %v371, %v380
    %v406 = vadd.f32 %v372, %v380
    %v407 = vadd.f32 %v373, %v380
    %v408 = vadd.f32 %v374, %v380
    %v409 = vadd.f32 %v375, %v380
    %v410 = vadd.f32 %v376, %v380
    %v411 = vadd.f32 %v377, %v380
    %v412 = vadd.f32 %v378, %v380
    %v413 = vmax.f32 %v381, 0.0
    %v414 = vmax.f32 %v382, 0.0
    %v415 = vmax.f32 %v383, 0.0
    %v416 = vmax.f32 %v384, 0.0
    %v417 = vmax.f32 %v385, 0.0
    %v418 = vmax.f32 %v386, 0.0
    %v419 = vmax.f32 %v387, 0.0
    %v420 = vmax.f32 %v388, 0.0
    %v421 = vmax.f32 %v389, 0.0
    %v422 = vmax.f32 %v390, 0.0
    %v423 = vmax.f32 %v391, 0.0
    %v424 = vmax.f32 %v392, 0.0
    %v425 = vmax.f32 %v393, 0.0
    %v426 = vmax.f32 %v394, 0.0
    %v427 = vmax.f32 %v395, 0.0
    %v428 = vmax.f32 %v396, 0.0
    %v429 = vmax.f32 %v397, 0.0
    %v430 = vmax.f32 %v398, 0.0
    %v431 = vmax.f32 %v399, 0.0
    %v432 = vmax.f32 %v400, 0.0
    %v433 = vmax.f32 %v401, 0.0
    %v434 = vmax.f32 %v402, 0.0
    %v435 = vmax.f32 %v403, 0.0
    %v436 = vmax.f32 %v404, 0.0
    %v437 = vmax.f32 %v405, 0.0
    %v438 = vmax.f32 %v406, 0.0
    %v439 = vmax.f32 %v407, 0.0
    %v440 = vmax.f32 %v408, 0.0
    %v441 = vmax.f32 %v409, 0.0
    %v442 = vmax.f32 %v410, 0.0
    %v443 = vmax.f32 %v411, 0.0
    %v444 = vmax.f32 %v412, 0.0
    %v445 = vld [vmem:[#allocation3] sm:$0xff]
    %v446 = vld [vmem:[#allocation3 + $0x8] sm:$0x3]
    %vm447 = vcmask 80896
    %v449 = vsel %vm447, %v413, 0
    %v452 = vsel %vm447, %v414, 0
    %v455 = vsel %vm447, %v415, 0
    %v458 = vsel %vm447, %v416, 0
    %v461 = vsel %vm447, %v417, 0
    %v464 = vsel %vm447, %v418, 0
    %v467 = vsel %vm447, %v419, 0
    %v470 = vsel %vm447, %v420, 0
    %v473 = vsel %vm447, %v421, 0
    %v476 = vsel %vm447, %v422, 0
    %v479 = vsel %vm447, %v423, 0
    %v482 = vsel %vm447, %v424, 0
    %v485 = vsel %vm447, %v425, 0
    %v488 = vsel %vm447, %v426, 0
    %v491 = vsel %vm447, %v427, 0
    %v494 = vsel %vm447, %v428, 0
    %v497 = vsel %vm447, %v429, 0
    %v500 = vsel %vm447, %v430, 0
    %v503 = vsel %vm447, %v431, 0
    %v506 = vsel %vm447, %v432, 0
    %v509 = vsel %vm447, %v433, 0
    %v512 = vsel %vm447, %v434, 0
    %v515 = vsel %vm447, %v435, 0
    %v518 = vsel %vm447, %v436, 0
    %v521 = vsel %vm447, %v437, 0
    %v524 = vsel %vm447, %v438, 0
    %v527 = vsel %vm447, %v439, 0
    %v530 = vsel %vm447, %v440, 0
    %v533 = vsel %vm447, %v441, 0
    %v536 = vsel %vm447, %v442, 0
    %v539 = vsel %vm447, %v443, 0
    %v542 = vsel %vm447, %v444, 0
    %vm544 = vcmask 1041408
    %v546 = vsel %vm544, %v446, 0
    %548 = vmatpush.msra.mxu0 0.0
    %549 = vmatpush.msra.mxu0 0.0
    %550 = vmatpush.msra.mxu0 0.0
    %551 = vmatpush.msra.mxu0 0.0
    %552 = vmatpush.msra.mxu0 0.0
    %553 = vmatpush.msra.mxu0 0.0
    %554 = vmatpush.msra.mxu0 0.0
    %555 = vmatpush.msra.mxu0 0.0
    %556 = vmatpush.msra.mxu0 0.0
    %557 = vmatpush.msra.mxu0 0.0
    %558 = vmatpush.msra.mxu0 0.0
    %559 = vmatpush.msra.mxu0 0.0
    %560 = vmatpush.msra.mxu0 0.0
    %561 = vmatpush.msra.mxu0 0.0
    %562 = vmatpush.msra.mxu0 %v546
    %563 = vmatpush.msra.mxu0 %v445
    %564 = vmatmul.f32.gmra.mxu0 %v449
    %v565 = vpop.f32.mrf.mxu0
    %v566 = vadd.f32 0.0, %v565
    %567 = vmatmul.f32.gmra.mxu0 %v452
    %v568 = vpop.f32.mrf.mxu0
    %v569 = vadd.f32 0.0, %v568
    %570 = vmatmul.f32.gmra.mxu0 %v455
    %v571 = vpop.f32.mrf.mxu0
    %v572 = vadd.f32 0.0, %v571
    %573 = vmatmul.f32.gmra.mxu0 %v458
    %v574 = vpop.f32.mrf.mxu0
    %v575 = vadd.f32 0.0, %v574
    %576 = vmatmul.f32.gmra.mxu0 %v461
    %v577 = vpop.f32.mrf.mxu0
    %v578 = vadd.f32 0.0, %v577
    %579 = vmatmul.f32.gmra.mxu0 %v464
    %v580 = vpop.f32.mrf.mxu0
    %v581 = vadd.f32 0.0, %v580
    %582 = vmatmul.f32.gmra.mxu0 %v467
    %v583 = vpop.f32.mrf.mxu0
    %v584 = vadd.f32 0.0, %v583
    %585 = vmatmul.f32.gmra.mxu0 %v470
    %v586 = vpop.f32.mrf.mxu0
    %v587 = vadd.f32 0.0, %v586
    %588 = vmatmul.f32.gmra.mxu0 %v473
    %v589 = vpop.f32.mrf.mxu0
    %v590 = vadd.f32 0.0, %v589
    %591 = vmatmul.f32.gmra.mxu0 %v476
    %v592 = vpop.f32.mrf.mxu0
    %v593 = vadd.f32 0.0, %v592
    %594 = vmatmul.f32.gmra.mxu0 %v479
    %v595 = vpop.f32.mrf.mxu0
    %v596 = vadd.f32 0.0, %v595
    %597 = vmatmul.f32.gmra.mxu0 %v482
    %v598 = vpop.f32.mrf.mxu0
    %v599 = vadd.f32 0.0, %v598
    %600 = vmatmul.f32.gmra.mxu0 %v485
    %v601 = vpop.f32.mrf.mxu0
    %v602 = vadd.f32 0.0, %v601
    %603 = vmatmul.f32.gmra.mxu0 %v488
    %v604 = vpop.f32.mrf.mxu0
    %v605 = vadd.f32 0.0, %v604
    %606 = vmatmul.f32.gmra.mxu0 %v491
    %v607 = vpop.f32.mrf.mxu0
    %v608 = vadd.f32 0.0, %v607
    %609 = vmatmul.f32.gmra.mxu0 %v494
    %v610 = vpop.f32.mrf.mxu0
    %v611 = vadd.f32 0.0, %v610
    %612 = vmatmul.f32.gmra.mxu0 %v497
    %v613 = vpop.f32.mrf.mxu0
    %v614 = vadd.f32 0.0, %v613
    %615 = vmatmul.f32.gmra.mxu0 %v500
    %v616 = vpop.f32.mrf.mxu0
    %v617 = vadd.f32 0.0, %v616
    %618 = vmatmul.f32.gmra.mxu0 %v503
    %v619 = vpop.f32.mrf.mxu0
    %v620 = vadd.f32 0.0, %v619
    %621 = vmatmul.f32.gmra.mxu0 %v506
    %v622 = vpop.f32.mrf.mxu0
    %v623 = vadd.f32 0.0, %v622
    %624 = vmatmul.f32.gmra.mxu0 %v509
    %v625 = vpop.f32.mrf.mxu0
    %v626 = vadd.f32 0.0, %v625
    %627 = vmatmul.f32.gmra.mxu0 %v512
    %v628 = vpop.f32.mrf.mxu0
    %v629 = vadd.f32 0.0, %v628
    %630 = vmatmul.f32.gmra.mxu0 %v515
    %v631 = vpop.f32.mrf.mxu0
    %v632 = vadd.f32 0.0, %v631
    %633 = vmatmul.f32.gmra.mxu0 %v518
    %v634 = vpop.f32.mrf.mxu0
    %v635 = vadd.f32 0.0, %v634
    %636 = vmatmul.f32.gmra.mxu0 %v521
    %v637 = vpop.f32.mrf.mxu0
    %v638 = vadd.f32 0.0, %v637
    %639 = vmatmul.f32.gmra.mxu0 %v524
    %v640 = vpop.f32.mrf.mxu0
    %v641 = vadd.f32 0.0, %v640
    %642 = vmatmul.f32.gmra.mxu0 %v527
    %v643 = vpop.f32.mrf.mxu0
    %v644 = vadd.f32 0.0, %v643
    %645 = vmatmul.f32.gmra.mxu0 %v530
    %v646 = vpop.f32.mrf.mxu0
    %v647 = vadd.f32 0.0, %v646
    %648 = vmatmul.f32.gmra.mxu0 %v533
    %v649 = vpop.f32.mrf.mxu0
    %v650 = vadd.f32 0.0, %v649
    %651 = vmatmul.f32.gmra.mxu0 %v536
    %v652 = vpop.f32.mrf.mxu0
    %v653 = vadd.f32 0.0, %v652
    %654 = vmatmul.f32.gmra.mxu0 %v539
    %v655 = vpop.f32.mrf.mxu0
    %v656 = vadd.f32 0.0, %v655
    %657 = vmatmul.f32.gmra.mxu0 %v542
    %v658 = vpop.f32.mrf.mxu0
    %v659 = vadd.f32 0.0, %v658
    %660 = vdwg.mxu0
    %v661 = vld [vmem:[#allocation6] sm:$0xff]
    %v662 = vld [vmem:[#allocation6 + $0x8] sm:$0xff]
    %v663 = vld [vmem:[#allocation6 + $0x10] sm:$0xff]
    %v664 = vld [vmem:[#allocation6 + $0x18] sm:$0xff]
    %v665 = vld [vmem:[#allocation6 + $0x20] sm:$0xff]
    %v666 = vld [vmem:[#allocation6 + $0x28] sm:$0xff]
    %v667 = vld [vmem:[#allocation6 + $0x30] sm:$0xff]
    %v668 = vld [vmem:[#allocation6 + $0x38] sm:$0xff]
    %v669 = vld [vmem:[#allocation6 + $0x40] sm:$0xff]
    %v670 = vld [vmem:[#allocation6 + $0x48] sm:$0xff]
    %v671 = vld [vmem:[#allocation6 + $0x50] sm:$0xff]
    %v672 = vld [vmem:[#allocation6 + $0x58] sm:$0xff]
    %v673 = vld [vmem:[#allocation6 + $0x60] sm:$0xff]
    %v674 = vld [vmem:[#allocation6 + $0x68] sm:$0xff]
    %v675 = vld [vmem:[#allocation6 + $0x70] sm:$0xff]
    %v676 = vld [vmem:[#allocation6 + $0x78] sm:$0xff]
    %v677 = vld [vmem:[#allocation6 + $0x80] sm:$0xff]
    %v678 = vld [vmem:[#allocation6 + $0x88] sm:$0xff]
    %v679 = vld [vmem:[#allocation6 + $0x90] sm:$0xff]
    %v680 = vld [vmem:[#allocation6 + $0x98] sm:$0xff]
    %v681 = vld [vmem:[#allocation6 + $0xa0] sm:$0xff]
    %v682 = vld [vmem:[#allocation6 + $0xa8] sm:$0xff]
    %v683 = vld [vmem:[#allocation6 + $0xb0] sm:$0xff]
    %v684 = vld [vmem:[#allocation6 + $0xb8] sm:$0xff]
    %v685 = vld [vmem:[#allocation6 + $0xc0] sm:$0xff]
    %v686 = vld [vmem:[#allocation6 + $0xc8] sm:$0xff]
    %v687 = vld [vmem:[#allocation6 + $0xd0] sm:$0xff]
    %v688 = vld [vmem:[#allocation6 + $0xd8] sm:$0xff]
    %v689 = vld [vmem:[#allocation6 + $0xe0] sm:$0xff]
    %v690 = vld [vmem:[#allocation6 + $0xe8] sm:$0xff]
    %v691 = vld [vmem:[#allocation6 + $0xf0] sm:$0xff]
    %v692 = vld [vmem:[#allocation6 + $0xf8] sm:$0xff]
    %v693 = vld [vmem:[#allocation6 + $0x100] sm:$0xff]
    %v694 = vld [vmem:[#allocation6 + $0x108] sm:$0xff]
    %v695 = vld [vmem:[#allocation6 + $0x110] sm:$0xff]
    %v696 = vld [vmem:[#allocation6 + $0x118] sm:$0xff]
    %v697 = vld [vmem:[#allocation6 + $0x120] sm:$0xff]
    %v698 = vld [vmem:[#allocation6 + $0x128] sm:$0xff]
    %v699 = vld [vmem:[#allocation6 + $0x130] sm:$0xff]
    %v700 = vld [vmem:[#allocation6 + $0x138] sm:$0xff]
    %v701 = vld [vmem:[#allocation6 + $0x140] sm:$0xff]
    %v702 = vld [vmem:[#allocation6 + $0x148] sm:$0xff]
    %v703 = vld [vmem:[#allocation6 + $0x150] sm:$0xff]
    %v704 = vld [vmem:[#allocation6 + $0x158] sm:$0xff]
    %v705 = vld [vmem:[#allocation6 + $0x160] sm:$0xff]
    %v706 = vld [vmem:[#allocation6 + $0x168] sm:$0xff]
    %v707 = vld [vmem:[#allocation6 + $0x170] sm:$0xff]
    %v708 = vld [vmem:[#allocation6 + $0x178] sm:$0xff]
    %v709 = vld [vmem:[#allocation6 + $0x180] sm:$0xff]
    %v710 = vld [vmem:[#allocation6 + $0x188] sm:$0xff]
    %v711 = vld [vmem:[#allocation6 + $0x190] sm:$0xff]
    %v712 = vld [vmem:[#allocation6 + $0x198] sm:$0xff]
    %v713 = vld [vmem:[#allocation6 + $0x1a0] sm:$0xff]
    %v714 = vld [vmem:[#allocation6 + $0x1a8] sm:$0xff]
    %v715 = vld [vmem:[#allocation6 + $0x1b0] sm:$0xff]
    %v716 = vld [vmem:[#allocation6 + $0x1b8] sm:$0xff]
    %v717 = vld [vmem:[#allocation6 + $0x1c0] sm:$0xff]
    %v718 = vld [vmem:[#allocation6 + $0x1c8] sm:$0xff]
    %v719 = vld [vmem:[#allocation6 + $0x1d0] sm:$0xff]
    %v720 = vld [vmem:[#allocation6 + $0x1d8] sm:$0xff]
    %v721 = vld [vmem:[#allocation6 + $0x1e0] sm:$0xff]
    %v722 = vld [vmem:[#allocation6 + $0x1e8] sm:$0xff]
    %v723 = vld [vmem:[#allocation6 + $0x1f0] sm:$0xff]
    %v724 = vld [vmem:[#allocation6 + $0x1f8] sm:$0xff]
    %v725 = vld [vmem:[%s4 + $0x10] sm:$0x1]
    %v726 = vperm.slane %v725, 0
    %727 = vmatpush.msra.mxu0 %v611
    %728 = vmatpush.msra.mxu0 %v608
    %729 = vmatpush.msra.mxu0 %v605
    %730 = vmatpush.msra.mxu0 %v602
    %731 = vmatpush.msra.mxu0 %v599
    %732 = vmatpush.msra.mxu0 %v596
    %733 = vmatpush.msra.mxu0 %v593
    %734 = vmatpush.msra.mxu0 %v590
    %735 = vmatpush.msra.mxu0 %v587
    %736 = vmatpush.msra.mxu0 %v584
    %737 = vmatpush.msra.mxu0 %v581
    %738 = vmatpush.msra.mxu0 %v578
    %739 = vmatpush.msra.mxu0 %v575
    %740 = vmatpush.msra.mxu0 %v572
    %741 = vmatpush.msra.mxu0 %v569
    %742 = vmatpush.msra.mxu0 %v566
    %743 = vmatmul.f32.gmra.mxu0 %v661
    %v744 = vpop.f32.mrf.mxu0
    %v745 = vadd.f32 %v726, %v744
    %746 = vmatmul.f32.gmra.mxu0 %v663
    %v747 = vpop.f32.mrf.mxu0
    %v748 = vadd.f32 %v726, %v747
    %749 = vmatmul.f32.gmra.mxu0 %v665
    %v750 = vpop.f32.mrf.mxu0
    %v751 = vadd.f32 %v726, %v750
    %752 = vmatmul.f32.gmra.mxu0 %v667
    %v753 = vpop.f32.mrf.mxu0
    %v754 = vadd.f32 %v726, %v753
    %755 = vmatmul.f32.gmra.mxu0 %v669
    %v756 = vpop.f32.mrf.mxu0
    %v757 = vadd.f32 %v726, %v756
    %758 = vmatmul.f32.gmra.mxu0 %v671
    %v759 = vpop.f32.mrf.mxu0
    %v760 = vadd.f32 %v726, %v759
    %761 = vmatmul.f32.gmra.mxu0 %v673
    %v762 = vpop.f32.mrf.mxu0
    %v763 = vadd.f32 %v726, %v762
    %764 = vmatmul.f32.gmra.mxu0 %v675
    %v765 = vpop.f32.mrf.mxu0
    %v766 = vadd.f32 %v726, %v765
    %767 = vmatmul.f32.gmra.mxu0 %v677
    %v768 = vpop.f32.mrf.mxu0
    %v769 = vadd.f32 %v726, %v768
    %770 = vmatmul.f32.gmra.mxu0 %v679
    %v771 = vpop.f32.mrf.mxu0
    %v772 = vadd.f32 %v726, %v771
    %773 = vmatmul.f32.gmra.mxu0 %v681
    %v774 = vpop.f32.mrf.mxu0
    %v775 = vadd.f32 %v726, %v774
    %776 = vmatmul.f32.gmra.mxu0 %v683
    %v777 = vpop.f32.mrf.mxu0
    %v778 = vadd.f32 %v726, %v777
    %779 = vmatmul.f32.gmra.mxu0 %v685
    %v780 = vpop.f32.mrf.mxu0
    %v781 = vadd.f32 %v726, %v780
    %782 = vmatmul.f32.gmra.mxu0 %v687
    %v783 = vpop.f32.mrf.mxu0
    %v784 = vadd.f32 %v726, %v783
    %785 = vmatmul.f32.gmra.mxu0 %v689
    %v786 = vpop.f32.mrf.mxu0
    %v787 = vadd.f32 %v726, %v786
    %788 = vmatmul.f32.gmra.mxu0 %v691
    %v789 = vpop.f32.mrf.mxu0
    %v790 = vadd.f32 %v726, %v789
    %791 = vmatmul.f32.gmra.mxu0 %v693
    %v792 = vpop.f32.mrf.mxu0
    %v793 = vadd.f32 %v726, %v792
    %794 = vmatmul.f32.gmra.mxu0 %v695
    %v795 = vpop.f32.mrf.mxu0
    %v796 = vadd.f32 %v726, %v795
    %797 = vmatmul.f32.gmra.mxu0 %v697
    %v798 = vpop.f32.mrf.mxu0
    %v799 = vadd.f32 %v726, %v798
    %800 = vmatmul.f32.gmra.mxu0 %v699
    %v801 = vpop.f32.mrf.mxu0
    %v802 = vadd.f32 %v726, %v801
    %803 = vmatmul.f32.gmra.mxu0 %v701
    %v804 = vpop.f32.mrf.mxu0
    %v805 = vadd.f32 %v726, %v804
    %806 = vmatmul.f32.gmra.mxu0 %v703
    %v807 = vpop.f32.mrf.mxu0
    %v808 = vadd.f32 %v726, %v807
    %809 = vmatmul.f32.gmra.mxu0 %v705
    %v810 = vpop.f32.mrf.mxu0
    %v811 = vadd.f32 %v726, %v810
    %812 = vmatmul.f32.gmra.mxu0 %v707
    %v813 = vpop.f32.mrf.mxu0
    %v814 = vadd.f32 %v726, %v813
    %815 = vmatmul.f32.gmra.mxu0 %v709
    %v816 = vpop.f32.mrf.mxu0
    %v817 = vadd.f32 %v726, %v816
    %818 = vmatmul.f32.gmra.mxu0 %v711
    %v819 = vpop.f32.mrf.mxu0
    %v820 = vadd.f32 %v726, %v819
    %821 = vmatmul.f32.gmra.mxu0 %v713
    %v822 = vpop.f32.mrf.mxu0
    %v823 = vadd.f32 %v726, %v822
    %824 = vmatmul.f32.gmra.mxu0 %v715
    %v825 = vpop.f32.mrf.mxu0
    %v826 = vadd.f32 %v726, %v825
    %827 = vmatmul.f32.gmra.mxu0 %v717
    %v828 = vpop.f32.mrf.mxu0
    %v829 = vadd.f32 %v726, %v828
    %830 = vmatmul.f32.gmra.mxu0 %v719
    %v831 = vpop.f32.mrf.mxu0
    %v832 = vadd.f32 %v726, %v831
    %833 = vmatmul.f32.gmra.mxu0 %v721
    %v834 = vpop.f32.mrf.mxu0
    %v835 = vadd.f32 %v726, %v834
    %836 = vmatmul.f32.gmra.mxu0 %v723
    %v837 = vpop.f32.mrf.mxu0
    %v838 = vadd.f32 %v726, %v837
    %839 = vdwg.mxu0
    %840 = vmatpush.msra.mxu0 %v659
    %841 = vmatpush.msra.mxu0 %v656
    %842 = vmatpush.msra.mxu0 %v653
    %843 = vmatpush.msra.mxu0 %v650
    %844 = vmatpush.msra.mxu0 %v647
    %845 = vmatpush.msra.mxu0 %v644
    %846 = vmatpush.msra.mxu0 %v641
    %847 = vmatpush.msra.mxu0 %v638
    %848 = vmatpush.msra.mxu0 %v635
    %849 = vmatpush.msra.mxu0 %v632
    %850 = vmatpush.msra.mxu0 %v629
    %851 = vmatpush.msra.mxu0 %v626
    %852 = vmatpush.msra.mxu0 %v623
    %853 = vmatpush.msra.mxu0 %v620
    %854 = vmatpush.msra.mxu0 %v617
    %855 = vmatpush.msra.mxu0 %v614
    %856 = vmatmul.f32.gmra.mxu0 %v662
    %v857 = vpop.f32.mrf.mxu0
    %v858 = vadd.f32 %v745, %v857
    %859 = vmatmul.f32.gmra.mxu0 %v664
    %v860 = vpop.f32.mrf.mxu0
    %v861 = vadd.f32 %v748, %v860
    %862 = vmatmul.f32.gmra.mxu0 %v666
    %v863 = vpop.f32.mrf.mxu0
    %v864 = vadd.f32 %v751, %v863
    %865 = vmatmul.f32.gmra.mxu0 %v668
    %v866 = vpop.f32.mrf.mxu0
    %v867 = vadd.f32 %v754, %v866
    %868 = vmatmul.f32.gmra.mxu0 %v670
    %v869 = vpop.f32.mrf.mxu0
    %v870 = vadd.f32 %v757, %v869
    %871 = vmatmul.f32.gmra.mxu0 %v672
    %v872 = vpop.f32.mrf.mxu0
    %v873 = vadd.f32 %v760, %v872
    %874 = vmatmul.f32.gmra.mxu0 %v674
    %v875 = vpop.f32.mrf.mxu0
    %v876 = vadd.f32 %v763, %v875
    %877 = vmatmul.f32.gmra.mxu0 %v676
    %v878 = vpop.f32.mrf.mxu0
    %v879 = vadd.f32 %v766, %v878
    %880 = vmatmul.f32.gmra.mxu0 %v678
    %v881 = vpop.f32.mrf.mxu0
    %v882 = vadd.f32 %v769, %v881
    %883 = vmatmul.f32.gmra.mxu0 %v680
    %v884 = vpop.f32.mrf.mxu0
    %v885 = vadd.f32 %v772, %v884
    %886 = vmatmul.f32.gmra.mxu0 %v682
    %v887 = vpop.f32.mrf.mxu0
    %v888 = vadd.f32 %v775, %v887
    %889 = vmatmul.f32.gmra.mxu0 %v684
    %v890 = vpop.f32.mrf.mxu0
    %v891 = vadd.f32 %v778, %v890
    %892 = vmatmul.f32.gmra.mxu0 %v686
    %v893 = vpop.f32.mrf.mxu0
    %v894 = vadd.f32 %v781, %v893
    %895 = vmatmul.f32.gmra.mxu0 %v688
    %v896 = vpop.f32.mrf.mxu0
    %v897 = vadd.f32 %v784, %v896
    %898 = vmatmul.f32.gmra.mxu0 %v690
    %v899 = vpop.f32.mrf.mxu0
    %v900 = vadd.f32 %v787, %v899
    %901 = vmatmul.f32.gmra.mxu0 %v692
    %v902 = vpop.f32.mrf.mxu0
    %v903 = vadd.f32 %v790, %v902
    %904 = vmatmul.f32.gmra.mxu0 %v694
    %v905 = vpop.f32.mrf.mxu0
    %v906 = vadd.f32 %v793, %v905
    %907 = vmatmul.f32.gmra.mxu0 %v696
    %v908 = vpop.f32.mrf.mxu0
    %v909 = vadd.f32 %v796, %v908
    %910 = vmatmul.f32.gmra.mxu0 %v698
    %v911 = vpop.f32.mrf.mxu0
    %v912 = vadd.f32 %v799, %v911
    %913 = vmatmul.f32.gmra.mxu0 %v700
    %v914 = vpop.f32.mrf.mxu0
    %v915 = vadd.f32 %v802, %v914
    %916 = vmatmul.f32.gmra.mxu0 %v702
    %v917 = vpop.f32.mrf.mxu0
    %v918 = vadd.f32 %v805, %v917
    %919 = vmatmul.f32.gmra.mxu0 %v704
    %v920 = vpop.f32.mrf.mxu0
    %v921 = vadd.f32 %v808, %v920
    %922 = vmatmul.f32.gmra.mxu0 %v706
    %v923 = vpop.f32.mrf.mxu0
    %v924 = vadd.f32 %v811, %v923
    %925 = vmatmul.f32.gmra.mxu0 %v708
    %v926 = vpop.f32.mrf.mxu0
    %v927 = vadd.f32 %v814, %v926
    %928 = vmatmul.f32.gmra.mxu0 %v710
    %v929 = vpop.f32.mrf.mxu0
    %v930 = vadd.f32 %v817, %v929
    %931 = vmatmul.f32.gmra.mxu0 %v712
    %v932 = vpop.f32.mrf.mxu0
    %v933 = vadd.f32 %v820, %v932
    %934 = vmatmul.f32.gmra.mxu0 %v714
    %v935 = vpop.f32.mrf.mxu0
    %v936 = vadd.f32 %v823, %v935
    %937 = vmatmul.f32.gmra.mxu0 %v716
    %v938 = vpop.f32.mrf.mxu0
    %v939 = vadd.f32 %v826, %v938
    %940 = vmatmul.f32.gmra.mxu0 %v718
    %v941 = vpop.f32.mrf.mxu0
    %v942 = vadd.f32 %v829, %v941
    %943 = vmatmul.f32.gmra.mxu0 %v720
    %v944 = vpop.f32.mrf.mxu0
    %v945 = vadd.f32 %v832, %v944
    %946 = vmatmul.f32.gmra.mxu0 %v722
    %v947 = vpop.f32.mrf.mxu0
    %v948 = vadd.f32 %v835, %v947
    %949 = vmatmul.f32.gmra.mxu0 %v724
    %v950 = vpop.f32.mrf.mxu0
    %v951 = vadd.f32 %v838, %v950
    %952 = vdwg.mxu0
    %v953 = vmax.f32 %v858, 0.0
    %v954 = vmax.f32 %v861, 0.0
    %v955 = vmax.f32 %v864, 0.0
    %v956 = vmax.f32 %v867, 0.0
    %v957 = vmax.f32 %v870, 0.0
    %v958 = vmax.f32 %v873, 0.0
    %v959 = vmax.f32 %v876, 0.0
    %v960 = vmax.f32 %v879, 0.0
    %v961 = vmax.f32 %v882, 0.0
    %v962 = vmax.f32 %v885, 0.0
    %v963 = vmax.f32 %v888, 0.0
    %v964 = vmax.f32 %v891, 0.0
    %v965 = vmax.f32 %v894, 0.0
    %v966 = vmax.f32 %v897, 0.0
    %v967 = vmax.f32 %v900, 0.0
    %v968 = vmax.f32 %v903, 0.0
    %v969 = vmax.f32 %v906, 0.0
    %v970 = vmax.f32 %v909, 0.0
    %v971 = vmax.f32 %v912, 0.0
    %v972 = vmax.f32 %v915, 0.0
    %v973 = vmax.f32 %v918, 0.0
    %v974 = vmax.f32 %v921, 0.0
    %v975 = vmax.f32 %v924, 0.0
    %v976 = vmax.f32 %v927, 0.0
    %v977 = vmax.f32 %v930, 0.0
    %v978 = vmax.f32 %v933, 0.0
    %v979 = vmax.f32 %v936, 0.0
    %v980 = vmax.f32 %v939, 0.0
    %v981 = vmax.f32 %v942, 0.0
    %v982 = vmax.f32 %v945, 0.0
    %v983 = vmax.f32 %v948, 0.0
    %v984 = vmax.f32 %v951, 0.0
    %v985 = vld [vmem:[#allocation6 + $0x420] sm:$0xff]
    %v986 = vld [vmem:[#allocation6 + $0x428] sm:$0xff]
    %v987 = vld [vmem:[#allocation6 + $0x430] sm:$0x3]
    %v988 = vld [vmem:[#allocation6 + $0x438] sm:$0x3]
    %v990 = vsel %vm447, %v953, 0
    %v993 = vsel %vm447, %v954, 0
    %v996 = vsel %vm447, %v955, 0
    %v999 = vsel %vm447, %v956, 0
    %v1002 = vsel %vm447, %v957, 0
    %v1005 = vsel %vm447, %v958, 0
    %v1008 = vsel %vm447, %v959, 0
    %v1011 = vsel %vm447, %v960, 0
    %v1014 = vsel %vm447, %v961, 0
    %v1017 = vsel %vm447, %v962, 0
    %v1020 = vsel %vm447, %v963, 0
    %v1023 = vsel %vm447, %v964, 0
    %v1026 = vsel %vm447, %v965, 0
    %v1029 = vsel %vm447, %v966, 0
    %v1032 = vsel %vm447, %v967, 0
    %v1035 = vsel %vm447, %v968, 0
    %v1038 = vsel %vm447, %v969, 0
    %v1041 = vsel %vm447, %v970, 0
    %v1044 = vsel %vm447, %v971, 0
    %v1047 = vsel %vm447, %v972, 0
    %v1050 = vsel %vm447, %v973, 0
    %v1053 = vsel %vm447, %v974, 0
    %v1056 = vsel %vm447, %v975, 0
    %v1059 = vsel %vm447, %v976, 0
    %v1062 = vsel %vm447, %v977, 0
    %v1065 = vsel %vm447, %v978, 0
    %v1068 = vsel %vm447, %v979, 0
    %v1071 = vsel %vm447, %v980, 0
    %v1074 = vsel %vm447, %v981, 0
    %v1077 = vsel %vm447, %v982, 0
    %v1080 = vsel %vm447, %v983, 0
    %v1083 = vsel %vm447, %v984, 0
    %v1086 = vsel %vm544, %v987, 0
    %v1089 = vsel %vm544, %v988, 0
    %1091 = vmatpush.msra.mxu0 0.0
    %1092 = vmatpush.msra.mxu0 0.0
    %1093 = vmatpush.msra.mxu0 0.0
    %1094 = vmatpush.msra.mxu0 0.0
    %1095 = vmatpush.msra.mxu0 0.0
    %1096 = vmatpush.msra.mxu0 0.0
    %1097 = vmatpush.msra.mxu0 0.0
    %1098 = vmatpush.msra.mxu0 0.0
    %1099 = vmatpush.msra.mxu0 0.0
    %1100 = vmatpush.msra.mxu0 0.0
    %1101 = vmatpush.msra.mxu0 0.0
    %1102 = vmatpush.msra.mxu0 0.0
    %1103 = vmatpush.msra.mxu0 0.0
    %1104 = vmatpush.msra.mxu0 0.0
    %1105 = vmatpush.msra.mxu0 %v1086
    %1106 = vmatpush.msra.mxu0 %v985
    %1107 = vmatmul.f32.gmra.mxu0 %v990
    %v1108 = vpop.f32.mrf.mxu0
    %v1109 = vadd.f32 0.0, %v1108
    %1110 = vmatmul.f32.gmra.mxu0 %v993
    %v1111 = vpop.f32.mrf.mxu0
    %v1112 = vadd.f32 0.0, %v1111
    %1113 = vmatmul.f32.gmra.mxu0 %v996
    %v1114 = vpop.f32.mrf.mxu0
    %v1115 = vadd.f32 0.0, %v1114
    %1116 = vmatmul.f32.gmra.mxu0 %v999
    %v1117 = vpop.f32.mrf.mxu0
    %v1118 = vadd.f32 0.0, %v1117
    %1119 = vmatmul.f32.gmra.mxu0 %v1002
    %v1120 = vpop.f32.mrf.mxu0
    %v1121 = vadd.f32 0.0, %v1120
    %1122 = vmatmul.f32.gmra.mxu0 %v1005
    %v1123 = vpop.f32.mrf.mxu0
    %v1124 = vadd.f32 0.0, %v1123
    %1125 = vmatmul.f32.gmra.mxu0 %v1008
    %v1126 = vpop.f32.mrf.mxu0
    %v1127 = vadd.f32 0.0, %v1126
    %1128 = vmatmul.f32.gmra.mxu0 %v1011
    %v1129 = vpop.f32.mrf.mxu0
    %v1130 = vadd.f32 0.0, %v1129
    %1131 = vmatmul.f32.gmra.mxu0 %v1014
    %v1132 = vpop.f32.mrf.mxu0
    %v1133 = vadd.f32 0.0, %v1132
    %1134 = vmatmul.f32.gmra.mxu0 %v1017
    %v1135 = vpop.f32.mrf.mxu0
    %v1136 = vadd.f32 0.0, %v1135
    %1137 = vmatmul.f32.gmra.mxu0 %v1020
    %v1138 = vpop.f32.mrf.mxu0
    %v1139 = vadd.f32 0.0, %v1138
    %1140 = vmatmul.f32.gmra.mxu0 %v1023
    %v1141 = vpop.f32.mrf.mxu0
    %v1142 = vadd.f32 0.0, %v1141
    %1143 = vmatmul.f32.gmra.mxu0 %v1026
    %v1144 = vpop.f32.mrf.mxu0
    %v1145 = vadd.f32 0.0, %v1144
    %1146 = vmatmul.f32.gmra.mxu0 %v1029
    %v1147 = vpop.f32.mrf.mxu0
    %v1148 = vadd.f32 0.0, %v1147
    %1149 = vmatmul.f32.gmra.mxu0 %v1032
    %v1150 = vpop.f32.mrf.mxu0
    %v1151 = vadd.f32 0.0, %v1150
    %1152 = vmatmul.f32.gmra.mxu0 %v1035
    %v1153 = vpop.f32.mrf.mxu0
    %v1154 = vadd.f32 0.0, %v1153
    %1155 = vmatmul.f32.gmra.mxu0 %v1038
    %v1156 = vpop.f32.mrf.mxu0
    %v1157 = vadd.f32 0.0, %v1156
    %1158 = vmatmul.f32.gmra.mxu0 %v1041
    %v1159 = vpop.f32.mrf.mxu0
    %v1160 = vadd.f32 0.0, %v1159
    %1161 = vmatmul.f32.gmra.mxu0 %v1044
    %v1162 = vpop.f32.mrf.mxu0
    %v1163 = vadd.f32 0.0, %v1162
    %1164 = vmatmul.f32.gmra.mxu0 %v1047
    %v1165 = vpop.f32.mrf.mxu0
    %v1166 = vadd.f32 0.0, %v1165
    %1167 = vmatmul.f32.gmra.mxu0 %v1050
    %v1168 = vpop.f32.mrf.mxu0
    %v1169 = vadd.f32 0.0, %v1168
    %1170 = vmatmul.f32.gmra.mxu0 %v1053
    %v1171 = vpop.f32.mrf.mxu0
    %v1172 = vadd.f32 0.0, %v1171
    %1173 = vmatmul.f32.gmra.mxu0 %v1056
    %v1174 = vpop.f32.mrf.mxu0
    %v1175 = vadd.f32 0.0, %v1174
    %1176 = vmatmul.f32.gmra.mxu0 %v1059
    %v1177 = vpop.f32.mrf.mxu0
    %v1178 = vadd.f32 0.0, %v1177
    %1179 = vmatmul.f32.gmra.mxu0 %v1062
    %v1180 = vpop.f32.mrf.mxu0
    %v1181 = vadd.f32 0.0, %v1180
    %1182 = vmatmul.f32.gmra.mxu0 %v1065
    %v1183 = vpop.f32.mrf.mxu0
    %v1184 = vadd.f32 0.0, %v1183
    %1185 = vmatmul.f32.gmra.mxu0 %v1068
    %v1186 = vpop.f32.mrf.mxu0
    %v1187 = vadd.f32 0.0, %v1186
    %1188 = vmatmul.f32.gmra.mxu0 %v1071
    %v1189 = vpop.f32.mrf.mxu0
    %v1190 = vadd.f32 0.0, %v1189
    %1191 = vmatmul.f32.gmra.mxu0 %v1074
    %v1192 = vpop.f32.mrf.mxu0
    %v1193 = vadd.f32 0.0, %v1192
    %1194 = vmatmul.f32.gmra.mxu0 %v1077
    %v1195 = vpop.f32.mrf.mxu0
    %v1196 = vadd.f32 0.0, %v1195
    %1197 = vmatmul.f32.gmra.mxu0 %v1080
    %v1198 = vpop.f32.mrf.mxu0
    %v1199 = vadd.f32 0.0, %v1198
    %1200 = vmatmul.f32.gmra.mxu0 %v1083
    %v1201 = vpop.f32.mrf.mxu0
    %v1202 = vadd.f32 0.0, %v1201
    %1203 = vdwg.mxu0
    %1204 = vmatpush.msra.mxu0 0.0
    %1205 = vmatpush.msra.mxu0 0.0
    %1206 = vmatpush.msra.mxu0 0.0
    %1207 = vmatpush.msra.mxu0 0.0
    %1208 = vmatpush.msra.mxu0 0.0
    %1209 = vmatpush.msra.mxu0 0.0
    %1210 = vmatpush.msra.mxu0 0.0
    %1211 = vmatpush.msra.mxu0 0.0
    %1212 = vmatpush.msra.mxu0 0.0
    %1213 = vmatpush.msra.mxu0 0.0
    %1214 = vmatpush.msra.mxu0 0.0
    %1215 = vmatpush.msra.mxu0 0.0
    %1216 = vmatpush.msra.mxu0 0.0
    %1217 = vmatpush.msra.mxu0 0.0
    %1218 = vmatpush.msra.mxu0 %v1089
    %1219 = vmatpush.msra.mxu0 %v986
    %1220 = vmatmul.f32.gmra.mxu0 %v990
    %v1221 = vpop.f32.mrf.mxu0
    %v1222 = vadd.f32 0.0, %v1221
    %1223 = vmatmul.f32.gmra.mxu0 %v993
    %v1224 = vpop.f32.mrf.mxu0
    %v1225 = vadd.f32 0.0, %v1224
    %1226 = vmatmul.f32.gmra.mxu0 %v996
    %v1227 = vpop.f32.mrf.mxu0
    %v1228 = vadd.f32 0.0, %v1227
    %1229 = vmatmul.f32.gmra.mxu0 %v999
    %v1230 = vpop.f32.mrf.mxu0
    %v1231 = vadd.f32 0.0, %v1230
    %1232 = vmatmul.f32.gmra.mxu0 %v1002
    %v1233 = vpop.f32.mrf.mxu0
    %v1234 = vadd.f32 0.0, %v1233
    %1235 = vmatmul.f32.gmra.mxu0 %v1005
    %v1236 = vpop.f32.mrf.mxu0
    %v1237 = vadd.f32 0.0, %v1236
    %1238 = vmatmul.f32.gmra.mxu0 %v1008
    %v1239 = vpop.f32.mrf.mxu0
    %v1240 = vadd.f32 0.0, %v1239
    %1241 = vmatmul.f32.gmra.mxu0 %v1011
    %v1242 = vpop.f32.mrf.mxu0
    %v1243 = vadd.f32 0.0, %v1242
    %1244 = vmatmul.f32.gmra.mxu0 %v1014
    %v1245 = vpop.f32.mrf.mxu0
    %v1246 = vadd.f32 0.0, %v1245
    %1247 = vmatmul.f32.gmra.mxu0 %v1017
    %v1248 = vpop.f32.mrf.mxu0
    %v1249 = vadd.f32 0.0, %v1248
    %1250 = vmatmul.f32.gmra.mxu0 %v1020
    %v1251 = vpop.f32.mrf.mxu0
    %v1252 = vadd.f32 0.0, %v1251
    %1253 = vmatmul.f32.gmra.mxu0 %v1023
    %v1254 = vpop.f32.mrf.mxu0
    %v1255 = vadd.f32 0.0, %v1254
    %1256 = vmatmul.f32.gmra.mxu0 %v1026
    %v1257 = vpop.f32.mrf.mxu0
    %v1258 = vadd.f32 0.0, %v1257
    %1259 = vmatmul.f32.gmra.mxu0 %v1029
    %v1260 = vpop.f32.mrf.mxu0
    %v1261 = vadd.f32 0.0, %v1260
    %1262 = vmatmul.f32.gmra.mxu0 %v1032
    %v1263 = vpop.f32.mrf.mxu0
    %v1264 = vadd.f32 0.0, %v1263
    %1265 = vmatmul.f32.gmra.mxu0 %v1035
    %v1266 = vpop.f32.mrf.mxu0
    %v1267 = vadd.f32 0.0, %v1266
    %1268 = vmatmul.f32.gmra.mxu0 %v1038
    %v1269 = vpop.f32.mrf.mxu0
    %v1270 = vadd.f32 0.0, %v1269
    %1271 = vmatmul.f32.gmra.mxu0 %v1041
    %v1272 = vpop.f32.mrf.mxu0
    %v1273 = vadd.f32 0.0, %v1272
    %1274 = vmatmul.f32.gmra.mxu0 %v1044
    %v1275 = vpop.f32.mrf.mxu0
    %v1276 = vadd.f32 0.0, %v1275
    %1277 = vmatmul.f32.gmra.mxu0 %v1047
    %v1278 = vpop.f32.mrf.mxu0
    %v1279 = vadd.f32 0.0, %v1278
    %1280 = vmatmul.f32.gmra.mxu0 %v1050
    %v1281 = vpop.f32.mrf.mxu0
    %v1282 = vadd.f32 0.0, %v1281
    %1283 = vmatmul.f32.gmra.mxu0 %v1053
    %v1284 = vpop.f32.mrf.mxu0
    %v1285 = vadd.f32 0.0, %v1284
    %1286 = vmatmul.f32.gmra.mxu0 %v1056
    %v1287 = vpop.f32.mrf.mxu0
    %v1288 = vadd.f32 0.0, %v1287
    %1289 = vmatmul.f32.gmra.mxu0 %v1059
    %v1290 = vpop.f32.mrf.mxu0
    %v1291 = vadd.f32 0.0, %v1290
    %1292 = vmatmul.f32.gmra.mxu0 %v1062
    %v1293 = vpop.f32.mrf.mxu0
    %v1294 = vadd.f32 0.0, %v1293
    %1295 = vmatmul.f32.gmra.mxu0 %v1065
    %v1296 = vpop.f32.mrf.mxu0
    %v1297 = vadd.f32 0.0, %v1296
    %1298 = vmatmul.f32.gmra.mxu0 %v1068
    %v1299 = vpop.f32.mrf.mxu0
    %v1300 = vadd.f32 0.0, %v1299
    %1301 = vmatmul.f32.gmra.mxu0 %v1071
    %v1302 = vpop.f32.mrf.mxu0
    %v1303 = vadd.f32 0.0, %v1302
    %1304 = vmatmul.f32.gmra.mxu0 %v1074
    %v1305 = vpop.f32.mrf.mxu0
    %v1306 = vadd.f32 0.0, %v1305
    %1307 = vmatmul.f32.gmra.mxu0 %v1077
    %v1308 = vpop.f32.mrf.mxu0
    %v1309 = vadd.f32 0.0, %v1308
    %1310 = vmatmul.f32.gmra.mxu0 %v1080
    %v1311 = vpop.f32.mrf.mxu0
    %v1312 = vadd.f32 0.0, %v1311
    %1313 = vmatmul.f32.gmra.mxu0 %v1083
    %v1314 = vpop.f32.mrf.mxu0
    %v1315 = vadd.f32 0.0, %v1314
    %1316 = vdwg.mxu0
    %v1317 = vld [vmem:[#allocation6 + $0x400] sm:$0xff]
    %v1318 = vld [vmem:[#allocation6 + $0x408] sm:$0xff]
    %v1319 = vld [vmem:[#allocation6 + $0x410] sm:$0xff]
    %v1320 = vld [vmem:[#allocation6 + $0x418] sm:$0xff]
    %v1321 = vld [vmem:[#allocation6 + $0x200] sm:$0xff]
    %v1322 = vld [vmem:[#allocation6 + $0x208] sm:$0xff]
    %v1323 = vld [vmem:[#allocation6 + $0x210] sm:$0xff]
    %v1324 = vld [vmem:[#allocation6 + $0x218] sm:$0xff]
    %v1325 = vld [vmem:[#allocation6 + $0x220] sm:$0xff]
    %v1326 = vld [vmem:[#allocation6 + $0x228] sm:$0xff]
    %v1327 = vld [vmem:[#allocation6 + $0x230] sm:$0xff]
    %v1328 = vld [vmem:[#allocation6 + $0x238] sm:$0xff]
    %v1329 = vld [vmem:[#allocation6 + $0x240] sm:$0xff]
    %v1330 = vld [vmem:[#allocation6 + $0x248] sm:$0xff]
    %v1331 = vld [vmem:[#allocation6 + $0x250] sm:$0xff]
    %v1332 = vld [vmem:[#allocation6 + $0x258] sm:$0xff]
    %v1333 = vld [vmem:[#allocation6 + $0x260] sm:$0xff]
    %v1334 = vld [vmem:[#allocation6 + $0x268] sm:$0xff]
    %v1335 = vld [vmem:[#allocation6 + $0x270] sm:$0xff]
    %v1336 = vld [vmem:[#allocation6 + $0x278] sm:$0xff]
    %v1337 = vld [vmem:[#allocation6 + $0x280] sm:$0xff]
    %v1338 = vld [vmem:[#allocation6 + $0x288] sm:$0xff]
    %v1339 = vld [vmem:[#allocation6 + $0x290] sm:$0xff]
    %v1340 = vld [vmem:[#allocation6 + $0x298] sm:$0xff]
    %v1341 = vld [vmem:[#allocation6 + $0x2a0] sm:$0xff]
    %v1342 = vld [vmem:[#allocation6 + $0x2a8] sm:$0xff]
    %v1343 = vld [vmem:[#allocation6 + $0x2b0] sm:$0xff]
    %v1344 = vld [vmem:[#allocation6 + $0x2b8] sm:$0xff]
    %v1345 = vld [vmem:[#allocation6 + $0x2c0] sm:$0xff]
    %v1346 = vld [vmem:[#allocation6 + $0x2c8] sm:$0xff]
    %v1347 = vld [vmem:[#allocation6 + $0x2d0] sm:$0xff]
    %v1348 = vld [vmem:[#allocation6 + $0x2d8] sm:$0xff]
    %v1349 = vld [vmem:[#allocation6 + $0x2e0] sm:$0xff]
    %v1350 = vld [vmem:[#allocation6 + $0x2e8] sm:$0xff]
    %v1351 = vld [vmem:[#allocation6 + $0x2f0] sm:$0xff]
    %v1352 = vld [vmem:[#allocation6 + $0x2f8] sm:$0xff]
    %v1353 = vld [vmem:[#allocation6 + $0x300] sm:$0xff]
    %v1354 = vld [vmem:[#allocation6 + $0x308] sm:$0xff]
    %v1355 = vld [vmem:[#allocation6 + $0x310] sm:$0xff]
    %v1356 = vld [vmem:[#allocation6 + $0x318] sm:$0xff]
    %v1357 = vld [vmem:[#allocation6 + $0x320] sm:$0xff]
    %v1358 = vld [vmem:[#allocation6 + $0x328] sm:$0xff]
    %v1359 = vld [vmem:[#allocation6 + $0x330] sm:$0xff]
    %v1360 = vld [vmem:[#allocation6 + $0x338] sm:$0xff]
    %v1361 = vld [vmem:[#allocation6 + $0x340] sm:$0xff]
    %v1362 = vld [vmem:[#allocation6 + $0x348] sm:$0xff]
    %v1363 = vld [vmem:[#allocation6 + $0x350] sm:$0xff]
    %v1364 = vld [vmem:[#allocation6 + $0x358] sm:$0xff]
    %v1365 = vld [vmem:[#allocation6 + $0x360] sm:$0xff]
    %v1366 = vld [vmem:[#allocation6 + $0x368] sm:$0xff]
    %v1367 = vld [vmem:[#allocation6 + $0x370] sm:$0xff]
    %v1368 = vld [vmem:[#allocation6 + $0x378] sm:$0xff]
    %v1369 = vld [vmem:[#allocation6 + $0x380] sm:$0xff]
    %v1370 = vld [vmem:[#allocation6 + $0x388] sm:$0xff]
    %v1371 = vld [vmem:[#allocation6 + $0x390] sm:$0xff]
    %v1372 = vld [vmem:[#allocation6 + $0x398] sm:$0xff]
    %v1373 = vld [vmem:[#allocation6 + $0x3a0] sm:$0xff]
    %v1374 = vld [vmem:[#allocation6 + $0x3a8] sm:$0xff]
    %v1375 = vld [vmem:[#allocation6 + $0x3b0] sm:$0xff]
    %v1376 = vld [vmem:[#allocation6 + $0x3b8] sm:$0xff]
    %v1377 = vld [vmem:[#allocation6 + $0x3c0] sm:$0xff]
    %v1378 = vld [vmem:[#allocation6 + $0x3c8] sm:$0xff]
    %v1379 = vld [vmem:[#allocation6 + $0x3d0] sm:$0xff]
    %v1380 = vld [vmem:[#allocation6 + $0x3d8] sm:$0xff]
    %v1381 = vld [vmem:[#allocation6 + $0x3e0] sm:$0xff]
    %v1382 = vld [vmem:[#allocation6 + $0x3e8] sm:$0xff]
    %v1383 = vld [vmem:[#allocation6 + $0x3f0] sm:$0xff]
    %v1384 = vld [vmem:[#allocation6 + $0x3f8] sm:$0xff]
    %v1385 = vmul.f32 %v1109, %v1321
    %v1386 = vmul.f32 %v1222, %v1322
    %v1387 = vmul.f32 %v1112, %v1323
    %v1388 = vmul.f32 %v1225, %v1324
    %v1389 = vmul.f32 %v1115, %v1325
    %v1390 = vmul.f32 %v1228, %v1326
    %v1391 = vmul.f32 %v1118, %v1327
    %v1392 = vmul.f32 %v1231, %v1328
    %v1393 = vmul.f32 %v1121, %v1329
    %v1394 = vmul.f32 %v1234, %v1330
    %v1395 = vmul.f32 %v1124, %v1331
    %v1396 = vmul.f32 %v1237, %v1332
    %v1397 = vmul.f32 %v1127, %v1333
    %v1398 = vmul.f32 %v1240, %v1334
    %v1399 = vmul.f32 %v1130, %v1335
    %v1400 = vmul.f32 %v1243, %v1336
    %v1401 = vmul.f32 %v1133, %v1337
    %v1402 = vmul.f32 %v1246, %v1338
    %v1403 = vmul.f32 %v1136, %v1339
    %v1404 = vmul.f32 %v1249, %v1340
    %v1405 = vmul.f32 %v1139, %v1341
    %v1406 = vmul.f32 %v1252, %v1342
    %v1407 = vmul.f32 %v1142, %v1343
    %v1408 = vmul.f32 %v1255, %v1344
    %v1409 = vmul.f32 %v1145, %v1345
    %v1410 = vmul.f32 %v1258, %v1346
    %v1411 = vmul.f32 %v1148, %v1347
    %v1412 = vmul.f32 %v1261, %v1348
    %v1413 = vmul.f32 %v1151, %v1349
    %v1414 = vmul.f32 %v1264, %v1350
    %v1415 = vmul.f32 %v1154, %v1351
    %v1416 = vmul.f32 %v1267, %v1352
    %v1417 = vmul.f32 %v1157, %v1353
    %v1418 = vmul.f32 %v1270, %v1354
    %v1419 = vmul.f32 %v1160, %v1355
    %v1420 = vmul.f32 %v1273, %v1356
    %v1421 = vmul.f32 %v1163, %v1357
    %v1422 = vmul.f32 %v1276, %v1358
    %v1423 = vmul.f32 %v1166, %v1359
    %v1424 = vmul.f32 %v1279, %v1360
    %v1425 = vmul.f32 %v1169, %v1361
    %v1426 = vmul.f32 %v1282, %v1362
    %v1427 = vmul.f32 %v1172, %v1363
    %v1428 = vmul.f32 %v1285, %v1364
    %v1429 = vmul.f32 %v1175, %v1365
    %v1430 = vmul.f32 %v1288, %v1366
    %v1431 = vmul.f32 %v1178, %v1367
    %v1432 = vmul.f32 %v1291, %v1368
    %v1433 = vmul.f32 %v1181, %v1369
    %v1434 = vmul.f32 %v1294, %v1370
    %v1435 = vmul.f32 %v1184, %v1371
    %v1436 = vmul.f32 %v1297, %v1372
    %v1437 = vmul.f32 %v1187, %v1373
    %v1438 = vmul.f32 %v1300, %v1374
    %v1439 = vmul.f32 %v1190, %v1375
    %v1440 = vmul.f32 %v1303, %v1376
    %v1441 = vmul.f32 %v1193, %v1377
    %v1442 = vmul.f32 %v1306, %v1378
    %v1443 = vmul.f32 %v1196, %v1379
    %v1444 = vmul.f32 %v1309, %v1380
    %v1445 = vmul.f32 %v1199, %v1381
    %v1446 = vmul.f32 %v1312, %v1382
    %v1447 = vmul.f32 %v1202, %v1383
    %v1448 = vmul.f32 %v1315, %v1384
    %1449 = vmatpush.msra.mxu0 %v1415
    %1450 = vmatpush.msra.mxu0 %v1413
    %1451 = vmatpush.msra.mxu0 %v1411
    %1452 = vmatpush.msra.mxu0 %v1409
    %1453 = vmatpush.msra.mxu0 %v1407
    %1454 = vmatpush.msra.mxu0 %v1405
    %1455 = vmatpush.msra.mxu0 %v1403
    %1456 = vmatpush.msra.mxu0 %v1401
    %1457 = vmatpush.msra.mxu0 %v1399
    %1458 = vmatpush.msra.mxu0 %v1397
    %1459 = vmatpush.msra.mxu0 %v1395
    %1460 = vmatpush.msra.mxu0 %v1393
    %1461 = vmatpush.msra.mxu0 %v1391
    %1462 = vmatpush.msra.mxu0 %v1389
    %1463 = vmatpush.msra.mxu0 %v1387
    %1464 = vmatpush.msra.mxu0 %v1385
    %1465 = vmatmul.f32.gmra.mxu0 %v1317
    %v1466 = vpop.f32.mrf.mxu0
    %v1467 = vadd.f32 0.0, %v1466
    %1468 = vmatmul.f32.gmra.mxu0 %v1319
    %v1469 = vpop.f32.mrf.mxu0
    %v1470 = vadd.f32 0.0, %v1469
    %1471 = vdwg.mxu0
    %1472 = vmatpush.msra.mxu0 %v1447
    %1473 = vmatpush.msra.mxu0 %v1445
    %1474 = vmatpush.msra.mxu0 %v1443
    %1475 = vmatpush.msra.mxu0 %v1441
    %1476 = vmatpush.msra.mxu0 %v1439
    %1477 = vmatpush.msra.mxu0 %v1437
    %1478 = vmatpush.msra.mxu0 %v1435
    %1479 = vmatpush.msra.mxu0 %v1433
    %1480 = vmatpush.msra.mxu0 %v1431
    %1481 = vmatpush.msra.mxu0 %v1429
    %1482 = vmatpush.msra.mxu0 %v1427
    %1483 = vmatpush.msra.mxu0 %v1425
    %1484 = vmatpush.msra.mxu0 %v1423
    %1485 = vmatpush.msra.mxu0 %v1421
    %1486 = vmatpush.msra.mxu0 %v1419
    %1487 = vmatpush.msra.mxu0 %v1417
    %1488 = vmatmul.f32.gmra.mxu0 %v1318
    %v1489 = vpop.f32.mrf.mxu0
    %v1490 = vadd.f32 %v1467, %v1489
    %1491 = vmatmul.f32.gmra.mxu0 %v1320
    %v1492 = vpop.f32.mrf.mxu0
    %v1493 = vadd.f32 %v1470, %v1492
    %1494 = vdwg.mxu0
    %1495 = vmatpush.msra.mxu0 %v1416
    %1496 = vmatpush.msra.mxu0 %v1414
    %1497 = vmatpush.msra.mxu0 %v1412
    %1498 = vmatpush.msra.mxu0 %v1410
    %1499 = vmatpush.msra.mxu0 %v1408
    %1500 = vmatpush.msra.mxu0 %v1406
    %1501 = vmatpush.msra.mxu0 %v1404
    %1502 = vmatpush.msra.mxu0 %v1402
    %1503 = vmatpush.msra.mxu0 %v1400
    %1504 = vmatpush.msra.mxu0 %v1398
    %1505 = vmatpush.msra.mxu0 %v1396
    %1506 = vmatpush.msra.mxu0 %v1394
    %1507 = vmatpush.msra.mxu0 %v1392
    %1508 = vmatpush.msra.mxu0 %v1390
    %1509 = vmatpush.msra.mxu0 %v1388
    %1510 = vmatpush.msra.mxu0 %v1386
    %1511 = vmatmul.f32.gmra.mxu0 %v1317
    %v1512 = vpop.f32.mrf.mxu0
    %v1513 = vadd.f32 0.0, %v1512
    %1514 = vmatmul.f32.gmra.mxu0 %v1319
    %v1515 = vpop.f32.mrf.mxu0
    %v1516 = vadd.f32 0.0, %v1515
    %1517 = vdwg.mxu0
    %1518 = vmatpush.msra.mxu0 %v1448
    %1519 = vmatpush.msra.mxu0 %v1446
    %1520 = vmatpush.msra.mxu0 %v1444
    %1521 = vmatpush.msra.mxu0 %v1442
    %1522 = vmatpush.msra.mxu0 %v1440
    %1523 = vmatpush.msra.mxu0 %v1438
    %1524 = vmatpush.msra.mxu0 %v1436
    %1525 = vmatpush.msra.mxu0 %v1434
    %1526 = vmatpush.msra.mxu0 %v1432
    %1527 = vmatpush.msra.mxu0 %v1430
    %1528 = vmatpush.msra.mxu0 %v1428
    %1529 = vmatpush.msra.mxu0 %v1426
    %1530 = vmatpush.msra.mxu0 %v1424
    %1531 = vmatpush.msra.mxu0 %v1422
    %1532 = vmatpush.msra.mxu0 %v1420
    %1533 = vmatpush.msra.mxu0 %v1418
    %1534 = vmatmul.f32.gmra.mxu0 %v1318
    %v1535 = vpop.f32.mrf.mxu0
    %v1536 = vadd.f32 %v1513, %v1535
    %1537 = vmatmul.f32.gmra.mxu0 %v1320
    %v1538 = vpop.f32.mrf.mxu0
    %v1539 = vadd.f32 %v1516, %v1538
    %1540 = vdwg.mxu0
    %v1541 = vld [vmem:[#allocation3 + $0x10] sm:$0xff]
    %v1542 = vld [vmem:[#allocation3 + $0x18] sm:$0xff]
    %v1543 = vld [vmem:[#allocation3 + $0x20] sm:$0xff]
    %v1544 = vld [vmem:[#allocation3 + $0x28] sm:$0xff]
    %v1545 = vld [vmem:[#allocation3 + $0x30] sm:$0xff]
    %v1546 = vld [vmem:[#allocation3 + $0x38] sm:$0xff]
    %v1547 = vld [vmem:[#allocation3 + $0x40] sm:$0xff]
    %v1548 = vld [vmem:[#allocation3 + $0x48] sm:$0xff]
    %v1549 = vld [vmem:[#allocation3 + $0x50] sm:$0xff]
    %v1550 = vld [vmem:[#allocation3 + $0x58] sm:$0xff]
    %v1551 = vld [vmem:[#allocation3 + $0x60] sm:$0xff]
    %v1552 = vld [vmem:[#allocation3 + $0x68] sm:$0xff]
    %v1553 = vld [vmem:[#allocation3 + $0x70] sm:$0xff]
    %v1554 = vld [vmem:[#allocation3 + $0x78] sm:$0xff]
    %v1555 = vld [vmem:[#allocation3 + $0x80] sm:$0xff]
    %v1556 = vld [vmem:[#allocation3 + $0x88] sm:$0xff]
    %v1557 = vld [vmem:[#allocation3 + $0x90] sm:$0xff]
    %v1558 = vld [vmem:[#allocation3 + $0x98] sm:$0xff]
    %v1559 = vld [vmem:[#allocation3 + $0xa0] sm:$0xff]
    %v1560 = vld [vmem:[#allocation3 + $0xa8] sm:$0xff]
    %v1561 = vld [vmem:[%s4 + $0x18] sm:$0x1]
    %v1562 = vperm.slane %v1561, 0
    %vm1563 = vcmask 261120
    %v1565 = vsel %vm1563, %v1536, 0
    %v1568 = vsel %vm1563, %v1539, 0
    %1570 = vmatpush.msra.mxu0 %v1556
    %1571 = vmatpush.msra.mxu0 %v1555
    %1572 = vmatpush.msra.mxu0 %v1554
    %1573 = vmatpush.msra.mxu0 %v1553
    %1574 = vmatpush.msra.mxu0 %v1552
    %1575 = vmatpush.msra.mxu0 %v1551
    %1576 = vmatpush.msra.mxu0 %v1550
    %1577 = vmatpush.msra.mxu0 %v1549
    %1578 = vmatpush.msra.mxu0 %v1548
    %1579 = vmatpush.msra.mxu0 %v1547
    %1580 = vmatpush.msra.mxu0 %v1546
    %1581 = vmatpush.msra.mxu0 %v1545
    %1582 = vmatpush.msra.mxu0 %v1544
    %1583 = vmatpush.msra.mxu0 %v1543
    %1584 = vmatpush.msra.mxu0 %v1542
    %1585 = vmatpush.msra.mxu0 %v1541
    %1586 = vmatmul.f32.gmra.mxu0 %v1490
    %v1587 = vpop.f32.mrf.mxu0
    %v1588 = vadd.f32 %v1562, %v1587
    %1589 = vmatmul.f32.gmra.mxu0 %v1493
    %v1590 = vpop.f32.mrf.mxu0
    %v1591 = vadd.f32 %v1562, %v1590
    %1592 = vdwg.mxu0
    %1593 = vmatpush.msra.mxu0 0.0
    %1594 = vmatpush.msra.mxu0 0.0
    %1595 = vmatpush.msra.mxu0 0.0
    %1596 = vmatpush.msra.mxu0 0.0
    %1597 = vmatpush.msra.mxu0 0.0
    %1598 = vmatpush.msra.mxu0 0.0
    %1599 = vmatpush.msra.mxu0 0.0
    %1600 = vmatpush.msra.mxu0 0.0
    %1601 = vmatpush.msra.mxu0 0.0
    %1602 = vmatpush.msra.mxu0 0.0
    %1603 = vmatpush.msra.mxu0 0.0
    %1604 = vmatpush.msra.mxu0 0.0
    %1605 = vmatpush.msra.mxu0 %v1560
    %1606 = vmatpush.msra.mxu0 %v1559
    %1607 = vmatpush.msra.mxu0 %v1558
    %1608 = vmatpush.msra.mxu0 %v1557
    %1609 = vmatmul.f32.gmra.mxu0 %v1565
    %v1610 = vpop.f32.mrf.mxu0
    %v1611 = vadd.f32 %v1588, %v1610
    %1612 = vmatmul.f32.gmra.mxu0 %v1568
    %v1613 = vpop.f32.mrf.mxu0
    %v1614 = vadd.f32 %v1591, %v1613
    %1615 = vdwg.mxu0
    %v1616 = vmax.f32 %v1611, 0.0
    %v1617 = vmax.f32 %v1614, 0.0
    %v1618 = vld [vmem:[%s1] sm:$0xff]
    %v1619 = vld [vmem:[%s1 + $0x8] sm:$0xff]
    %v1620 = vld [vmem:[#allocation3 + $0xb0] sm:$0xff]
    %v1621 = vld [vmem:[#allocation3 + $0xb8] sm:$0xff]
    %v1622 = vld [vmem:[#allocation3 + $0xc0] sm:$0xff]
    %v1623 = vld [vmem:[#allocation3 + $0xc8] sm:$0x1]
    %v1624 = vld [vmem:[%s4 + $0x20] sm:$0x1]
    %v1625 = vperm.slane %v1624, 0
    %vm1626 = vcmask 203776
    %v1628 = vsel %vm1626, %v1618, 0
    %v1631 = vsel %vm1626, %v1619, 0
    %vm1633 = vcmask 1040384
    %v1635 = vsel %vm1633, %v1623, 0
    %1637 = vmatpush.msra.mxu0 0.0
    %1638 = vmatpush.msra.mxu0 0.0
    %1639 = vmatpush.msra.mxu0 0.0
    %1640 = vmatpush.msra.mxu0 0.0
    %1641 = vmatpush.msra.mxu0 0.0
    %1642 = vmatpush.msra.mxu0 0.0
    %1643 = vmatpush.msra.mxu0 0.0
    %1644 = vmatpush.msra.mxu0 0.0
    %1645 = vmatpush.msra.mxu0 0.0
    %1646 = vmatpush.msra.mxu0 0.0
    %1647 = vmatpush.msra.mxu0 0.0
    %1648 = vmatpush.msra.mxu0 0.0
    %1649 = vmatpush.msra.mxu0 %v1635
    %1650 = vmatpush.msra.mxu0 %v1622
    %1651 = vmatpush.msra.mxu0 %v1621
    %1652 = vmatpush.msra.mxu0 %v1620
    %1653 = vmatmul.f32.gmra.mxu0 %v1628
    %v1654 = vpop.f32.mrf.mxu0
    %v1655 = vadd.f32 %v1625, %v1654
    %1656 = vmatmul.f32.gmra.mxu0 %v1631
    %v1657 = vpop.f32.mrf.mxu0
    %v1658 = vadd.f32 %v1625, %v1657
    %1659 = vdwg.mxu0
    %v1660 = vmax.f32 %v1655, 0.0
    %v1661 = vmax.f32 %v1658, 0.0
    %v1662 = vld [vmem:[#allocation3 + $0xd0] sm:$0xff]
    %v1663 = vld [vmem:[#allocation3 + $0xd8] sm:$0xff]
    %v1664 = vld [vmem:[#allocation3 + $0xe0] sm:$0xff]
    %v1665 = vld [vmem:[#allocation3 + $0xe8] sm:$0xff]
    %v1666 = vld [vmem:[#allocation3 + $0xf0] sm:$0xff]
    %v1667 = vld [vmem:[#allocation3 + $0xf8] sm:$0xff]
    %v1668 = vld [vmem:[#allocation3 + $0x100] sm:$0xff]
    %v1669 = vld [vmem:[#allocation3 + $0x108] sm:$0xff]
    %v1670 = vld [vmem:[#allocation3 + $0x110] sm:$0xff]
    %v1671 = vld [vmem:[#allocation3 + $0x118] sm:$0xff]
    %v1672 = vld [vmem:[#allocation3 + $0x120] sm:$0xff]
    %v1673 = vld [vmem:[#allocation3 + $0x128] sm:$0xff]
    %v1674 = vld [vmem:[#allocation3 + $0x130] sm:$0xff]
    %v1675 = vld [vmem:[#allocation3 + $0x138] sm:$0xff]
    %v1676 = vld [vmem:[#allocation3 + $0x140] sm:$0xff]
    %v1677 = vld [vmem:[#allocation3 + $0x148] sm:$0xff]
    %v1678 = vld [vmem:[%s4 + $0x28] sm:$0x1]
    %v1679 = vperm.slane %v1678, 0
    %1680 = vmatpush.msra.mxu0 %v1677
    %1681 = vmatpush.msra.mxu0 %v1676
    %1682 = vmatpush.msra.mxu0 %v1675
    %1683 = vmatpush.msra.mxu0 %v1674
    %1684 = vmatpush.msra.mxu0 %v1673
    %1685 = vmatpush.msra.mxu0 %v1672
    %1686 = vmatpush.msra.mxu0 %v1671
    %1687 = vmatpush.msra.mxu0 %v1670
    %1688 = vmatpush.msra.mxu0 %v1669
    %1689 = vmatpush.msra.mxu0 %v1668
    %1690 = vmatpush.msra.mxu0 %v1667
    %1691 = vmatpush.msra.mxu0 %v1666
    %1692 = vmatpush.msra.mxu0 %v1665
    %1693 = vmatpush.msra.mxu0 %v1664
    %1694 = vmatpush.msra.mxu0 %v1663
    %1695 = vmatpush.msra.mxu0 %v1662
    %1696 = vmatmul.f32.gmra.mxu0 %v1660
    %v1697 = vpop.f32.mrf.mxu0
    %v1698 = vadd.f32 %v1679, %v1697
    %1699 = vmatmul.f32.gmra.mxu0 %v1661
    %v1700 = vpop.f32.mrf.mxu0
    %v1701 = vadd.f32 %v1679, %v1700
    %1702 = vdwg.mxu0
    %v1703 = vmax.f32 %v1698, 0.0
    %v1704 = vmax.f32 %v1701, 0.0
    %v1705 = vld [vmem:[#allocation3 + $0x150] sm:$0xff]
    %v1706 = vld [vmem:[#allocation3 + $0x158] sm:$0xff]
    %v1707 = vld [vmem:[#allocation3 + $0x160] sm:$0xff]
    %v1708 = vld [vmem:[#allocation3 + $0x168] sm:$0xff]
    %v1709 = vld [vmem:[#allocation3 + $0x170] sm:$0xff]
    %v1710 = vld [vmem:[#allocation3 + $0x178] sm:$0xff]
    %v1711 = vld [vmem:[#allocation3 + $0x180] sm:$0xff]
    %v1712 = vld [vmem:[#allocation3 + $0x188] sm:$0xff]
    %v1713 = vld [vmem:[#allocation3 + $0x190] sm:$0xff]
    %v1714 = vld [vmem:[#allocation3 + $0x198] sm:$0xff]
    %v1715 = vld [vmem:[#allocation3 + $0x1a0] sm:$0xff]
    %v1716 = vld [vmem:[#allocation3 + $0x1a8] sm:$0xff]
    %v1717 = vld [vmem:[#allocation3 + $0x1b0] sm:$0xff]
    %v1718 = vld [vmem:[#allocation3 + $0x1b8] sm:$0xff]
    %v1719 = vld [vmem:[#allocation3 + $0x1c0] sm:$0xff]
    %v1720 = vld [vmem:[#allocation3 + $0x1c8] sm:$0xff]
    %v1721 = vld [vmem:[%s4 + $0x30] sm:$0x1]
    %v1722 = vperm.slane %v1721, 0
    %1723 = vmatpush.msra.mxu0 %v1720
    %1724 = vmatpush.msra.mxu0 %v1719
    %1725 = vmatpush.msra.mxu0 %v1718
    %1726 = vmatpush.msra.mxu0 %v1717
    %1727 = vmatpush.msra.mxu0 %v1716
    %1728 = vmatpush.msra.mxu0 %v1715
    %1729 = vmatpush.msra.mxu0 %v1714
    %1730 = vmatpush.msra.mxu0 %v1713
    %1731 = vmatpush.msra.mxu0 %v1712
    %1732 = vmatpush.msra.mxu0 %v1711
    %1733 = vmatpush.msra.mxu0 %v1710
    %1734 = vmatpush.msra.mxu0 %v1709
    %1735 = vmatpush.msra.mxu0 %v1708
    %1736 = vmatpush.msra.mxu0 %v1707
    %1737 = vmatpush.msra.mxu0 %v1706
    %1738 = vmatpush.msra.mxu0 %v1705
    %1739 = vmatmul.f32.gmra.mxu0 %v1703
    %v1740 = vpop.f32.mrf.mxu0
    %v1741 = vadd.f32 %v1722, %v1740
    %1742 = vmatmul.f32.gmra.mxu0 %v1704
    %v1743 = vpop.f32.mrf.mxu0
    %v1744 = vadd.f32 %v1722, %v1743
    %1745 = vdwg.mxu0
    %v1746 = vmax.f32 %v1741, 0.0
    %v1747 = vmax.f32 %v1744, 0.0
    %v1748 = vld [vmem:[#allocation3 + $0x1d0] sm:$0xff]
    %v1749 = vld [vmem:[#allocation3 + $0x1d8] sm:$0xff]
    %v1750 = vld [vmem:[#allocation3 + $0x1e0] sm:$0xff]
    %v1751 = vld [vmem:[#allocation3 + $0x1e8] sm:$0xff]
    %v1752 = vld [vmem:[#allocation3 + $0x1f0] sm:$0xff]
    %v1753 = vld [vmem:[#allocation3 + $0x1f8] sm:$0xff]
    %v1754 = vld [vmem:[#allocation3 + $0x200] sm:$0xff]
    %v1755 = vld [vmem:[#allocation3 + $0x208] sm:$0xff]
    %v1756 = vld [vmem:[%s4 + $0x38] sm:$0x1]
    %v1757 = vperm.slane %v1756, 0
    %vm1758 = vcmask 523264
    %v1760 = vsel %vm1758, %v1746, 0
    %v1763 = vsel %vm1758, %v1747, 0
    %1765 = vmatpush.msra.mxu0 0.0
    %1766 = vmatpush.msra.mxu0 0.0
    %1767 = vmatpush.msra.mxu0 0.0
    %1768 = vmatpush.msra.mxu0 0.0
    %1769 = vmatpush.msra.mxu0 0.0
    %1770 = vmatpush.msra.mxu0 0.0
    %1771 = vmatpush.msra.mxu0 0.0
    %1772 = vmatpush.msra.mxu0 0.0
    %1773 = vmatpush.msra.mxu0 %v1755
    %1774 = vmatpush.msra.mxu0 %v1754
    %1775 = vmatpush.msra.mxu0 %v1753
    %1776 = vmatpush.msra.mxu0 %v1752
    %1777 = vmatpush.msra.mxu0 %v1751
    %1778 = vmatpush.msra.mxu0 %v1750
    %1779 = vmatpush.msra.mxu0 %v1749
    %1780 = vmatpush.msra.mxu0 %v1748
    %1781 = vmatmul.f32.gmra.mxu0 %v1760
    %v1782 = vpop.f32.mrf.mxu0
    %v1783 = vadd.f32 %v1757, %v1782
    %1784 = vmatmul.f32.gmra.mxu0 %v1763
    %v1785 = vpop.f32.mrf.mxu0
    %v1786 = vadd.f32 %v1757, %v1785
    %1787 = vdwg.mxu0
    %v1788 = vmax.f32 %v1783, 0.0
    %v1789 = vmax.f32 %v1786, 0.0
    %v1790 = vld [vmem:[#allocation3 + $0x210] sm:$0xff]
    %v1791 = vld [vmem:[#allocation3 + $0x218] sm:$0x1f]
    %v1792 = vld [vmem:[%s4 + $0x40] sm:$0x1]
    %v1793 = vperm.slane %v1792, 0
    %1794 = vrot.lane.b32.xlu0 %v1618, 103
    %v1795 = vpop.permute.xlu0 %1794
    %1796 = vrot.lane.b32.xlu0 %v1619, 103
    %v1797 = vpop.permute.xlu0 %1796
    %vm1798 = vcmask 105472
    %v1799 = vsel %vm1798, %v1795, 0
    %v1801 = vsel %vm1798, %v1797, 0
    %vm1803 = vcmask 1044480
    %v1805 = vsel %vm1803, %v1791, 0
    %1807 = vmatpush.msra.mxu0 0.0
    %1808 = vmatpush.msra.mxu0 0.0
    %1809 = vmatpush.msra.mxu0 0.0
    %1810 = vmatpush.msra.mxu0 0.0
    %1811 = vmatpush.msra.mxu0 0.0
    %1812 = vmatpush.msra.mxu0 0.0
    %1813 = vmatpush.msra.mxu0 0.0
    %1814 = vmatpush.msra.mxu0 0.0
    %1815 = vmatpush.msra.mxu0 0.0
    %1816 = vmatpush.msra.mxu0 0.0
    %1817 = vmatpush.msra.mxu0 0.0
    %1818 = vmatpush.msra.mxu0 0.0
    %1819 = vmatpush.msra.mxu0 0.0
    %1820 = vmatpush.msra.mxu0 0.0
    %1821 = vmatpush.msra.mxu0 %v1805
    %1822 = vmatpush.msra.mxu0 %v1790
    %1823 = vmatmul.f32.gmra.mxu0 %v1799
    %v1824 = vpop.f32.mrf.mxu0
    %v1825 = vadd.f32 %v1793, %v1824
    %1826 = vmatmul.f32.gmra.mxu0 %v1801
    %v1827 = vpop.f32.mrf.mxu0
    %v1828 = vadd.f32 %v1793, %v1827
    %1829 = vdwg.mxu0
    %v1830 = vmax.f32 %v1825, 0.0
    %v1831 = vmax.f32 %v1828, 0.0
    %v1832 = vld [vmem:[#allocation3 + $0x220] sm:$0xff]
    %v1833 = vld [vmem:[#allocation3 + $0x228] sm:$0xff]
    %v1834 = vld [vmem:[#allocation3 + $0x230] sm:$0xff]
    %v1835 = vld [vmem:[#allocation3 + $0x238] sm:$0xff]
    %v1836 = vld [vmem:[#allocation3 + $0x240] sm:$0xff]
    %v1837 = vld [vmem:[#allocation3 + $0x248] sm:$0xff]
    %v1838 = vld [vmem:[#allocation3 + $0x250] sm:$0xff]
    %v1839 = vld [vmem:[#allocation3 + $0x258] sm:$0xff]
    %v1840 = vld [vmem:[%s4 + $0x48] sm:$0x1]
    %v1841 = vperm.slane %v1840, 0
    %v1843 = vsel %vm1758, %v1830, 0
    %v1846 = vsel %vm1758, %v1831, 0
    %1848 = vmatpush.msra.mxu0 0.0
    %1849 = vmatpush.msra.mxu0 0.0
    %1850 = vmatpush.msra.mxu0 0.0
    %1851 = vmatpush.msra.mxu0 0.0
    %1852 = vmatpush.msra.mxu0 0.0
    %1853 = vmatpush.msra.mxu0 0.0
    %1854 = vmatpush.msra.mxu0 0.0
    %1855 = vmatpush.msra.mxu0 0.0
    %1856 = vmatpush.msra.mxu0 %v1839
    %1857 = vmatpush.msra.mxu0 %v1838
    %1858 = vmatpush.msra.mxu0 %v1837
    %1859 = vmatpush.msra.mxu0 %v1836
    %1860 = vmatpush.msra.mxu0 %v1835
    %1861 = vmatpush.msra.mxu0 %v1834
    %1862 = vmatpush.msra.mxu0 %v1833
    %1863 = vmatpush.msra.mxu0 %v1832
    %1864 = vmatmul.f32.gmra.mxu0 %v1843
    %v1865 = vpop.f32.mrf.mxu0
    %v1866 = vadd.f32 %v1841, %v1865
    %1867 = vmatmul.f32.gmra.mxu0 %v1846
    %v1868 = vpop.f32.mrf.mxu0
    %v1869 = vadd.f32 %v1841, %v1868
    %1870 = vdwg.mxu0
    %v1871 = vmax.f32 %v1866, 0.0
    %v1872 = vmax.f32 %v1869, 0.0
    %v1873 = vld [vmem:[#allocation3 + $0x260] sm:$0xff]
    %v1874 = vld [vmem:[#allocation3 + $0x268] sm:$0xff]
    %v1875 = vld [vmem:[#allocation3 + $0x270] sm:$0xff]
    %v1876 = vld [vmem:[#allocation3 + $0x278] sm:$0xff]
    %v1877 = vld [vmem:[#allocation3 + $0x280] sm:$0xff]
    %v1878 = vld [vmem:[#allocation3 + $0x288] sm:$0xff]
    %v1879 = vld [vmem:[#allocation3 + $0x290] sm:$0xff]
    %v1880 = vld [vmem:[#allocation3 + $0x298] sm:$0xff]
    %v1882 = vsel %vm1563, %v1788, 0
    %v1885 = vsel %vm1563, %v1789, 0
    %1887 = vmatpush.msra.mxu0 0.0
    %1888 = vmatpush.msra.mxu0 0.0
    %1889 = vmatpush.msra.mxu0 0.0
    %1890 = vmatpush.msra.mxu0 0.0
    %1891 = vmatpush.msra.mxu0 0.0
    %1892 = vmatpush.msra.mxu0 0.0
    %1893 = vmatpush.msra.mxu0 0.0
    %1894 = vmatpush.msra.mxu0 0.0
    %1895 = vmatpush.msra.mxu0 0.0
    %1896 = vmatpush.msra.mxu0 0.0
    %1897 = vmatpush.msra.mxu0 0.0
    %1898 = vmatpush.msra.mxu0 0.0
    %1899 = vmatpush.msra.mxu0 %v1880
    %1900 = vmatpush.msra.mxu0 %v1879
    %1901 = vmatpush.msra.mxu0 %v1878
    %1902 = vmatpush.msra.mxu0 %v1877
    %1903 = vmatmul.f32.gmra.mxu0 %v1882
    %v1904 = vpop.f32.mrf.mxu0
    %v1905 = vadd.f32 0.0, %v1904
    %1906 = vmatmul.f32.gmra.mxu0 %v1885
    %v1907 = vpop.f32.mrf.mxu0
    %v1908 = vadd.f32 0.0, %v1907
    %1909 = vdwg.mxu0
    %v1911 = vsel %vm1563, %v1616, 0
    %v1914 = vsel %vm1563, %v1617, 0
    %1916 = vmatpush.msra.mxu0 0.0
    %1917 = vmatpush.msra.mxu0 0.0
    %1918 = vmatpush.msra.mxu0 0.0
    %1919 = vmatpush.msra.mxu0 0.0
    %1920 = vmatpush.msra.mxu0 0.0
    %1921 = vmatpush.msra.mxu0 0.0
    %1922 = vmatpush.msra.mxu0 0.0
    %1923 = vmatpush.msra.mxu0 0.0
    %1924 = vmatpush.msra.mxu0 0.0
    %1925 = vmatpush.msra.mxu0 0.0
    %1926 = vmatpush.msra.mxu0 0.0
    %1927 = vmatpush.msra.mxu0 0.0
    %1928 = vmatpush.msra.mxu0 %v1876
    %1929 = vmatpush.msra.mxu0 %v1875
    %1930 = vmatpush.msra.mxu0 %v1874
    %1931 = vmatpush.msra.mxu0 %v1873
    %1932 = vmatmul.f32.gmra.mxu0 %v1911
    %v1933 = vpop.f32.mrf.mxu0
    %v1934 = vadd.f32 %v1905, %v1933
    %1935 = vmatmul.f32.gmra.mxu0 %v1914
    %v1936 = vpop.f32.mrf.mxu0
    %v1937 = vadd.f32 %v1908, %v1936
    %1938 = vdwg.mxu0
    %v1939 = vld [vmem:[#allocation3 + $0x2a0] sm:$0xff]
    %v1940 = vld [vmem:[#allocation3 + $0x2a8] sm:$0xff]
    %v1941 = vld [vmem:[#allocation3 + $0x2b0] sm:$0xff]
    %v1942 = vld [vmem:[#allocation3 + $0x2b8] sm:$0xff]
    %v1944 = vsel %vm1563, %v1871, 0
    %v1947 = vsel %vm1563, %v1872, 0
    %1949 = vmatpush.msra.mxu0 0.0
    %1950 = vmatpush.msra.mxu0 0.0
    %1951 = vmatpush.msra.mxu0 0.0
    %1952 = vmatpush.msra.mxu0 0.0
    %1953 = vmatpush.msra.mxu0 0.0
    %1954 = vmatpush.msra.mxu0 0.0
    %1955 = vmatpush.msra.mxu0 0.0
    %1956 = vmatpush.msra.mxu0 0.0
    %1957 = vmatpush.msra.mxu0 0.0
    %1958 = vmatpush.msra.mxu0 0.0
    %1959 = vmatpush.msra.mxu0 0.0
    %1960 = vmatpush.msra.mxu0 0.0
    %1961 = vmatpush.msra.mxu0 %v1942
    %1962 = vmatpush.msra.mxu0 %v1941
    %1963 = vmatpush.msra.mxu0 %v1940
    %1964 = vmatpush.msra.mxu0 %v1939
    %1965 = vmatmul.f32.gmra.mxu0 %v1944
    %v1966 = vpop.f32.mrf.mxu0
    %v1967 = vadd.f32 0.0, %v1966
    %1968 = vmatmul.f32.gmra.mxu0 %v1947
    %v1969 = vpop.f32.mrf.mxu0
    %v1970 = vadd.f32 0.0, %v1969
    %1971 = vdwg.mxu0
    %v1972 = vadd.f32 %v1934, %v1967
    %v1973 = vadd.f32 %v1937, %v1970
    %v1974 = vld [vmem:[%s4 + $0x50] sm:$0x1]
    %v1975 = vperm.slane %v1974, 0
    %v1976 = vadd.f32 %v1972, %v1975
    %v1977 = vadd.f32 %v1973, %v1975
    %v1978 = vmax.f32 %v1976, 0.0
    %v1979 = vmax.f32 %v1977, 0.0
    %v1980 = vld [vmem:[#allocation3 + $0x2c0] sm:$0xff]
    %v1981 = vld [vmem:[#allocation3 + $0x2c8] sm:$0xff]
    %v1982 = vld [vmem:[#allocation3 + $0x2d0] sm:$0xff]
    %v1983 = vld [vmem:[#allocation3 + $0x2d8] sm:$0xff]
    %v1984 = vld [vmem:[%s4 + $0x58] sm:$0x1]
    %v1985 = vperm.slane %v1984, 0
    %v1987 = vsel %vm1563, %v1978, 0
    %v1990 = vsel %vm1563, %v1979, 0
    %1992 = vmatpush.msra.mxu0 0.0
    %1993 = vmatpush.msra.mxu0 0.0
    %1994 = vmatpush.msra.mxu0 0.0
    %1995 = vmatpush.msra.mxu0 0.0
    %1996 = vmatpush.msra.mxu0 0.0
    %1997 = vmatpush.msra.mxu0 0.0
    %1998 = vmatpush.msra.mxu0 0.0
    %1999 = vmatpush.msra.mxu0 0.0
    %2000 = vmatpush.msra.mxu0 0.0
    %2001 = vmatpush.msra.mxu0 0.0
    %2002 = vmatpush.msra.mxu0 0.0
    %2003 = vmatpush.msra.mxu0 0.0
    %2004 = vmatpush.msra.mxu0 %v1983
    %2005 = vmatpush.msra.mxu0 %v1982
    %2006 = vmatpush.msra.mxu0 %v1981
    %2007 = vmatpush.msra.mxu0 %v1980
    %2008 = vmatmul.f32.gmra.mxu0 %v1987
    %v2009 = vpop.f32.mrf.mxu0
    %v2010 = vadd.f32 %v1985, %v2009
    %2011 = vmatmul.f32.gmra.mxu0 %v1990
    %v2012 = vpop.f32.mrf.mxu0
    %v2013 = vadd.f32 %v1985, %v2012
    %2014 = vdwg.mxu0
    %v2015 = vld [vmem:[#allocation3 + $0x2e0] sm:$0xff]
    %v2016 = vld [vmem:[#allocation3 + $0x2e8] sm:$0xff]
    %v2017 = vld [vmem:[#allocation3 + $0x2f0] sm:$0xff]
    %v2018 = vld [vmem:[#allocation3 + $0x2f8] sm:$0xff]
    %v2019 = vld [vmem:[%s2] sm:$0x3]
    %s2020 = scalar_lea.vmem %s2, 2
    %v2021 = vld [vmem:[%s2020] sm:$0x3]
    %v2023 = vsel %vm1563, %v2019, 0
    %2025 = vmatpush.msra.mxu0 0.0
    %2026 = vmatpush.msra.mxu0 0.0
    %2027 = vmatpush.msra.mxu0 0.0
    %2028 = vmatpush.msra.mxu0 0.0
    %2029 = vmatpush.msra.mxu0 0.0
    %2030 = vmatpush.msra.mxu0 0.0
    %2031 = vmatpush.msra.mxu0 0.0
    %2032 = vmatpush.msra.mxu0 0.0
    %2033 = vmatpush.msra.mxu0 0.0
    %2034 = vmatpush.msra.mxu0 0.0
    %2035 = vmatpush.msra.mxu0 0.0
    %2036 = vmatpush.msra.mxu0 0.0
    %2037 = vmatpush.msra.mxu0 %v2018
    %2038 = vmatpush.msra.mxu0 %v2017
    %2039 = vmatpush.msra.mxu0 %v2016
    %2040 = vmatpush.msra.mxu0 %v2015
    %2041 = vmatmul.f32.gmra.mxu0 %v2023
    %v2042 = vpop.f32.mrf.mxu0
    %v2043 = vadd.f32 0.0, %v2042
    %2044 = vdwg.mxu0
    %v2045 = vadd.f32 %v2010, %v2043
    %2046 = vst [vmem:[#allocation2] sm:$0x3] %v2045
    %v2047 = vld [vmem:[#allocation2] sm:$0x3]
    %v2048 = vxor.u32 %v2047, 2147483648
    %v2049 = vmul.f32 %v2048, 1.442695
    %v2050 = vpow.pop %v2049
    %v2051 = vadd.f32 %v2050, 1.0
    %v2052 = vrcp.pop %v2051
    %v2053 = vmul.f32 %v2051, %v2052
    %v2054 = vsub.f32 1.0, %v2053
    %v2055 = vmul.f32 %v2052, %v2054
    %v2056 = vadd.f32 %v2052, %v2055
    %vm2057 = vweird.f32 %v2051
    %vm2058 = vweird.f32 %v2052
    %vm2059 = vmor %vm2057, %vm2058
    %v2060 = vsel %vm2059, %v2052, %v2056
    %v2061 = vand.u32 2147483647, %v2051
    %vm2062 = vcmp.eq.f32.partialorder %v2061, 8.507059e+37
    %v2063 = vand.u32 %v2051, 2147483648
    %v2064 = vor.u32 1.1754944e-38, %v2063
    %v2065 = vsel %vm2062, %v2064, %v2060
    %v2066 = vmul.f32 1.0, %v2065
    %v2067 = vtanh.pop %v2047
    %2069 = vrot.lane.b32.xlu0 %v2021, 32
    %v2070 = vpop.permute.xlu0 %2069
    %v2072 = vmul.f32 %v2066, %v2070
    %2074 = vrot.lane.b32.xlu0 %v2067, 64
    %v2075 = vpop.permute.xlu0 %2074
    %v2077 = vmul.f32 %v2066, %v2075
    %2079 = vrot.lane.b32.xlu0 %v2077, 32
    %v2080 = vpop.permute.xlu0 %2079
    %v2082 = vadd.f32 %v2072, %v2080
    %v2083 = vtanh.pop %v2082
    %2085 = vrot.lane.b32.xlu0 %v2083, 64
    %v2086 = vpop.permute.xlu0 %2085
    %v2088 = vmul.f32 %v2066, %v2086
    %2090 = vrot.lane.b32.xlu0 %v2088, 32
    %v2091 = vpop.permute.xlu0 %2090
    %v2092 = vsel %vm1563, %v2091, 0
    %2094 = vmatpush.msra.mxu0 0.0
    %2095 = vmatpush.msra.mxu0 0.0
    %2096 = vmatpush.msra.mxu0 0.0
    %2097 = vmatpush.msra.mxu0 0.0
    %2098 = vmatpush.msra.mxu0 0.0
    %2099 = vmatpush.msra.mxu0 0.0
    %2100 = vmatpush.msra.mxu0 0.0
    %2101 = vmatpush.msra.mxu0 0.0
    %2102 = vmatpush.msra.mxu0 0.0
    %2103 = vmatpush.msra.mxu0 0.0
    %2104 = vmatpush.msra.mxu0 0.0
    %2105 = vmatpush.msra.mxu0 0.0
    %2106 = vmatpush.msra.mxu0 %v2018
    %2107 = vmatpush.msra.mxu0 %v2017
    %2108 = vmatpush.msra.mxu0 %v2016
    %2109 = vmatpush.msra.mxu0 %v2015
    %2110 = vmatmul.f32.gmra.mxu0 %v2092
    %v2111 = vpop.f32.mrf.mxu0
    %v2112 = vadd.f32 0.0, %v2111
    %2113 = vdwg.mxu0
    %v2115 = vrot.slane %v2112, 6
    %v2117 = vadd.f32 %v2010, %v2115
    %2118 = vst [vmem:[#allocation2 - $0x2] sm:$0xc] %v2117
    %v2119 = vld [vmem:[#allocation2] sm:$0x3]
    %v2120 = vxor.u32 %v2119, 2147483648
    %v2121 = vmul.f32 %v2120, 1.442695
    %v2122 = vpow.pop %v2121
    %v2123 = vadd.f32 %v2122, 1.0
    %v2124 = vrcp.pop %v2123
    %v2125 = vmul.f32 %v2123, %v2124
    %v2126 = vsub.f32 1.0, %v2125
    %v2127 = vmul.f32 %v2124, %v2126
    %v2128 = vadd.f32 %v2124, %v2127
    %vm2129 = vweird.f32 %v2123
    %vm2130 = vweird.f32 %v2124
    %vm2131 = vmor %vm2129, %vm2130
    %v2132 = vsel %vm2131, %v2124, %v2128
    %v2133 = vand.u32 2147483647, %v2123
    %vm2134 = vcmp.eq.f32.partialorder %v2133, 8.507059e+37
    %v2135 = vand.u32 %v2123, 2147483648
    %v2136 = vor.u32 1.1754944e-38, %v2135
    %v2137 = vsel %vm2134, %v2136, %v2132
    %v2138 = vmul.f32 1.0, %v2137
    %v2139 = vtanh.pop %v2119
    %v2140 = vmul.f32 %v2138, %v2082
    %2142 = vrot.lane.b32.xlu0 %v2139, 64
    %v2143 = vpop.permute.xlu0 %2142
    %v2145 = vmul.f32 %v2138, %v2143
    %2147 = vrot.lane.b32.xlu0 %v2145, 32
    %v2148 = vpop.permute.xlu0 %2147
    %v2150 = vadd.f32 %v2140, %v2148
    %v2151 = vtanh.pop %v2150
    %2153 = vrot.lane.b32.xlu0 %v2151, 64
    %v2154 = vpop.permute.xlu0 %2153
    %v2156 = vmul.f32 %v2138, %v2154
    %2158 = vrot.lane.b32.xlu0 %v2156, 32
    %v2159 = vpop.permute.xlu0 %2158
    %v2160 = vsel %vm1563, %v2159, 0
    %2162 = vmatpush.msra.mxu0 0.0
    %2163 = vmatpush.msra.mxu0 0.0
    %2164 = vmatpush.msra.mxu0 0.0
    %2165 = vmatpush.msra.mxu0 0.0
    %2166 = vmatpush.msra.mxu0 0.0
    %2167 = vmatpush.msra.mxu0 0.0
    %2168 = vmatpush.msra.mxu0 0.0
    %2169 = vmatpush.msra.mxu0 0.0
    %2170 = vmatpush.msra.mxu0 0.0
    %2171 = vmatpush.msra.mxu0 0.0
    %2172 = vmatpush.msra.mxu0 0.0
    %2173 = vmatpush.msra.mxu0 0.0
    %2174 = vmatpush.msra.mxu0 %v2018
    %2175 = vmatpush.msra.mxu0 %v2017
    %2176 = vmatpush.msra.mxu0 %v2016
    %2177 = vmatpush.msra.mxu0 %v2015
    %2178 = vmatmul.f32.gmra.mxu0 %v2160
    %v2179 = vpop.f32.mrf.mxu0
    %v2180 = vadd.f32 0.0, %v2179
    %2181 = vdwg.mxu0
    %v2183 = vrot.slane %v2180, 4
    %v2185 = vadd.f32 %v2010, %v2183
    %2186 = vst [vmem:[#allocation2 - $0x4] sm:$0x30] %v2185
    %v2187 = vld [vmem:[#allocation2] sm:$0x3]
    %v2188 = vxor.u32 %v2187, 2147483648
    %v2189 = vmul.f32 %v2188, 1.442695
    %v2190 = vpow.pop %v2189
    %v2191 = vadd.f32 %v2190, 1.0
    %v2192 = vrcp.pop %v2191
    %v2193 = vmul.f32 %v2191, %v2192
    %v2194 = vsub.f32 1.0, %v2193
    %v2195 = vmul.f32 %v2192, %v2194
    %v2196 = vadd.f32 %v2192, %v2195
    %vm2197 = vweird.f32 %v2191
    %vm2198 = vweird.f32 %v2192
    %vm2199 = vmor %vm2197, %vm2198
    %v2200 = vsel %vm2199, %v2192, %v2196
    %v2201 = vand.u32 2147483647, %v2191
    %vm2202 = vcmp.eq.f32.partialorder %v2201, 8.507059e+37
    %v2203 = vand.u32 %v2191, 2147483648
    %v2204 = vor.u32 1.1754944e-38, %v2203
    %v2205 = vsel %vm2202, %v2204, %v2200
    %v2206 = vmul.f32 1.0, %v2205
    %v2207 = vtanh.pop %v2187
    %v2208 = vmul.f32 %v2206, %v2150
    %2210 = vrot.lane.b32.xlu0 %v2207, 64
    %v2211 = vpop.permute.xlu0 %2210
    %v2213 = vmul.f32 %v2206, %v2211
    %2215 = vrot.lane.b32.xlu0 %v2213, 32
    %v2216 = vpop.permute.xlu0 %2215
    %v2218 = vadd.f32 %v2208, %v2216
    %v2219 = vtanh.pop %v2218
    %2221 = vrot.lane.b32.xlu0 %v2219, 64
    %v2222 = vpop.permute.xlu0 %2221
    %v2224 = vmul.f32 %v2206, %v2222
    %2226 = vrot.lane.b32.xlu0 %v2224, 32
    %v2227 = vpop.permute.xlu0 %2226
    %v2228 = vsel %vm1563, %v2227, 0
    %2230 = vmatpush.msra.mxu0 0.0
    %2231 = vmatpush.msra.mxu0 0.0
    %2232 = vmatpush.msra.mxu0 0.0
    %2233 = vmatpush.msra.mxu0 0.0
    %2234 = vmatpush.msra.mxu0 0.0
    %2235 = vmatpush.msra.mxu0 0.0
    %2236 = vmatpush.msra.mxu0 0.0
    %2237 = vmatpush.msra.mxu0 0.0
    %2238 = vmatpush.msra.mxu0 0.0
    %2239 = vmatpush.msra.mxu0 0.0
    %2240 = vmatpush.msra.mxu0 0.0
    %2241 = vmatpush.msra.mxu0 0.0
    %2242 = vmatpush.msra.mxu0 %v2018
    %2243 = vmatpush.msra.mxu0 %v2017
    %2244 = vmatpush.msra.mxu0 %v2016
    %2245 = vmatpush.msra.mxu0 %v2015
    %2246 = vmatmul.f32.gmra.mxu0 %v2228
    %v2247 = vpop.f32.mrf.mxu0
    %v2248 = vadd.f32 0.0, %v2247
    %2249 = vdwg.mxu0
    %v2251 = vrot.slane %v2248, 2
    %v2253 = vadd.f32 %v2010, %v2251
    %2254 = vst [vmem:[#allocation2 - $0x6] sm:$0xc0] %v2253
    %v2255 = vld [vmem:[#allocation2] sm:$0x3]
    %v2256 = vxor.u32 %v2255, 2147483648
    %v2257 = vmul.f32 %v2256, 1.442695
    %v2258 = vpow.pop %v2257
    %v2259 = vadd.f32 %v2258, 1.0
    %v2260 = vrcp.pop %v2259
    %v2261 = vmul.f32 %v2259, %v2260
    %v2262 = vsub.f32 1.0, %v2261
    %v2263 = vmul.f32 %v2260, %v2262
    %v2264 = vadd.f32 %v2260, %v2263
    %vm2265 = vweird.f32 %v2259
    %vm2266 = vweird.f32 %v2260
    %vm2267 = vmor %vm2265, %vm2266
    %v2268 = vsel %vm2267, %v2260, %v2264
    %v2269 = vand.u32 2147483647, %v2259
    %vm2270 = vcmp.eq.f32.partialorder %v2269, 8.507059e+37
    %v2271 = vand.u32 %v2259, 2147483648
    %v2272 = vor.u32 1.1754944e-38, %v2271
    %v2273 = vsel %vm2270, %v2272, %v2268
    %v2274 = vmul.f32 1.0, %v2273
    %v2275 = vtanh.pop %v2255
    %v2276 = vmul.f32 %v2274, %v2218
    %2278 = vrot.lane.b32.xlu0 %v2275, 64
    %v2279 = vpop.permute.xlu0 %2278
    %v2281 = vmul.f32 %v2274, %v2279
    %2283 = vrot.lane.b32.xlu0 %v2281, 32
    %v2284 = vpop.permute.xlu0 %2283
    %v2286 = vadd.f32 %v2276, %v2284
    %v2287 = vtanh.pop %v2286
    %2289 = vrot.lane.b32.xlu0 %v2287, 64
    %v2290 = vpop.permute.xlu0 %2289
    %v2292 = vmul.f32 %v2274, %v2290
    %2294 = vrot.lane.b32.xlu0 %v2292, 32
    %v2295 = vpop.permute.xlu0 %2294
    %v2296 = vsel %vm1563, %v2295, 0
    %2298 = vmatpush.msra.mxu0 0.0
    %2299 = vmatpush.msra.mxu0 0.0
    %2300 = vmatpush.msra.mxu0 0.0
    %2301 = vmatpush.msra.mxu0 0.0
    %2302 = vmatpush.msra.mxu0 0.0
    %2303 = vmatpush.msra.mxu0 0.0
    %2304 = vmatpush.msra.mxu0 0.0
    %2305 = vmatpush.msra.mxu0 0.0
    %2306 = vmatpush.msra.mxu0 0.0
    %2307 = vmatpush.msra.mxu0 0.0
    %2308 = vmatpush.msra.mxu0 0.0
    %2309 = vmatpush.msra.mxu0 0.0
    %2310 = vmatpush.msra.mxu0 %v2018
    %2311 = vmatpush.msra.mxu0 %v2017
    %2312 = vmatpush.msra.mxu0 %v2016
    %2313 = vmatpush.msra.mxu0 %v2015
    %2314 = vmatmul.f32.gmra.mxu0 %v2296
    %v2315 = vpop.f32.mrf.mxu0
    %v2316 = vadd.f32 0.0, %v2315
    %2317 = vdwg.mxu0
    %v2318 = vadd.f32 %v2013, %v2316
    %2319 = vst [vmem:[#allocation2] sm:$0x3] %v2318
    %v2320 = vld [vmem:[#allocation2] sm:$0x3]
    %v2321 = vxor.u32 %v2320, 2147483648
    %v2322 = vmul.f32 %v2321, 1.442695
    %v2323 = vpow.pop %v2322
    %v2324 = vadd.f32 %v2323, 1.0
    %v2325 = vrcp.pop %v2324
    %v2326 = vmul.f32 %v2324, %v2325
    %v2327 = vsub.f32 1.0, %v2326
    %v2328 = vmul.f32 %v2325, %v2327
    %v2329 = vadd.f32 %v2325, %v2328
    %vm2330 = vweird.f32 %v2324
    %vm2331 = vweird.f32 %v2325
    %vm2332 = vmor %vm2330, %vm2331
    %v2333 = vsel %vm2332, %v2325, %v2329
    %v2334 = vand.u32 2147483647, %v2324
    %vm2335 = vcmp.eq.f32.partialorder %v2334, 8.507059e+37
    %v2336 = vand.u32 %v2324, 2147483648
    %v2337 = vor.u32 1.1754944e-38, %v2336
    %v2338 = vsel %vm2335, %v2337, %v2333
    %v2339 = vmul.f32 1.0, %v2338
    %v2340 = vtanh.pop %v2320
    %v2341 = vmul.f32 %v2339, %v2286
    %2343 = vrot.lane.b32.xlu0 %v2340, 64
    %v2344 = vpop.permute.xlu0 %2343
    %v2346 = vmul.f32 %v2339, %v2344
    %2348 = vrot.lane.b32.xlu0 %v2346, 32
    %v2349 = vpop.permute.xlu0 %2348
    %v2351 = vadd.f32 %v2341, %v2349
    %v2352 = vtanh.pop %v2351
    %2354 = vrot.lane.b32.xlu0 %v2352, 64
    %v2355 = vpop.permute.xlu0 %2354
    %v2357 = vmul.f32 %v2339, %v2355
    %2359 = vrot.lane.b32.xlu0 %v2357, 32
    %v2360 = vpop.permute.xlu0 %2359
    %v2361 = vsel %vm1563, %v2360, 0
    %2363 = vmatpush.msra.mxu0 0.0
    %2364 = vmatpush.msra.mxu0 0.0
    %2365 = vmatpush.msra.mxu0 0.0
    %2366 = vmatpush.msra.mxu0 0.0
    %2367 = vmatpush.msra.mxu0 0.0
    %2368 = vmatpush.msra.mxu0 0.0
    %2369 = vmatpush.msra.mxu0 0.0
    %2370 = vmatpush.msra.mxu0 0.0
    %2371 = vmatpush.msra.mxu0 0.0
    %2372 = vmatpush.msra.mxu0 0.0
    %2373 = vmatpush.msra.mxu0 0.0
    %2374 = vmatpush.msra.mxu0 0.0
    %2375 = vmatpush.msra.mxu0 %v2018
    %2376 = vmatpush.msra.mxu0 %v2017
    %2377 = vmatpush.msra.mxu0 %v2016
    %2378 = vmatpush.msra.mxu0 %v2015
    %2379 = vmatmul.f32.gmra.mxu0 %v2361
    %v2380 = vpop.f32.mrf.mxu0
    %v2381 = vadd.f32 0.0, %v2380
    %2382 = vdwg.mxu0
    %v2384 = vrot.slane %v2381, 6
    %v2386 = vadd.f32 %v2013, %v2384
    %2387 = vst [vmem:[#allocation2 - $0x2] sm:$0xc] %v2386
    %v2388 = vld [vmem:[#allocation2] sm:$0x3]
    %v2389 = vxor.u32 %v2388, 2147483648
    %v2390 = vmul.f32 %v2389, 1.442695
    %v2391 = vpow.pop %v2390
    %v2392 = vadd.f32 %v2391, 1.0
    %v2393 = vrcp.pop %v2392
    %v2394 = vmul.f32 %v2392, %v2393
    %v2395 = vsub.f32 1.0, %v2394
    %v2396 = vmul.f32 %v2393, %v2395
    %v2397 = vadd.f32 %v2393, %v2396
    %vm2398 = vweird.f32 %v2392
    %vm2399 = vweird.f32 %v2393
    %vm2400 = vmor %vm2398, %vm2399
    %v2401 = vsel %vm2400, %v2393, %v2397
    %v2402 = vand.u32 2147483647, %v2392
    %vm2403 = vcmp.eq.f32.partialorder %v2402, 8.507059e+37
    %v2404 = vand.u32 %v2392, 2147483648
    %v2405 = vor.u32 1.1754944e-38, %v2404
    %v2406 = vsel %vm2403, %v2405, %v2401
    %v2407 = vmul.f32 1.0, %v2406
    %v2408 = vtanh.pop %v2388
    %v2409 = vmul.f32 %v2407, %v2351
    %2411 = vrot.lane.b32.xlu0 %v2408, 64
    %v2412 = vpop.permute.xlu0 %2411
    %v2414 = vmul.f32 %v2407, %v2412
    %2416 = vrot.lane.b32.xlu0 %v2414, 32
    %v2417 = vpop.permute.xlu0 %2416
    %v2419 = vadd.f32 %v2409, %v2417
    %v2420 = vtanh.pop %v2419
    %2422 = vrot.lane.b32.xlu0 %v2420, 64
    %v2423 = vpop.permute.xlu0 %2422
    %v2425 = vmul.f32 %v2407, %v2423
    %2427 = vrot.lane.b32.xlu0 %v2425, 32
    %v2428 = vpop.permute.xlu0 %2427
    %v2429 = vsel %vm1563, %v2428, 0
    %2431 = vmatpush.msra.mxu0 0.0
    %2432 = vmatpush.msra.mxu0 0.0
    %2433 = vmatpush.msra.mxu0 0.0
    %2434 = vmatpush.msra.mxu0 0.0
    %2435 = vmatpush.msra.mxu0 0.0
    %2436 = vmatpush.msra.mxu0 0.0
    %2437 = vmatpush.msra.mxu0 0.0
    %2438 = vmatpush.msra.mxu0 0.0
    %2439 = vmatpush.msra.mxu0 0.0
    %2440 = vmatpush.msra.mxu0 0.0
    %2441 = vmatpush.msra.mxu0 0.0
    %2442 = vmatpush.msra.mxu0 0.0
    %2443 = vmatpush.msra.mxu0 %v2018
    %2444 = vmatpush.msra.mxu0 %v2017
    %2445 = vmatpush.msra.mxu0 %v2016
    %2446 = vmatpush.msra.mxu0 %v2015
    %2447 = vmatmul.f32.gmra.mxu0 %v2429
    %v2448 = vpop.f32.mrf.mxu0
    %v2449 = vadd.f32 0.0, %v2448
    %2450 = vdwg.mxu0
    %v2452 = vrot.slane %v2449, 4
    %v2454 = vadd.f32 %v2013, %v2452
    %2455 = vst [vmem:[#allocation2 - $0x4] sm:$0x30] %v2454
    %v2456 = vld [vmem:[#allocation2] sm:$0x3]
    %v2457 = vxor.u32 %v2456, 2147483648
    %v2458 = vmul.f32 %v2457, 1.442695
    %v2459 = vpow.pop %v2458
    %v2460 = vadd.f32 %v2459, 1.0
    %v2461 = vrcp.pop %v2460
    %v2462 = vmul.f32 %v2460, %v2461
    %v2463 = vsub.f32 1.0, %v2462
    %v2464 = vmul.f32 %v2461, %v2463
    %v2465 = vadd.f32 %v2461, %v2464
    %vm2466 = vweird.f32 %v2460
    %vm2467 = vweird.f32 %v2461
    %vm2468 = vmor %vm2466, %vm2467
    %v2469 = vsel %vm2468, %v2461, %v2465
    %v2470 = vand.u32 2147483647, %v2460
    %vm2471 = vcmp.eq.f32.partialorder %v2470, 8.507059e+37
    %v2472 = vand.u32 %v2460, 2147483648
    %v2473 = vor.u32 1.1754944e-38, %v2472
    %v2474 = vsel %vm2471, %v2473, %v2469
    %v2475 = vmul.f32 1.0, %v2474
    %v2476 = vtanh.pop %v2456
    %v2477 = vmul.f32 %v2475, %v2419
    %2479 = vrot.lane.b32.xlu0 %v2476, 64
    %v2480 = vpop.permute.xlu0 %2479
    %v2482 = vmul.f32 %v2475, %v2480
    %2484 = vrot.lane.b32.xlu0 %v2482, 32
    %v2485 = vpop.permute.xlu0 %2484
    %v2487 = vadd.f32 %v2477, %v2485
    %v2488 = vtanh.pop %v2487
    %2490 = vrot.lane.b32.xlu0 %v2488, 64
    %v2491 = vpop.permute.xlu0 %2490
    %v2493 = vmul.f32 %v2475, %v2491
    %2495 = vrot.lane.b32.xlu0 %v2493, 32
    %v2496 = vpop.permute.xlu0 %2495
    %v2497 = vsel %vm1563, %v2496, 0
    %2499 = vmatpush.msra.mxu0 0.0
    %2500 = vmatpush.msra.mxu0 0.0
    %2501 = vmatpush.msra.mxu0 0.0
    %2502 = vmatpush.msra.mxu0 0.0
    %2503 = vmatpush.msra.mxu0 0.0
    %2504 = vmatpush.msra.mxu0 0.0
    %2505 = vmatpush.msra.mxu0 0.0
    %2506 = vmatpush.msra.mxu0 0.0
    %2507 = vmatpush.msra.mxu0 0.0
    %2508 = vmatpush.msra.mxu0 0.0
    %2509 = vmatpush.msra.mxu0 0.0
    %2510 = vmatpush.msra.mxu0 0.0
    %2511 = vmatpush.msra.mxu0 %v2018
    %2512 = vmatpush.msra.mxu0 %v2017
    %2513 = vmatpush.msra.mxu0 %v2016
    %2514 = vmatpush.msra.mxu0 %v2015
    %2515 = vmatmul.f32.gmra.mxu0 %v2497
    %v2516 = vpop.f32.mrf.mxu0
    %v2517 = vadd.f32 0.0, %v2516
    %2518 = vdwg.mxu0
    %v2520 = vrot.slane %v2517, 2
    %v2522 = vadd.f32 %v2013, %v2520
    %2523 = vst [vmem:[#allocation2 - $0x6] sm:$0xc0] %v2522
    %v2524 = vld [vmem:[#allocation2] sm:$0x3]
    %v2525 = vxor.u32 %v2524, 2147483648
    %v2526 = vmul.f32 %v2525, 1.442695
    %v2527 = vpow.pop %v2526
    %v2528 = vadd.f32 %v2527, 1.0
    %v2529 = vrcp.pop %v2528
    %v2530 = vmul.f32 %v2528, %v2529
    %v2531 = vsub.f32 1.0, %v2530
    %v2532 = vmul.f32 %v2529, %v2531
    %v2533 = vadd.f32 %v2529, %v2532
    %vm2534 = vweird.f32 %v2528
    %vm2535 = vweird.f32 %v2529
    %vm2536 = vmor %vm2534, %vm2535
    %v2537 = vsel %vm2536, %v2529, %v2533
    %v2538 = vand.u32 2147483647, %v2528
    %vm2539 = vcmp.eq.f32.partialorder %v2538, 8.507059e+37
    %v2540 = vand.u32 %v2528, 2147483648
    %v2541 = vor.u32 1.1754944e-38, %v2540
    %v2542 = vsel %vm2539, %v2541, %v2537
    %v2543 = vmul.f32 1.0, %v2542
    %v2544 = vtanh.pop %v2524
    %v2545 = vmul.f32 %v2543, %v2487
    %2547 = vrot.lane.b32.xlu0 %v2544, 64
    %v2548 = vpop.permute.xlu0 %2547
    %v2550 = vmul.f32 %v2543, %v2548
    %2552 = vrot.lane.b32.xlu0 %v2550, 32
    %v2553 = vpop.permute.xlu0 %2552
    %v2555 = vadd.f32 %v2545, %v2553
    %v2556 = vtanh.pop %v2555
    %2558 = vrot.lane.b32.xlu0 %v2556, 64
    %v2559 = vpop.permute.xlu0 %2558
    %v2561 = vmul.f32 %v2543, %v2559
    %v2562 = vmax.f32 %v2561, 0.0
    %v2563 = vld [vmem:[#allocation3 + $0x300] sm:$0xff]
    %v2564 = vld [vmem:[#allocation3 + $0x308] sm:$0xff]
    %v2565 = vld [vmem:[#allocation3 + $0x310] sm:$0xff]
    %v2566 = vld [vmem:[#allocation3 + $0x318] sm:$0xff]
    %v2567 = vld [vmem:[%s4 + $0x60] sm:$0x1]
    %v2568 = vperm.slane %v2567, 0
    %2570 = vrot.lane.b32.xlu0 %v2562, 32
    %v2571 = vpop.permute.xlu0 %2570
    %v2572 = vsel %vm1563, %v2571, 0
    %2574 = vmatpush.msra.mxu0 0.0
    %2575 = vmatpush.msra.mxu0 0.0
    %2576 = vmatpush.msra.mxu0 0.0
    %2577 = vmatpush.msra.mxu0 0.0
    %2578 = vmatpush.msra.mxu0 0.0
    %2579 = vmatpush.msra.mxu0 0.0
    %2580 = vmatpush.msra.mxu0 0.0
    %2581 = vmatpush.msra.mxu0 0.0
    %2582 = vmatpush.msra.mxu0 0.0
    %2583 = vmatpush.msra.mxu0 0.0
    %2584 = vmatpush.msra.mxu0 0.0
    %2585 = vmatpush.msra.mxu0 0.0
    %2586 = vmatpush.msra.mxu0 %v2566
    %2587 = vmatpush.msra.mxu0 %v2565
    %2588 = vmatpush.msra.mxu0 %v2564
    %2589 = vmatpush.msra.mxu0 %v2563
    %2590 = vmatmul.f32.gmra.mxu0 %v2572
    %v2591 = vpop.f32.mrf.mxu0
    %v2592 = vadd.f32 %v2568, %v2591
    %2593 = vdwg.mxu0
    %v2594 = vmax.f32 %v2592, 0.0
    %vm2595 = vcmask 254976
    %2596 = vst.msk [vmem:[#allocation8] sm:$0x3] %vm2595, %v2594
    // Predicated region
    $region34: #{tpu_custom_call.1} parent=1 // pred_check
      _
    $region35: #{tpu_custom_call.1} parent=1 // pred_check_branch
      %2598 = sbr.rel (0) target = $region37
    $region36: #{tpu_custom_call.1} parent=1 // pred_region
      %2600 = vsyncadd [#allocation5], 0
      %s2602 = sshll.u32 [#allocation8], 4
      %s2603 = int_to_ptr.vmem [resolvable:$true] %s2602
      %s2604 = sshll.u32 %s6, 4
      %s2605 = int_to_ptr.hbm [resolvable:$true] %s2604
      %2607 = dma.vmem_to_hbm [thread:$0]  %s2603, 32, %s2605, [#allocation5]
    $region37: #{tpu_custom_call.1} parent=1 // pred_fallthru
      _
    // Predicated region
    $region38: #{tpu_custom_call.1} parent=1 // pred_check
      _
    $region39: #{tpu_custom_call.1} parent=1 // pred_check_branch
      %2609 = sbr.rel (0) target = $region41
    $region40: #{tpu_custom_call.1} parent=1 // pred_region
      %2611 = dma.done [#allocation5], 32
    $region41: #{tpu_custom_call.1} parent=1 // pred_fallthru
      _
    %2612 = vsyncpa [#allocation4], 1
    %2613 = vsyncpa [#allocation7], 1
    %2614 = vsyncpa [#allocation5], 1

</llo_original>
